<compile_context>
chip_gen: v7x
topology: tpu7x:2x2x1
jax: 0.10.0
libtpu: 0.0.40
codegen_flags: <defaults>
</compile_context>

<pallas_src>
from math import ceil

import jax
import jax.numpy as jnp
from jax.experimental import pallas as pl
from jax.experimental.pallas import tpu as pltpu

# ---- module hyper-parameters (synthetic, small) ----
LEVELS = 4                    # SH levels -> levels**2 = 16 encoding features
IN_FEATURES = 3
OUT_FEATURES = 3
HIDDEN_FEATURES = 32
HIDDEN_LAYERS = 4
SKIP = True
OMEGA = 30.0                  # stored by SphericalHarmonicsLayer but unused in forward

TILE_N = 1024                 # points per grid step (lane axis; multiple of 128)
SKIP_IDX = ceil(HIDDEN_LAYERS / 2)


def _spherical_harmonics_t(levels, dirs):
    """components_from_spherical_harmonics for levels<=4, features-major.

    dirs: (>=3, M) -> returns (levels**2, M). Each component is a lane-dense (1, M)
    row; concatenation happens only along the sublane axis (cheap), never lanes.
    """
    x = dirs[0:1, :]
    y = dirs[1:2, :]
    z = dirs[2:3, :]
    xx, yy, zz = x * x, y * y, z * z
    comps = [0.28209479177387814 * jnp.ones_like(x)]                    # l=0
    if levels > 1:                                                      # l=1
        comps += [0.4886025119029199 * y,
                  0.4886025119029199 * z,
                  0.4886025119029199 * x]
    if levels > 2:                                                      # l=2
        comps += [1.0925484305920792 * x * y,
                  1.0925484305920792 * y * z,
                  0.9461746957575601 * zz - 0.31539156525252005,
                  1.0925484305920792 * x * z,
                  0.5462742152960396 * (xx - yy)]
    if levels > 3:                                                      # l=3
        comps += [0.5900435899266435 * y * (3.0 * xx - yy),
                  2.890611442640554 * x * y * z,
                  0.4570457994644658 * y * (5.0 * zz - 1.0),
                  0.3731763325901154 * z * (5.0 * zz - 3.0),
                  0.4570457994644658 * x * (5.0 * zz - 1.0),
                  1.445305721320277 * z * (xx - yy),
                  0.5900435899266435 * x * (xx - 3.0 * yy)]
    # TODO(synk): levels > 4 terms of components_from_spherical_harmonics not needed here.
    return jnp.concatenate(comps, axis=0)


def _inr_kernel(x_ref, *refs):
    """Fused forward (features-major): SH encode -> [W@h+b, ReLU]*L (split skip) -> W@h+b."""
    out_ref = refs[-1]
    p_refs = refs[:-1]

    x_in = x_ref[...].astype(jnp.float32)                 # (IN_FEATURES, TILE_N)
    h = _spherical_harmonics_t(LEVELS, x_in)              # (LEVELS**2, TILE_N)

    p = 0
    for i in range(HIDDEN_LAYERS):
        if SKIP and i == SKIP_IDX:
            # Pre-split skip weight: relu(W @ cat[h; x_in] + b) == relu(W_h@h + W_x@x + b)
            w_h = p_refs[p][...]
            w_x = p_refs[p + 1][...]
            b = p_refs[p + 2][...]
            p += 3
            z = (jnp.dot(w_h, h, preferred_element_type=jnp.float32)
                 + jnp.dot(w_x, x_in, preferred_element_type=jnp.float32)
                 + b)
        else:
            w = p_refs[p][...]
            b = p_refs[p + 1][...]
            p += 2
            z = jnp.dot(w, h, preferred_element_type=jnp.float32) + b
        h = jnp.maximum(z, 0.0)

    wf = p_refs[p][...]
    bf = p_refs[p + 1][...]
    out = jnp.dot(wf, h, preferred_element_type=jnp.float32) + bf     # (OUT_FEATURES, TILE_N)
    out_ref[...] = out.astype(out_ref.dtype)


def _const_index_map(i):
    return (0, 0)


def inr_forward(x, params, *, tile_n=TILE_N):
    """x: (N, IN_FEATURES) f32. params: list of (w, b) with w=(in,out), b=(1,out)."""
    n = x.shape[0]
    n_pad = pl.cdiv(n, tile_n) * tile_n

    # Features-major input, zero-padded along the point axis to a multiple of tile_n.
    # Padding lanes are computed on garbage-free zeros and sliced away at the end;
    # per-lane math means they can never contaminate valid lanes.
    x_t = jnp.pad(jnp.transpose(x).astype(jnp.float32), ((0, 0), (0, n_pad - n)))

    flat_params = []
    in_specs = [pl.BlockSpec((IN_FEATURES, tile_n), lambda i: (0, i))]
    for li, (w, b) in enumerate(params):
        b_t = jnp.transpose(b).astype(jnp.float32)              # (out, 1)
        if li < HIDDEN_LAYERS and SKIP and li == SKIP_IDX:
            w_h = jnp.transpose(w[:HIDDEN_FEATURES, :]).astype(jnp.float32)   # (hidden, hidden)
            w_x = jnp.transpose(w[HIDDEN_FEATURES:, :]).astype(jnp.float32)   # (hidden, in)
            layer_arrays = [w_h, w_x, b_t]
        else:
            layer_arrays = [jnp.transpose(w).astype(jnp.float32), b_t]        # (out, in), (out, 1)
        for a in layer_arrays:
            flat_params.append(a)
            # Full-array block, constant index -> DMA'd once, resident in VMEM all grid long.
            in_specs.append(pl.BlockSpec(a.shape, _const_index_map))

    flops = 2 * n_pad * sum(int(w.shape[0]) * int(w.shape[1]) for (w, _) in params)
    param_bytes = sum(int(a.size) * a.dtype.itemsize for a in flat_params)
    cost = pl.CostEstimate(
        flops=flops,
        transcendentals=0,
        bytes_accessed=4 * n_pad * (IN_FEATURES + OUT_FEATURES) + param_bytes,
    )

    out_t = pl.pallas_call(
        _inr_kernel,
        out_shape=jax.ShapeDtypeStruct((OUT_FEATURES, n_pad), jnp.float32),
        grid_spec=pltpu.PrefetchScalarGridSpec(
            num_scalar_prefetch=0,
            grid=(n_pad // tile_n,),
            in_specs=in_specs,
            out_specs=pl.BlockSpec((OUT_FEATURES, tile_n), lambda i: (0, i)),
        ),
        compiler_params=pltpu.CompilerParams(
            dimension_semantics=("parallel",)),
        cost_estimate=cost,
    )(x_t, *flat_params)

    return jnp.transpose(out_t[:, :n])                          # (N, OUT_FEATURES)


def _spherical_harmonics_ref(levels, dirs):
    """Points-major SH for the pure-JAX reference."""
    return jnp.transpose(_spherical_harmonics_t(levels, jnp.transpose(dirs)))


def inr_reference(x, params):
    """Pure-JAX reference reproducing INR.forward semantics (points-major)."""
    h = _spherical_harmonics_ref(LEVELS, x[:, :3])
    for i in range(HIDDEN_LAYERS):
        if SKIP and i == SKIP_IDX:
            h = jnp.concatenate([h, x], axis=-1)
        w, b = params[i]
        h = jnp.maximum(h @ w + b, 0.0)
    wf, bf = params[-1]
    return h @ wf + bf


def make_params(key):
    """Deterministic PyTorch-Linear-style init (uniform +/- 1/sqrt(fan_in))."""
    dims = []
    for i in range(HIDDEN_LAYERS):
        if i == 0:
            dims.append((LEVELS ** 2, HIDDEN_FEATURES))
        elif SKIP and i == SKIP_IDX:
            dims.append((HIDDEN_FEATURES + IN_FEATURES, HIDDEN_FEATURES))
        else:
            dims.append((HIDDEN_FEATURES, HIDDEN_FEATURES))
    dims.append((HIDDEN_FEATURES, OUT_FEATURES))

    params = []
    for (fan_in, fan_out) in dims:
        key, kw, kb = jax.random.split(key, 3)
        bound = 1.0 / (fan_in ** 0.5)
        w = jax.random.uniform(kw, (fan_in, fan_out), jnp.float32, -bound, bound)
        b = jax.random.uniform(kb, (1, fan_out), jnp.float32, -bound, bound)
        params.append((w, b))
    return params


if __name__ == "__main__":
    key = jax.random.PRNGKey(0)
    key, kx, kp = jax.random.split(key, 3)

    N = 4000   # non-multiple of TILE_N -> exercises tail padding; 4 grid steps when padded
    x = jax.random.normal(kx, (N, IN_FEATURES), jnp.float32)
    # SH layer expects (roughly) unit directions; normalize as input prep (kernel and
    # reference see identical data, so this does not change the comparison).
    x = x / jnp.linalg.norm(x, axis=-1, keepdims=True)

    params = make_params(kp)

    out = inr_forward(x, params)
    out = jax.block_until_ready(out)

    ref = inr_reference(x, params)
    assert out.shape == (N, OUT_FEATURES)
    assert jnp.allclose(out, ref, atol=1e-4, rtol=1e-4), "mismatch vs reference"

    print("KERNEL_OK")
</pallas_src>

<mosaic_0001>
module attributes {stable_mosaic.version = 11 : i64} {
  func.func @_inr_kernel(%arg0: i32, %arg1: memref<3x1024xf32, #tpu.memory_space<vmem>>, %arg2: memref<32x16xf32, #tpu.memory_space<vmem>>, %arg3: memref<32x1xf32, #tpu.memory_space<vmem>>, %arg4: memref<32x32xf32, #tpu.memory_space<vmem>>, %arg5: memref<32x1xf32, #tpu.memory_space<vmem>>, %arg6: memref<32x32xf32, #tpu.memory_space<vmem>>, %arg7: memref<32x3xf32, #tpu.memory_space<vmem>>, %arg8: memref<32x1xf32, #tpu.memory_space<vmem>>, %arg9: memref<32x32xf32, #tpu.memory_space<vmem>>, %arg10: memref<32x1xf32, #tpu.memory_space<vmem>>, %arg11: memref<3x32xf32, #tpu.memory_space<vmem>>, %arg12: memref<3x1xf32, #tpu.memory_space<vmem>>, %arg13: memref<3x1024xf32, #tpu.memory_space<vmem>>) attributes {dimension_semantics = [#tpu.dimension_semantics<parallel>], iteration_bounds = array<i64: 4>, scalar_prefetch = 0 : i64, scratch_operands = 0 : i64, tpu.core_type = #tpu.core_type<tc>, window_params = [{transform_indices = @transform_0, window_bounds = array<i64: 3, 1024>}, {pipeline_mode = #tpu.pipeline_mode<synchronous>, transform_indices = @transform_1, window_bounds = array<i64: 32, 16>}, {pipeline_mode = #tpu.pipeline_mode<synchronous>, transform_indices = @transform_2, window_bounds = array<i64: 32, 1>}, {pipeline_mode = #tpu.pipeline_mode<synchronous>, transform_indices = @transform_3, window_bounds = array<i64: 32, 32>}, {pipeline_mode = #tpu.pipeline_mode<synchronous>, transform_indices = @transform_4, window_bounds = array<i64: 32, 1>}, {pipeline_mode = #tpu.pipeline_mode<synchronous>, transform_indices = @transform_5, window_bounds = array<i64: 32, 32>}, {pipeline_mode = #tpu.pipeline_mode<synchronous>, transform_indices = @transform_6, window_bounds = array<i64: 32, 3>}, {pipeline_mode = #tpu.pipeline_mode<synchronous>, transform_indices = @transform_7, window_bounds = array<i64: 32, 1>}, {pipeline_mode = #tpu.pipeline_mode<synchronous>, transform_indices = @transform_8, window_bounds = array<i64: 32, 32>}, {pipeline_mode = #tpu.pipeline_mode<synchronous>, transform_indices = @transform_9, window_bounds = array<i64: 32, 1>}, {pipeline_mode = #tpu.pipeline_mode<synchronous>, transform_indices = @transform_10, window_bounds = array<i64: 3, 32>}, {pipeline_mode = #tpu.pipeline_mode<synchronous>, transform_indices = @transform_11, window_bounds = array<i64: 3, 1>}, {transform_indices = @transform_12, window_bounds = array<i64: 3, 1024>}]} {
    %c0 = arith.constant 0 : index
    %c0_0 = arith.constant 0 : index
    %0 = vector.load %arg1[%c0, %c0_0] : memref<3x1024xf32, #tpu.memory_space<vmem>>, vector<3x1024xf32>
    %1 = vector.extract_strided_slice %0 {offsets = [0, 0], sizes = [1, 1024], strides = [1, 1]} : vector<3x1024xf32> to vector<1x1024xf32>
    %2 = vector.extract_strided_slice %0 {offsets = [1, 0], sizes = [1, 1024], strides = [1, 1]} : vector<3x1024xf32> to vector<1x1024xf32>
    %3 = vector.extract_strided_slice %0 {offsets = [2, 0], sizes = [1, 1024], strides = [1, 1]} : vector<3x1024xf32> to vector<1x1024xf32>
    %4 = arith.mulf %1, %1 : vector<1x1024xf32>
    %5 = arith.mulf %2, %2 : vector<1x1024xf32>
    %6 = arith.mulf %3, %3 : vector<1x1024xf32>
    %cst = arith.constant 1.000000e+00 : f32
    %7 = vector.broadcast %cst : f32 to vector<1x1024xf32>
    %cst_1 = arith.constant 0.282094806 : f32
    %8 = vector.broadcast %cst_1 : f32 to vector<1x1024xf32>
    %9 = arith.mulf %8, %7 : vector<1x1024xf32>
    %cst_2 = arith.constant 0.488602519 : f32
    %10 = vector.broadcast %cst_2 : f32 to vector<1x1024xf32>
    %11 = arith.mulf %10, %2 : vector<1x1024xf32>
    %cst_3 = arith.constant 0.488602519 : f32
    %12 = vector.broadcast %cst_3 : f32 to vector<1x1024xf32>
    %13 = arith.mulf %12, %3 : vector<1x1024xf32>
    %cst_4 = arith.constant 0.488602519 : f32
    %14 = vector.broadcast %cst_4 : f32 to vector<1x1024xf32>
    %15 = arith.mulf %14, %1 : vector<1x1024xf32>
    %cst_5 = arith.constant 1.09254849 : f32
    %16 = vector.broadcast %cst_5 : f32 to vector<1x1024xf32>
    %17 = arith.mulf %16, %1 : vector<1x1024xf32>
    %18 = arith.mulf %17, %2 : vector<1x1024xf32>
    %cst_6 = arith.constant 1.09254849 : f32
    %19 = vector.broadcast %cst_6 : f32 to vector<1x1024xf32>
    %20 = arith.mulf %19, %2 : vector<1x1024xf32>
    %21 = arith.mulf %20, %3 : vector<1x1024xf32>
    %cst_7 = arith.constant 0.946174681 : f32
    %22 = vector.broadcast %cst_7 : f32 to vector<1x1024xf32>
    %23 = arith.mulf %22, %6 : vector<1x1024xf32>
    %cst_8 = arith.constant 0.31539157 : f32
    %24 = vector.broadcast %cst_8 : f32 to vector<1x1024xf32>
    %25 = arith.subf %23, %24 : vector<1x1024xf32>
    %cst_9 = arith.constant 1.09254849 : f32
    %26 = vector.broadcast %cst_9 : f32 to vector<1x1024xf32>
    %27 = arith.mulf %26, %1 : vector<1x1024xf32>
    %28 = arith.mulf %27, %3 : vector<1x1024xf32>
    %29 = arith.subf %4, %5 : vector<1x1024xf32>
    %cst_10 = arith.constant 0.546274245 : f32
    %30 = vector.broadcast %cst_10 : f32 to vector<1x1024xf32>
    %31 = arith.mulf %30, %29 : vector<1x1024xf32>
    %cst_11 = arith.constant 0.590043604 : f32
    %32 = vector.broadcast %cst_11 : f32 to vector<1x1024xf32>
    %33 = arith.mulf %32, %2 : vector<1x1024xf32>
    %cst_12 = arith.constant 3.000000e+00 : f32
    %34 = vector.broadcast %cst_12 : f32 to vector<1x1024xf32>
    %35 = arith.mulf %34, %4 : vector<1x1024xf32>
    %36 = arith.subf %35, %5 : vector<1x1024xf32>
    %37 = arith.mulf %33, %36 : vector<1x1024xf32>
    %cst_13 = arith.constant 2.89061141 : f32
    %38 = vector.broadcast %cst_13 : f32 to vector<1x1024xf32>
    %39 = arith.mulf %38, %1 : vector<1x1024xf32>
    %40 = arith.mulf %39, %2 : vector<1x1024xf32>
    %41 = arith.mulf %40, %3 : vector<1x1024xf32>
    %cst_14 = arith.constant 0.457045794 : f32
    %42 = vector.broadcast %cst_14 : f32 to vector<1x1024xf32>
    %43 = arith.mulf %42, %2 : vector<1x1024xf32>
    %cst_15 = arith.constant 5.000000e+00 : f32
    %44 = vector.broadcast %cst_15 : f32 to vector<1x1024xf32>
    %45 = arith.mulf %44, %6 : vector<1x1024xf32>
    %cst_16 = arith.constant 1.000000e+00 : f32
    %46 = vector.broadcast %cst_16 : f32 to vector<1x1024xf32>
    %47 = arith.subf %45, %46 : vector<1x1024xf32>
    %48 = arith.mulf %43, %47 : vector<1x1024xf32>
    %cst_17 = arith.constant 0.373176336 : f32
    %49 = vector.broadcast %cst_17 : f32 to vector<1x1024xf32>
    %50 = arith.mulf %49, %3 : vector<1x1024xf32>
    %cst_18 = arith.constant 5.000000e+00 : f32
    %51 = vector.broadcast %cst_18 : f32 to vector<1x1024xf32>
    %52 = arith.mulf %51, %6 : vector<1x1024xf32>
    %cst_19 = arith.constant 3.000000e+00 : f32
    %53 = vector.broadcast %cst_19 : f32 to vector<1x1024xf32>
    %54 = arith.subf %52, %53 : vector<1x1024xf32>
    %55 = arith.mulf %50, %54 : vector<1x1024xf32>
    %cst_20 = arith.constant 0.457045794 : f32
    %56 = vector.broadcast %cst_20 : f32 to vector<1x1024xf32>
    %57 = arith.mulf %56, %1 : vector<1x1024xf32>
    %cst_21 = arith.constant 5.000000e+00 : f32
    %58 = vector.broadcast %cst_21 : f32 to vector<1x1024xf32>
    %59 = arith.mulf %58, %6 : vector<1x1024xf32>
    %cst_22 = arith.constant 1.000000e+00 : f32
    %60 = vector.broadcast %cst_22 : f32 to vector<1x1024xf32>
    %61 = arith.subf %59, %60 : vector<1x1024xf32>
    %62 = arith.mulf %57, %61 : vector<1x1024xf32>
    %cst_23 = arith.constant 1.44530571 : f32
    %63 = vector.broadcast %cst_23 : f32 to vector<1x1024xf32>
    %64 = arith.mulf %63, %3 : vector<1x1024xf32>
    %65 = arith.subf %4, %5 : vector<1x1024xf32>
    %66 = arith.mulf %64, %65 : vector<1x1024xf32>
    %cst_24 = arith.constant 0.590043604 : f32
    %67 = vector.broadcast %cst_24 : f32 to vector<1x1024xf32>
    %68 = arith.mulf %67, %1 : vector<1x1024xf32>
    %cst_25 = arith.constant 3.000000e+00 : f32
    %69 = vector.broadcast %cst_25 : f32 to vector<1x1024xf32>
    %70 = arith.mulf %69, %5 : vector<1x1024xf32>
    %71 = arith.subf %4, %70 : vector<1x1024xf32>
    %72 = arith.mulf %68, %71 : vector<1x1024xf32>
    %73 = tpu.concatenate %9, %11, %13, %15, %18, %21, %25, %28, %31, %37, %41, %48, %55, %62, %66, %72 in 0 : vector<1x1024xf32>, vector<1x1024xf32>, vector<1x1024xf32>, vector<1x1024xf32>, vector<1x1024xf32>, vector<1x1024xf32>, vector<1x1024xf32>, vector<1x1024xf32>, vector<1x1024xf32>, vector<1x1024xf32>, vector<1x1024xf32>, vector<1x1024xf32>, vector<1x1024xf32>, vector<1x1024xf32>, vector<1x1024xf32>, vector<1x1024xf32> -> vector<16x1024xf32>
    %c0_26 = arith.constant 0 : index
    %c0_27 = arith.constant 0 : index
    %74 = vector.load %arg2[%c0_26, %c0_27] : memref<32x16xf32, #tpu.memory_space<vmem>>, vector<32x16xf32>
    %c0_28 = arith.constant 0 : index
    %c0_29 = arith.constant 0 : index
    %75 = vector.load %arg3[%c0_28, %c0_29] : memref<32x1xf32, #tpu.memory_space<vmem>>, vector<32x1xf32>
    %cst_30 = arith.constant dense<0.000000e+00> : vector<32x1024xf32>
    %76 = tpu.matmul %74, %73, %cst_30 {dimension_numbers = #tpu.dot_dimension_numbers<[1], [0], [0], [1], [0, 0, 1, 1], [], []>} : vector<32x16xf32>, vector<16x1024xf32>, vector<32x1024xf32> -> vector<32x1024xf32>
    %77 = vector.broadcast %75 : vector<32x1xf32> to vector<32x1024xf32>
    %78 = arith.addf %76, %77 : vector<32x1024xf32>
    %cst_31 = arith.constant 0.000000e+00 : f32
    %79 = vector.broadcast %cst_31 : f32 to vector<32x1024xf32>
    %80 = arith.maximumf %78, %79 : vector<32x1024xf32>
    %c0_32 = arith.constant 0 : index
    %c0_33 = arith.constant 0 : index
    %81 = vector.load %arg4[%c0_32, %c0_33] : memref<32x32xf32, #tpu.memory_space<vmem>>, vector<32x32xf32>
    %c0_34 = arith.constant 0 : index
    %c0_35 = arith.constant 0 : index
    %82 = vector.load %arg5[%c0_34, %c0_35] : memref<32x1xf32, #tpu.memory_space<vmem>>, vector<32x1xf32>
    %cst_36 = arith.constant dense<0.000000e+00> : vector<32x1024xf32>
    %83 = tpu.matmul %81, %80, %cst_36 {dimension_numbers = #tpu.dot_dimension_numbers<[1], [0], [0], [1], [0, 0, 1, 1], [], []>} : vector<32x32xf32>, vector<32x1024xf32>, vector<32x1024xf32> -> vector<32x1024xf32>
    %84 = vector.broadcast %82 : vector<32x1xf32> to vector<32x1024xf32>
    %85 = arith.addf %83, %84 : vector<32x1024xf32>
    %cst_37 = arith.constant 0.000000e+00 : f32
    %86 = vector.broadcast %cst_37 : f32 to vector<32x1024xf32>
    %87 = arith.maximumf %85, %86 : vector<32x1024xf32>
    %c0_38 = arith.constant 0 : index
    %c0_39 = arith.constant 0 : index
    %88 = vector.load %arg6[%c0_38, %c0_39] : memref<32x32xf32, #tpu.memory_space<vmem>>, vector<32x32xf32>
    %c0_40 = arith.constant 0 : index
    %c0_41 = arith.constant 0 : index
    %89 = vector.load %arg7[%c0_40, %c0_41] : memref<32x3xf32, #tpu.memory_space<vmem>>, vector<32x3xf32>
    %c0_42 = arith.constant 0 : index
    %c0_43 = arith.constant 0 : index
    %90 = vector.load %arg8[%c0_42, %c0_43] : memref<32x1xf32, #tpu.memory_space<vmem>>, vector<32x1xf32>
    %cst_44 = arith.constant dense<0.000000e+00> : vector<32x1024xf32>
    %91 = tpu.matmul %88, %87, %cst_44 {dimension_numbers = #tpu.dot_dimension_numbers<[1], [0], [0], [1], [0, 0, 1, 1], [], []>} : vector<32x32xf32>, vector<32x1024xf32>, vector<32x1024xf32> -> vector<32x1024xf32>
    %cst_45 = arith.constant dense<0.000000e+00> : vector<32x1024xf32>
    %92 = tpu.matmul %89, %0, %cst_45 {dimension_numbers = #tpu.dot_dimension_numbers<[1], [0], [0], [1], [0, 0, 1, 1], [], []>} : vector<32x3xf32>, vector<3x1024xf32>, vector<32x1024xf32> -> vector<32x1024xf32>
    %93 = arith.addf %91, %92 : vector<32x1024xf32>
    %94 = vector.broadcast %90 : vector<32x1xf32> to vector<32x1024xf32>
    %95 = arith.addf %93, %94 : vector<32x1024xf32>
    %cst_46 = arith.constant 0.000000e+00 : f32
    %96 = vector.broadcast %cst_46 : f32 to vector<32x1024xf32>
    %97 = arith.maximumf %95, %96 : vector<32x1024xf32>
    %c0_47 = arith.constant 0 : index
    %c0_48 = arith.constant 0 : index
    %98 = vector.load %arg9[%c0_47, %c0_48] : memref<32x32xf32, #tpu.memory_space<vmem>>, vector<32x32xf32>
    %c0_49 = arith.constant 0 : index
    %c0_50 = arith.constant 0 : index
    %99 = vector.load %arg10[%c0_49, %c0_50] : memref<32x1xf32, #tpu.memory_space<vmem>>, vector<32x1xf32>
    %cst_51 = arith.constant dense<0.000000e+00> : vector<32x1024xf32>
    %100 = tpu.matmul %98, %97, %cst_51 {dimension_numbers = #tpu.dot_dimension_numbers<[1], [0], [0], [1], [0, 0, 1, 1], [], []>} : vector<32x32xf32>, vector<32x1024xf32>, vector<32x1024xf32> -> vector<32x1024xf32>
    %101 = vector.broadcast %99 : vector<32x1xf32> to vector<32x1024xf32>
    %102 = arith.addf %100, %101 : vector<32x1024xf32>
    %cst_52 = arith.constant 0.000000e+00 : f32
    %103 = vector.broadcast %cst_52 : f32 to vector<32x1024xf32>
    %104 = arith.maximumf %102, %103 : vector<32x1024xf32>
    %c0_53 = arith.constant 0 : index
    %c0_54 = arith.constant 0 : index
    %105 = vector.load %arg11[%c0_53, %c0_54] : memref<3x32xf32, #tpu.memory_space<vmem>>, vector<3x32xf32>
    %c0_55 = arith.constant 0 : index
    %c0_56 = arith.constant 0 : index
    %106 = vector.load %arg12[%c0_55, %c0_56] : memref<3x1xf32, #tpu.memory_space<vmem>>, vector<3x1xf32>
    %cst_57 = arith.constant dense<0.000000e+00> : vector<3x1024xf32>
    %107 = tpu.matmul %105, %104, %cst_57 {dimension_numbers = #tpu.dot_dimension_numbers<[1], [0], [0], [1], [0, 0, 1, 1], [], []>} : vector<3x32xf32>, vector<32x1024xf32>, vector<3x1024xf32> -> vector<3x1024xf32>
    %108 = vector.broadcast %106 : vector<3x1xf32> to vector<3x1024xf32>
    %109 = arith.addf %107, %108 : vector<3x1024xf32>
    %c0_58 = arith.constant 0 : index
    %c0_59 = arith.constant 0 : index
    %110 = vector.load %arg13[%c0_58, %c0_59] : memref<3x1024xf32, #tpu.memory_space<vmem>>, vector<3x1024xf32>
    tpu.vector_store %arg13[%c0_58, %c0_59], %109 {strides = array<i32>} : memref<3x1024xf32, #tpu.memory_space<vmem>>, vector<3x1024xf32>,
    return
  }
  func.func @transform_0(%arg0: i32) -> (i32, i32) {
    %c0_i32 = arith.constant 0 : i32
    %c0_i32_0 = arith.constant 0 : i32
    return %c0_i32, %arg0 : i32, i32
  }
  func.func @transform_1(%arg0: i32) -> (i32, i32) {
    %c0_i32 = arith.constant 0 : i32
    %c0_i32_0 = arith.constant 0 : i32
    %c0_i32_1 = arith.constant 0 : i32
    return %c0_i32, %c0_i32_0 : i32, i32
  }
  func.func @transform_2(%arg0: i32) -> (i32, i32) {
    %c0_i32 = arith.constant 0 : i32
    %c0_i32_0 = arith.constant 0 : i32
    %c0_i32_1 = arith.constant 0 : i32
    return %c0_i32, %c0_i32_0 : i32, i32
  }
  func.func @transform_3(%arg0: i32) -> (i32, i32) {
    %c0_i32 = arith.constant 0 : i32
    %c0_i32_0 = arith.constant 0 : i32
    %c0_i32_1 = arith.constant 0 : i32
    return %c0_i32, %c0_i32_0 : i32, i32
  }
  func.func @transform_4(%arg0: i32) -> (i32, i32) {
    %c0_i32 = arith.constant 0 : i32
    %c0_i32_0 = arith.constant 0 : i32
    %c0_i32_1 = arith.constant 0 : i32
    return %c0_i32, %c0_i32_0 : i32, i32
  }
  func.func @transform_5(%arg0: i32) -> (i32, i32) {
    %c0_i32 = arith.constant 0 : i32
    %c0_i32_0 = arith.constant 0 : i32
    %c0_i32_1 = arith.constant 0 : i32
    return %c0_i32, %c0_i32_0 : i32, i32
  }
  func.func @transform_6(%arg0: i32) -> (i32, i32) {
    %c0_i32 = arith.constant 0 : i32
    %c0_i32_0 = arith.constant 0 : i32
    %c0_i32_1 = arith.constant 0 : i32
    return %c0_i32, %c0_i32_0 : i32, i32
  }
  func.func @transform_7(%arg0: i32) -> (i32, i32) {
    %c0_i32 = arith.constant 0 : i32
    %c0_i32_0 = arith.constant 0 : i32
    %c0_i32_1 = arith.constant 0 : i32
    return %c0_i32, %c0_i32_0 : i32, i32
  }
  func.func @transform_8(%arg0: i32) -> (i32, i32) {
    %c0_i32 = arith.constant 0 : i32
    %c0_i32_0 = arith.constant 0 : i32
    %c0_i32_1 = arith.constant 0 : i32
    return %c0_i32, %c0_i32_0 : i32, i32
  }
  func.func @transform_9(%arg0: i32) -> (i32, i32) {
    %c0_i32 = arith.constant 0 : i32
    %c0_i32_0 = arith.constant 0 : i32
    %c0_i32_1 = arith.constant 0 : i32
    return %c0_i32, %c0_i32_0 : i32, i32
  }
  func.func @transform_10(%arg0: i32) -> (i32, i32) {
    %c0_i32 = arith.constant 0 : i32
    %c0_i32_0 = arith.constant 0 : i32
    %c0_i32_1 = arith.constant 0 : i32
    return %c0_i32, %c0_i32_0 : i32, i32
  }
  func.func @transform_11(%arg0: i32) -> (i32, i32) {
    %c0_i32 = arith.constant 0 : i32
    %c0_i32_0 = arith.constant 0 : i32
    %c0_i32_1 = arith.constant 0 : i32
    return %c0_i32, %c0_i32_0 : i32, i32
  }
  func.func @transform_12(%arg0: i32) -> (i32, i32) {
    %c0_i32 = arith.constant 0 : i32
    %c0_i32_0 = arith.constant 0 : i32
    return %c0_i32, %arg0 : i32, i32
  }
}

</mosaic_0001>

<llo_original>
// kernel: tpu_custom_call.1
$region0: #{tpu_custom_call.1}
  #allocation0 [shape = 'u32[]', space=smem, size = 0x4, offset = 0x4, fixed_abs, tag = 'smem constant byte address 0x4 - core index']
  #allocation1 [shape = 'u32[144,128]{1,0:T(1,128)}', space=vmem, size = 0x12000, scoped, tag = 'internal scratch']
  %s0 = inlined_call_operand.vmem [shape: f32[3,4096], index: 0, kind: input, shape index: {}]
  %s1 = inlined_call_operand.vmem [shape: f32[32,16], index: 1, kind: input, shape index: {}]
  %s2 = inlined_call_operand.vmem [shape: f32[32,1], index: 2, kind: input, shape index: {}]
  %s3 = inlined_call_operand.vmem [shape: f32[32,32], index: 3, kind: input, shape index: {}]
  %s4 = inlined_call_operand.vmem [shape: f32[32,1], index: 4, kind: input, shape index: {}]
  %s5 = inlined_call_operand.vmem [shape: f32[32,32], index: 5, kind: input, shape index: {}]
  %s6 = inlined_call_operand.vmem [shape: f32[32,3], index: 6, kind: input, shape index: {}]
  %s7 = inlined_call_operand.vmem [shape: f32[32,1], index: 7, kind: input, shape index: {}]
  %s8 = inlined_call_operand.vmem [shape: f32[32,32], index: 8, kind: input, shape index: {}]
  %s9 = inlined_call_operand.vmem [shape: f32[32,1], index: 9, kind: input, shape index: {}]
  %s10 = inlined_call_operand.vmem [shape: f32[3,32], index: 10, kind: input, shape index: {}]
  %s11 = inlined_call_operand.vmem [shape: f32[3,1], index: 11, kind: input, shape index: {}]
  %s12 = inlined_call_operand.hbm [shape: f32[3,4096], index: 12, kind: output, shape index: {}]
  %s13 = sld [smem:[#allocation0]]
  $region81: #{tpu_custom_call.1} parent=0
    _
  %s15 = ssub.s32 1, %s13
  %s16 = scalar_select 0, %s15, %s13
  $region1: #{tpu_custom_call.1} parent=0
    #allocation2 [shape = 'u8[32768]{0}', space=vmem, size = 0x8000, scoped, tag = 'output window, operand 0']
    #allocation3 [shape = 's32[2]{0}', space=sflag, size = 0x8, scoped, tag = 'scoped memory for tpu_custom_call.1']
    %17 = vsyncpa [#allocation3], 0
    %s18 = scalar_lea.sflag [#allocation3], 1
    %19 = vsyncpa %s18, 0
    loop: start=0, step=1, limit=6
    $region2: #{tpu_custom_call.1} parent=1 // loop_pre_header
      _
    $region3: #{tpu_custom_call.1} parent=1 // loop_header
      %s21 = sphi 0, %s25
      %p22 = scmp.ge.s32.totalorder %s21, 6
      %s31 = sphi 0, %s33
      %s34 = sphi 0, %s31
      %s35 = sphi 0, %s34
      %s51 = sphi 0, %s35
      %s55 = sphi 0, %s55
      %s57 = sphi 0, %s55
      %s58 = sphi 0, %s57
      %s72 = sphi 0, %s58
      %s76 = sphi 0, %s76
      %s78 = sphi 0, %s76
      %s79 = sphi 0, %s78
      %s93 = sphi 0, %s79
      %s97 = sphi 0, %s97
      %s99 = sphi 0, %s97
      %s100 = sphi 0, %s99
      %s114 = sphi 0, %s100
      %s118 = sphi 0, %s118
      %s120 = sphi 0, %s118
      %s121 = sphi 0, %s120
      %s135 = sphi 0, %s121
      %s139 = sphi 0, %s139
      %s141 = sphi 0, %s139
      %s142 = sphi 0, %s141
      %s156 = sphi 0, %s142
      %s160 = sphi 0, %s160
      %s162 = sphi 0, %s160
      %s163 = sphi 0, %s162
      %s177 = sphi 0, %s163
      %s181 = sphi 0, %s181
      %s183 = sphi 0, %s181
      %s184 = sphi 0, %s183
      %s198 = sphi 0, %s184
      %s202 = sphi 0, %s202
      %s204 = sphi 0, %s202
      %s205 = sphi 0, %s204
      %s219 = sphi 0, %s205
      %s223 = sphi 0, %s223
      %s225 = sphi 0, %s223
      %s226 = sphi 0, %s225
      %s240 = sphi 0, %s226
      %s244 = sphi 0, %s244
      %s246 = sphi 0, %s244
      %s247 = sphi 0, %s246
      %s261 = sphi 0, %s247
      %s265 = sphi 0, %s265
      %s267 = sphi 0, %s265
      %s268 = sphi 0, %s267
      %s282 = sphi 0, %s268
      %s288 = sphi 0, %s290
      %s291 = sphi 0, %s288
      %s292 = sphi 0, %s291
      %s308 = sphi 0, %s292
    $region4: #{tpu_custom_call.1} parent=1 // loop_header_branch
      %24 = sbr.rel (%p22) target = $region8
    $region5: #{tpu_custom_call.1} parent=1 // loop_body
      %s26 = ssub.s32 %s21, 1
      %s27 = ssub.s32 %s21, 2
      %s28 = sadd.s32 %s21, 1
      %s29 = ssub.s32 %s21, %s28
      %p30 = scmp.eq.s32.totalorder %s29, 0
      %s32 = sadd.s32 %s31, 1
      %s33 = scalar_select %p30, %s31, %s32
      %p36 = pneg %p30
      %p37 = scmp.eq.s32.totalorder %s21, 3
      %p38 = por %p36, %p37
      %p39 = scmp.ne.s32.totalorder %s31, %s34
      %p40 = scmp.eq.s32.totalorder %s21, 0
      %p41 = por %p39, %p40
      %p42 = scmp.ne.s32.totalorder %s31, %s34
      %p43 = scmp.eq.s32.totalorder %s26, 3
      %p44 = por %p42, %p43
      %p45 = scmp.ne.s32.totalorder %s34, %s35
      %p46 = scmp.eq.s32.totalorder %s26, 0
      %p47 = por %p45, %p46
      %p48 = scmp.ne.s32.totalorder %s34, %s35
      %p49 = scmp.eq.s32.totalorder %s27, 3
      %p50 = por %p48, %p49
      %p52 = scmp.ne.s32.totalorder %s35, %s51
      %p53 = scmp.eq.s32.totalorder %s27, 0
      %p54 = por %p52, %p53
      %s56 = sadd.s32 %s55, 1
      %p59 = scmp.eq.s32.totalorder %s21, 3
      %p60 = scmp.ne.s32.totalorder %s55, %s57
      %p61 = scmp.eq.s32.totalorder %s21, 0
      %p62 = por %p60, %p61
      %p63 = scmp.ne.s32.totalorder %s55, %s57
      %p64 = scmp.eq.s32.totalorder %s26, 3
      %p65 = por %p63, %p64
      %p66 = scmp.ne.s32.totalorder %s57, %s58
      %p67 = scmp.eq.s32.totalorder %s26, 0
      %p68 = por %p66, %p67
      %p69 = scmp.ne.s32.totalorder %s57, %s58
      %p70 = scmp.eq.s32.totalorder %s27, 3
      %p71 = por %p69, %p70
      %p73 = scmp.ne.s32.totalorder %s58, %s72
      %p74 = scmp.eq.s32.totalorder %s27, 0
      %p75 = por %p73, %p74
      %s77 = sadd.s32 %s76, 1
      %p80 = scmp.eq.s32.totalorder %s21, 3
      %p81 = scmp.ne.s32.totalorder %s76, %s78
      %p82 = scmp.eq.s32.totalorder %s21, 0
      %p83 = por %p81, %p82
      %p84 = scmp.ne.s32.totalorder %s76, %s78
      %p85 = scmp.eq.s32.totalorder %s26, 3
      %p86 = por %p84, %p85
      %p87 = scmp.ne.s32.totalorder %s78, %s79
      %p88 = scmp.eq.s32.totalorder %s26, 0
      %p89 = por %p87, %p88
      %p90 = scmp.ne.s32.totalorder %s78, %s79
      %p91 = scmp.eq.s32.totalorder %s27, 3
      %p92 = por %p90, %p91
      %p94 = scmp.ne.s32.totalorder %s79, %s93
      %p95 = scmp.eq.s32.totalorder %s27, 0
      %p96 = por %p94, %p95
      %s98 = sadd.s32 %s97, 1
      %p101 = scmp.eq.s32.totalorder %s21, 3
      %p102 = scmp.ne.s32.totalorder %s97, %s99
      %p103 = scmp.eq.s32.totalorder %s21, 0
      %p104 = por %p102, %p103
      %p105 = scmp.ne.s32.totalorder %s97, %s99
      %p106 = scmp.eq.s32.totalorder %s26, 3
      %p107 = por %p105, %p106
      %p108 = scmp.ne.s32.totalorder %s99, %s100
      %p109 = scmp.eq.s32.totalorder %s26, 0
      %p110 = por %p108, %p109
      %p111 = scmp.ne.s32.totalorder %s99, %s100
      %p112 = scmp.eq.s32.totalorder %s27, 3
      %p113 = por %p111, %p112
      %p115 = scmp.ne.s32.totalorder %s100, %s114
      %p116 = scmp.eq.s32.totalorder %s27, 0
      %p117 = por %p115, %p116
      %s119 = sadd.s32 %s118, 1
      %p122 = scmp.eq.s32.totalorder %s21, 3
      %p123 = scmp.ne.s32.totalorder %s118, %s120
      %p124 = scmp.eq.s32.totalorder %s21, 0
      %p125 = por %p123, %p124
      %p126 = scmp.ne.s32.totalorder %s118, %s120
      %p127 = scmp.eq.s32.totalorder %s26, 3
      %p128 = por %p126, %p127
      %p129 = scmp.ne.s32.totalorder %s120, %s121
      %p130 = scmp.eq.s32.totalorder %s26, 0
      %p131 = por %p129, %p130
      %p132 = scmp.ne.s32.totalorder %s120, %s121
      %p133 = scmp.eq.s32.totalorder %s27, 3
      %p134 = por %p132, %p133
      %p136 = scmp.ne.s32.totalorder %s121, %s135
      %p137 = scmp.eq.s32.totalorder %s27, 0
      %p138 = por %p136, %p137
      %s140 = sadd.s32 %s139, 1
      %p143 = scmp.eq.s32.totalorder %s21, 3
      %p144 = scmp.ne.s32.totalorder %s139, %s141
      %p145 = scmp.eq.s32.totalorder %s21, 0
      %p146 = por %p144, %p145
      %p147 = scmp.ne.s32.totalorder %s139, %s141
      %p148 = scmp.eq.s32.totalorder %s26, 3
      %p149 = por %p147, %p148
      %p150 = scmp.ne.s32.totalorder %s141, %s142
      %p151 = scmp.eq.s32.totalorder %s26, 0
      %p152 = por %p150, %p151
      %p153 = scmp.ne.s32.totalorder %s141, %s142
      %p154 = scmp.eq.s32.totalorder %s27, 3
      %p155 = por %p153, %p154
      %p157 = scmp.ne.s32.totalorder %s142, %s156
      %p158 = scmp.eq.s32.totalorder %s27, 0
      %p159 = por %p157, %p158
      %s161 = sadd.s32 %s160, 1
      %p164 = scmp.eq.s32.totalorder %s21, 3
      %p165 = scmp.ne.s32.totalorder %s160, %s162
      %p166 = scmp.eq.s32.totalorder %s21, 0
      %p167 = por %p165, %p166
      %p168 = scmp.ne.s32.totalorder %s160, %s162
      %p169 = scmp.eq.s32.totalorder %s26, 3
      %p170 = por %p168, %p169
      %p171 = scmp.ne.s32.totalorder %s162, %s163
      %p172 = scmp.eq.s32.totalorder %s26, 0
      %p173 = por %p171, %p172
      %p174 = scmp.ne.s32.totalorder %s162, %s163
      %p175 = scmp.eq.s32.totalorder %s27, 3
      %p176 = por %p174, %p175
      %p178 = scmp.ne.s32.totalorder %s163, %s177
      %p179 = scmp.eq.s32.totalorder %s27, 0
      %p180 = por %p178, %p179
      %s182 = sadd.s32 %s181, 1
      %p185 = scmp.eq.s32.totalorder %s21, 3
      %p186 = scmp.ne.s32.totalorder %s181, %s183
      %p187 = scmp.eq.s32.totalorder %s21, 0
      %p188 = por %p186, %p187
      %p189 = scmp.ne.s32.totalorder %s181, %s183
      %p190 = scmp.eq.s32.totalorder %s26, 3
      %p191 = por %p189, %p190
      %p192 = scmp.ne.s32.totalorder %s183, %s184
      %p193 = scmp.eq.s32.totalorder %s26, 0
      %p194 = por %p192, %p193
      %p195 = scmp.ne.s32.totalorder %s183, %s184
      %p196 = scmp.eq.s32.totalorder %s27, 3
      %p197 = por %p195, %p196
      %p199 = scmp.ne.s32.totalorder %s184, %s198
      %p200 = scmp.eq.s32.totalorder %s27, 0
      %p201 = por %p199, %p200
      %s203 = sadd.s32 %s202, 1
      %p206 = scmp.eq.s32.totalorder %s21, 3
      %p207 = scmp.ne.s32.totalorder %s202, %s204
      %p208 = scmp.eq.s32.totalorder %s21, 0
      %p209 = por %p207, %p208
      %p210 = scmp.ne.s32.totalorder %s202, %s204
      %p211 = scmp.eq.s32.totalorder %s26, 3
      %p212 = por %p210, %p211
      %p213 = scmp.ne.s32.totalorder %s204, %s205
      %p214 = scmp.eq.s32.totalorder %s26, 0
      %p215 = por %p213, %p214
      %p216 = scmp.ne.s32.totalorder %s204, %s205
      %p217 = scmp.eq.s32.totalorder %s27, 3
      %p218 = por %p216, %p217
      %p220 = scmp.ne.s32.totalorder %s205, %s219
      %p221 = scmp.eq.s32.totalorder %s27, 0
      %p222 = por %p220, %p221
      %s224 = sadd.s32 %s223, 1
      %p227 = scmp.eq.s32.totalorder %s21, 3
      %p228 = scmp.ne.s32.totalorder %s223, %s225
      %p229 = scmp.eq.s32.totalorder %s21, 0
      %p230 = por %p228, %p229
      %p231 = scmp.ne.s32.totalorder %s223, %s225
      %p232 = scmp.eq.s32.totalorder %s26, 3
      %p233 = por %p231, %p232
      %p234 = scmp.ne.s32.totalorder %s225, %s226
      %p235 = scmp.eq.s32.totalorder %s26, 0
      %p236 = por %p234, %p235
      %p237 = scmp.ne.s32.totalorder %s225, %s226
      %p238 = scmp.eq.s32.totalorder %s27, 3
      %p239 = por %p237, %p238
      %p241 = scmp.ne.s32.totalorder %s226, %s240
      %p242 = scmp.eq.s32.totalorder %s27, 0
      %p243 = por %p241, %p242
      %s245 = sadd.s32 %s244, 1
      %p248 = scmp.eq.s32.totalorder %s21, 3
      %p249 = scmp.ne.s32.totalorder %s244, %s246
      %p250 = scmp.eq.s32.totalorder %s21, 0
      %p251 = por %p249, %p250
      %p252 = scmp.ne.s32.totalorder %s244, %s246
      %p253 = scmp.eq.s32.totalorder %s26, 3
      %p254 = por %p252, %p253
      %p255 = scmp.ne.s32.totalorder %s246, %s247
      %p256 = scmp.eq.s32.totalorder %s26, 0
      %p257 = por %p255, %p256
      %p258 = scmp.ne.s32.totalorder %s246, %s247
      %p259 = scmp.eq.s32.totalorder %s27, 3
      %p260 = por %p258, %p259
      %p262 = scmp.ne.s32.totalorder %s247, %s261
      %p263 = scmp.eq.s32.totalorder %s27, 0
      %p264 = por %p262, %p263
      %s266 = sadd.s32 %s265, 1
      %p269 = scmp.eq.s32.totalorder %s21, 3
      %p270 = scmp.ne.s32.totalorder %s265, %s267
      %p271 = scmp.eq.s32.totalorder %s21, 0
      %p272 = por %p270, %p271
      %p273 = scmp.ne.s32.totalorder %s265, %s267
      %p274 = scmp.eq.s32.totalorder %s26, 3
      %p275 = por %p273, %p274
      %p276 = scmp.ne.s32.totalorder %s267, %s268
      %p277 = scmp.eq.s32.totalorder %s26, 0
      %p278 = por %p276, %p277
      %p279 = scmp.ne.s32.totalorder %s267, %s268
      %p280 = scmp.eq.s32.totalorder %s27, 3
      %p281 = por %p279, %p280
      %p283 = scmp.ne.s32.totalorder %s268, %s282
      %p284 = scmp.eq.s32.totalorder %s27, 0
      %p285 = por %p283, %p284
      %s286 = ssub.s32 %s21, %s28
      %p287 = scmp.eq.s32.totalorder %s286, 0
      %s289 = sadd.s32 %s288, 1
      %s290 = scalar_select %p287, %s288, %s289
      %p293 = pneg %p287
      %p294 = scmp.eq.s32.totalorder %s21, 3
      %p295 = por %p293, %p294
      %p296 = scmp.ne.s32.totalorder %s288, %s291
      %p297 = scmp.eq.s32.totalorder %s21, 0
      %p298 = por %p296, %p297
      %p299 = scmp.ne.s32.totalorder %s288, %s291
      %p300 = scmp.eq.s32.totalorder %s26, 3
      %p301 = por %p299, %p300
      %p302 = scmp.ne.s32.totalorder %s291, %s292
      %p303 = scmp.eq.s32.totalorder %s26, 0
      %p304 = por %p302, %p303
      %p305 = scmp.ne.s32.totalorder %s291, %s292
      %p306 = scmp.eq.s32.totalorder %s27, 3
      %p307 = por %p305, %p306
      %p309 = scmp.ne.s32.totalorder %s292, %s308
      %p310 = scmp.eq.s32.totalorder %s27, 0
      %p311 = por %p309, %p310
      %p312 = scmp.le.s32.totalorder 1, %s21
      %p313 = scmp.lt.s32.totalorder %s21, 5
      %p314 = pnand %p312, %p313
      %p315 = pneg %p314
      // Predicated region
      $region9: #{tpu_custom_call.1} parent=5 // pred_check
        _
      $region10: #{tpu_custom_call.1} parent=5 // pred_check_branch
        %317 = sbr.rel (%p314) target = $region12
      $region11: #{tpu_custom_call.1} parent=5 // pred_region
        %s318 = ssub.s32 %s21, 1
        // Predicated region
        $region13: #{tpu_custom_call.1} parent=11 // pred_check
          %p319 = pneg %p68
        $region14: #{tpu_custom_call.1} parent=11 // pred_check_branch
          %321 = sbr.rel (%p319) target = $region16
        $region15: #{tpu_custom_call.1} parent=11 // pred_region
          _
        $region16: #{tpu_custom_call.1} parent=11 // pred_fallthru
          _
        // Predicated region
        $region17: #{tpu_custom_call.1} parent=11 // pred_check
          %p322 = pneg %p89
        $region18: #{tpu_custom_call.1} parent=11 // pred_check_branch
          %324 = sbr.rel (%p322) target = $region20
        $region19: #{tpu_custom_call.1} parent=11 // pred_region
          _
        $region20: #{tpu_custom_call.1} parent=11 // pred_fallthru
          _
        // Predicated region
        $region21: #{tpu_custom_call.1} parent=11 // pred_check
          %p325 = pneg %p110
        $region22: #{tpu_custom_call.1} parent=11 // pred_check_branch
          %327 = sbr.rel (%p325) target = $region24
        $region23: #{tpu_custom_call.1} parent=11 // pred_region
          _
        $region24: #{tpu_custom_call.1} parent=11 // pred_fallthru
          _
        // Predicated region
        $region25: #{tpu_custom_call.1} parent=11 // pred_check
          %p328 = pneg %p131
        $region26: #{tpu_custom_call.1} parent=11 // pred_check_branch
          %330 = sbr.rel (%p328) target = $region28
        $region27: #{tpu_custom_call.1} parent=11 // pred_region
          _
        $region28: #{tpu_custom_call.1} parent=11 // pred_fallthru
          _
        // Predicated region
        $region29: #{tpu_custom_call.1} parent=11 // pred_check
          %p331 = pneg %p152
        $region30: #{tpu_custom_call.1} parent=11 // pred_check_branch
          %333 = sbr.rel (%p331) target = $region32
        $region31: #{tpu_custom_call.1} parent=11 // pred_region
          _
        $region32: #{tpu_custom_call.1} parent=11 // pred_fallthru
          _
        // Predicated region
        $region33: #{tpu_custom_call.1} parent=11 // pred_check
          %p334 = pneg %p173
        $region34: #{tpu_custom_call.1} parent=11 // pred_check_branch
          %336 = sbr.rel (%p334) target = $region36
        $region35: #{tpu_custom_call.1} parent=11 // pred_region
          _
        $region36: #{tpu_custom_call.1} parent=11 // pred_fallthru
          _
        // Predicated region
        $region37: #{tpu_custom_call.1} parent=11 // pred_check
          %p337 = pneg %p194
        $region38: #{tpu_custom_call.1} parent=11 // pred_check_branch
          %339 = sbr.rel (%p337) target = $region40
        $region39: #{tpu_custom_call.1} parent=11 // pred_region
          _
        $region40: #{tpu_custom_call.1} parent=11 // pred_fallthru
          _
        // Predicated region
        $region41: #{tpu_custom_call.1} parent=11 // pred_check
          %p340 = pneg %p215
        $region42: #{tpu_custom_call.1} parent=11 // pred_check_branch
          %342 = sbr.rel (%p340) target = $region44
        $region43: #{tpu_custom_call.1} parent=11 // pred_region
          _
        $region44: #{tpu_custom_call.1} parent=11 // pred_fallthru
          _
        // Predicated region
        $region45: #{tpu_custom_call.1} parent=11 // pred_check
          %p343 = pneg %p236
        $region46: #{tpu_custom_call.1} parent=11 // pred_check_branch
          %345 = sbr.rel (%p343) target = $region48
        $region47: #{tpu_custom_call.1} parent=11 // pred_region
          _
        $region48: #{tpu_custom_call.1} parent=11 // pred_fallthru
          _
        // Predicated region
        $region49: #{tpu_custom_call.1} parent=11 // pred_check
          %p346 = pneg %p257
        $region50: #{tpu_custom_call.1} parent=11 // pred_check_branch
          %348 = sbr.rel (%p346) target = $region52
        $region51: #{tpu_custom_call.1} parent=11 // pred_region
          _
        $region52: #{tpu_custom_call.1} parent=11 // pred_fallthru
          _
        // Predicated region
        $region53: #{tpu_custom_call.1} parent=11 // pred_check
          %p349 = pneg %p278
        $region54: #{tpu_custom_call.1} parent=11 // pred_check_branch
          %351 = sbr.rel (%p349) target = $region56
        $region55: #{tpu_custom_call.1} parent=11 // pred_region
          _
        $region56: #{tpu_custom_call.1} parent=11 // pred_fallthru
          _
      $region12: #{tpu_custom_call.1} parent=5 // pred_fallthru
        _
      %p352 = scmp.lt.s32.totalorder %s21, 4
      // Predicated region
      $region57: #{tpu_custom_call.1} parent=5 // pred_check
        %p353 = pneg %p352
      $region58: #{tpu_custom_call.1} parent=5 // pred_check_branch
        %355 = sbr.rel (%p353) target = $region60
      $region59: #{tpu_custom_call.1} parent=5 // pred_region
        // Predicated region
        $region61: #{tpu_custom_call.1} parent=59 // pred_check
          %p356 = pneg %p41
        $region62: #{tpu_custom_call.1} parent=59 // pred_check_branch
          %358 = sbr.rel (%p356) target = $region64
        $region63: #{tpu_custom_call.1} parent=59 // pred_region
          %s359 = smul.u32 8, %s21
          %p360 = scmp.lt.s32.totalorder %s359, 31
          %s361 = scalar_select %p360, %s359, 31
          %s362 = smul.addr %s361, 4
          %s363 = scalar_lea.vmem %s0, %s362
          %s364 = smul.u32 8, %s21
        $region64: #{tpu_custom_call.1} parent=59 // pred_fallthru
          _
      $region60: #{tpu_custom_call.1} parent=5 // pred_fallthru
        _
      %p365 = scmp.le.s32.totalorder 1, %s21
      %p366 = scmp.lt.s32.totalorder %s21, 5
      %p367 = pnand %p365, %p366
      %p368 = pneg %p367
      // Predicated region
      $region65: #{tpu_custom_call.1} parent=5 // pred_check
        _
      $region66: #{tpu_custom_call.1} parent=5 // pred_check_branch
        %370 = sbr.rel (%p367) target = $region68
      $region67: #{tpu_custom_call.1} parent=5 // pred_region
        %s371 = ssub.s32 %s21, 1
        %s372 = smul.u32 8, %s26
        %p373 = scmp.lt.s32.totalorder %s372, 31
        %s374 = scalar_select %p373, %s372, 31
        %s375 = smul.addr %s374, 4
        %s376 = scalar_lea.vmem %s0, %s375
        %p377 = pneg %p47
        %p378 = pneg %p44
        %p379 = pneg %p68
        %p380 = pneg %p65
        %p381 = pneg %p89
        %p382 = pneg %p86
        %p383 = pneg %p110
        %p384 = pneg %p107
        %p385 = pneg %p131
        %p386 = pneg %p128
        %p387 = pneg %p152
        %p388 = pneg %p149
        %p389 = pneg %p173
        %p390 = pneg %p170
        %p391 = pneg %p194
        %p392 = pneg %p191
        %p393 = pneg %p215
        %p394 = pneg %p212
        %p395 = pneg %p236
        %p396 = pneg %p233
        %p397 = pneg %p257
        %p398 = pneg %p254
        %p399 = pneg %p278
        %p400 = pneg %p275
        %p401 = pneg %p304
        %p402 = pneg %p301
        %s403 = sand.u32 %s291, 1
        %s404 = scalar_lea.sflag [#allocation3], %s403
        %s405 = sand.u32 %s291, 1
        %s406 = smul.addr %s405, 32
        %s407 = scalar_lea.vmem [#allocation2], %s406
        %s408 = smul.u32 8, %s26
        %p409 = scmp.lt.s32.totalorder %s408, 31
        %s410 = scalar_select %p409, %s408, 31
        %s411 = smul.addr %s410, 4
        %s412 = scalar_lea.vmem %s0, %s411
        %s413 = smul.u32 8, %s26
        %s414 = smul.u32 8, %s26
        %v415 = vld [vmem:[%s412] sm:$0x77]
        %v416 = vld [vmem:[%s412 + $0x8] sm:$0x77]
        %v417 = vld [vmem:[%s412 + $0x10] sm:$0x77]
        %v418 = vld [vmem:[%s412 + $0x18] sm:$0x77]
        %v419 = vmul.f32 %v415, %v415
        %v420 = vmul.f32 %v416, %v416
        %v421 = vmul.f32 %v417, %v417
        %v422 = vmul.f32 %v418, %v418
        %v423 = vmul.f32 %v415, 0.48860252
        %v424 = vmul.f32 %v416, 0.48860252
        %v425 = vmul.f32 %v417, 0.48860252
        %v426 = vmul.f32 %v418, 0.48860252
        %v427 = vmul.f32 %v415, 1.0925485
        %v428 = vmul.f32 %v416, 1.0925485
        %v429 = vmul.f32 %v417, 1.0925485
        %v430 = vmul.f32 %v418, 1.0925485
        %v435 = vrot.slane %v415, 5
        %v436 = vrot.slane %v435, 4
        %v437 = vrot.slane %v416, 5
        %v438 = vrot.slane %v437, 4
        %v439 = vrot.slane %v417, 5
        %v440 = vrot.slane %v439, 4
        %v441 = vrot.slane %v418, 5
        %v442 = vrot.slane %v441, 4
        %v447 = vmul.f32 %v427, %v436
        %v448 = vmul.f32 %v428, %v438
        %v449 = vmul.f32 %v429, %v440
        %v450 = vmul.f32 %v430, %v442
        %v451 = vmul.f32 %v419, 0.9461747
        %v452 = vmul.f32 %v420, 0.9461747
        %v453 = vmul.f32 %v421, 0.9461747
        %v454 = vmul.f32 %v422, 0.9461747
        %v455 = vsub.f32 %v451, 0.31539157
        %v456 = vsub.f32 %v452, 0.31539157
        %v457 = vsub.f32 %v453, 0.31539157
        %v458 = vsub.f32 %v454, 0.31539157
        %v459 = vrot.slane %v415, 6
        %v460 = vrot.slane %v459, 4
        %v461 = vrot.slane %v416, 6
        %v462 = vrot.slane %v461, 4
        %v463 = vrot.slane %v417, 6
        %v464 = vrot.slane %v463, 4
        %v465 = vrot.slane %v418, 6
        %v466 = vrot.slane %v465, 4
        %v471 = vmul.f32 %v427, %v460
        %v472 = vmul.f32 %v428, %v462
        %v473 = vmul.f32 %v429, %v464
        %v474 = vmul.f32 %v430, %v466
        %v479 = vrot.slane %v419, 5
        %v480 = vrot.slane %v479, 4
        %v481 = vrot.slane %v420, 5
        %v482 = vrot.slane %v481, 4
        %v483 = vrot.slane %v421, 5
        %v484 = vrot.slane %v483, 4
        %v485 = vrot.slane %v422, 5
        %v486 = vrot.slane %v485, 4
        %v491 = vsub.f32 %v419, %v480
        %v492 = vsub.f32 %v420, %v482
        %v493 = vsub.f32 %v421, %v484
        %v494 = vsub.f32 %v422, %v486
        %v495 = vmul.f32 %v491, 0.54627424
        %v496 = vmul.f32 %v492, 0.54627424
        %v497 = vmul.f32 %v493, 0.54627424
        %v498 = vmul.f32 %v494, 0.54627424
        %v499 = vmul.f32 %v415, 0.5900436
        %v500 = vmul.f32 %v416, 0.5900436
        %v501 = vmul.f32 %v417, 0.5900436
        %v502 = vmul.f32 %v418, 0.5900436
        %v503 = vmul.f32 %v419, 3.0
        %v504 = vmul.f32 %v420, 3.0
        %v505 = vmul.f32 %v421, 3.0
        %v506 = vmul.f32 %v422, 3.0
        %v507 = vsub.f32 %v503, %v480
        %v508 = vsub.f32 %v504, %v482
        %v509 = vsub.f32 %v505, %v484
        %v510 = vsub.f32 %v506, %v486
        %v515 = vrot.slane %v507, 7
        %v516 = vrot.slane %v508, 7
        %v517 = vrot.slane %v509, 7
        %v518 = vrot.slane %v510, 7
        %v523 = vmul.f32 %v499, %v515
        %v524 = vmul.f32 %v500, %v516
        %v525 = vmul.f32 %v501, %v517
        %v526 = vmul.f32 %v502, %v518
        %v527 = vmul.f32 %v415, 2.8906114
        %v528 = vmul.f32 %v416, 2.8906114
        %v529 = vmul.f32 %v417, 2.8906114
        %v530 = vmul.f32 %v418, 2.8906114
        %v531 = vmul.f32 %v527, %v436
        %v532 = vmul.f32 %v528, %v438
        %v533 = vmul.f32 %v529, %v440
        %v534 = vmul.f32 %v530, %v442
        %v535 = vmul.f32 %v531, %v460
        %v536 = vmul.f32 %v532, %v462
        %v537 = vmul.f32 %v533, %v464
        %v538 = vmul.f32 %v534, %v466
        %v539 = vmul.f32 %v415, 0.4570458
        %v540 = vmul.f32 %v416, 0.4570458
        %v541 = vmul.f32 %v417, 0.4570458
        %v542 = vmul.f32 %v418, 0.4570458
        %v543 = vmul.f32 %v419, 5.0
        %v544 = vmul.f32 %v420, 5.0
        %v545 = vmul.f32 %v421, 5.0
        %v546 = vmul.f32 %v422, 5.0
        %v547 = vsub.f32 %v543, 1.0
        %v548 = vsub.f32 %v544, 1.0
        %v549 = vsub.f32 %v545, 1.0
        %v550 = vsub.f32 %v546, 1.0
        %v555 = vrot.slane %v547, 5
        %v556 = vrot.slane %v555, 4
        %v557 = vrot.slane %v548, 5
        %v558 = vrot.slane %v557, 4
        %v559 = vrot.slane %v549, 5
        %v560 = vrot.slane %v559, 4
        %v561 = vrot.slane %v550, 5
        %v562 = vrot.slane %v561, 4
        %v567 = vmul.f32 %v539, %v556
        %v568 = vmul.f32 %v540, %v558
        %v569 = vmul.f32 %v541, %v560
        %v570 = vmul.f32 %v542, %v562
        %v571 = vmul.f32 %v415, 0.37317634
        %v572 = vmul.f32 %v416, 0.37317634
        %v573 = vmul.f32 %v417, 0.37317634
        %v574 = vmul.f32 %v418, 0.37317634
        %v575 = vsub.f32 %v543, 3.0
        %v576 = vsub.f32 %v544, 3.0
        %v577 = vsub.f32 %v545, 3.0
        %v578 = vsub.f32 %v546, 3.0
        %v579 = vmul.f32 %v571, %v575
        %v580 = vmul.f32 %v572, %v576
        %v581 = vmul.f32 %v573, %v577
        %v582 = vmul.f32 %v574, %v578
        %v583 = vrot.slane %v547, 6
        %v584 = vrot.slane %v583, 4
        %v585 = vrot.slane %v548, 6
        %v586 = vrot.slane %v585, 4
        %v587 = vrot.slane %v549, 6
        %v588 = vrot.slane %v587, 4
        %v589 = vrot.slane %v550, 6
        %v590 = vrot.slane %v589, 4
        %v595 = vmul.f32 %v539, %v584
        %v596 = vmul.f32 %v540, %v586
        %v597 = vmul.f32 %v541, %v588
        %v598 = vmul.f32 %v542, %v590
        %v599 = vmul.f32 %v415, 1.4453057
        %v600 = vmul.f32 %v416, 1.4453057
        %v601 = vmul.f32 %v417, 1.4453057
        %v602 = vmul.f32 %v418, 1.4453057
        %v607 = vrot.slane %v491, 6
        %v608 = vrot.slane %v492, 6
        %v609 = vrot.slane %v493, 6
        %v610 = vrot.slane %v494, 6
        %v615 = vmul.f32 %v599, %v607
        %v616 = vmul.f32 %v600, %v608
        %v617 = vmul.f32 %v601, %v609
        %v618 = vmul.f32 %v602, %v610
        %v623 = vrot.slane %v503, 5
        %v624 = vrot.slane %v623, 4
        %v625 = vrot.slane %v504, 5
        %v626 = vrot.slane %v625, 4
        %v627 = vrot.slane %v505, 5
        %v628 = vrot.slane %v627, 4
        %v629 = vrot.slane %v506, 5
        %v630 = vrot.slane %v629, 4
        %v635 = vsub.f32 %v419, %v624
        %v636 = vsub.f32 %v420, %v626
        %v637 = vsub.f32 %v421, %v628
        %v638 = vsub.f32 %v422, %v630
        %v639 = vmul.f32 %v499, %v635
        %v640 = vmul.f32 %v500, %v636
        %v641 = vmul.f32 %v501, %v637
        %v642 = vmul.f32 %v502, %v638
        %v647 = vlaneseq
        %v648 = vshrl.u32 %v647, 7
        %v649 = vsub.s32 1, %v648
        %v650 = vrot.slane %v423, %v649
        %v651 = vlaneseq
        %v652 = vshrl.u32 %v651, 7
        %v653 = vsub.s32 5, %v652
        %v654 = vrot.slane %v423, %v653
        %v655 = vlaneseq
        %v656 = vshrl.u32 %v655, 7
        %v657 = vsub.s32 1, %v656
        %v658 = vrot.slane %v424, %v657
        %v659 = vlaneseq
        %v660 = vshrl.u32 %v659, 7
        %v661 = vsub.s32 5, %v660
        %v662 = vrot.slane %v424, %v661
        %v663 = vlaneseq
        %v664 = vshrl.u32 %v663, 7
        %v665 = vsub.s32 1, %v664
        %v666 = vrot.slane %v425, %v665
        %v667 = vlaneseq
        %v668 = vshrl.u32 %v667, 7
        %v669 = vsub.s32 5, %v668
        %v670 = vrot.slane %v425, %v669
        %v671 = vlaneseq
        %v672 = vshrl.u32 %v671, 7
        %v673 = vsub.s32 1, %v672
        %v674 = vrot.slane %v426, %v673
        %v675 = vlaneseq
        %v676 = vshrl.u32 %v675, 7
        %v677 = vsub.s32 5, %v676
        %v678 = vrot.slane %v426, %v677
        %v687 = vlaneseq
        %v688 = vshrl.u32 %v687, 7
        %v689 = vsub.s32 2, %v688
        %v690 = vrot.slane %v423, %v689
        %v691 = vlaneseq
        %v692 = vshrl.u32 %v691, 7
        %v693 = vsub.s32 6, %v692
        %v694 = vrot.slane %v423, %v693
        %v695 = vlaneseq
        %v696 = vshrl.u32 %v695, 7
        %v697 = vsub.s32 2, %v696
        %v698 = vrot.slane %v424, %v697
        %v699 = vlaneseq
        %v700 = vshrl.u32 %v699, 7
        %v701 = vsub.s32 6, %v700
        %v702 = vrot.slane %v424, %v701
        %v703 = vlaneseq
        %v704 = vshrl.u32 %v703, 7
        %v705 = vsub.s32 2, %v704
        %v706 = vrot.slane %v425, %v705
        %v707 = vlaneseq
        %v708 = vshrl.u32 %v707, 7
        %v709 = vsub.s32 6, %v708
        %v710 = vrot.slane %v425, %v709
        %v711 = vlaneseq
        %v712 = vshrl.u32 %v711, 7
        %v713 = vsub.s32 2, %v712
        %v714 = vrot.slane %v426, %v713
        %v715 = vlaneseq
        %v716 = vshrl.u32 %v715, 7
        %v717 = vsub.s32 6, %v716
        %v718 = vrot.slane %v426, %v717
        %v727 = vlaneseq
        %v728 = vshrl.u32 %v727, 7
        %v729 = vsub.s32 0, %v728
        %v730 = vrot.slane %v423, %v729
        %v731 = vlaneseq
        %v732 = vshrl.u32 %v731, 7
        %v733 = vsub.s32 4, %v732
        %v734 = vrot.slane %v423, %v733
        %v735 = vlaneseq
        %v736 = vshrl.u32 %v735, 7
        %v737 = vsub.s32 0, %v736
        %v738 = vrot.slane %v424, %v737
        %v739 = vlaneseq
        %v740 = vshrl.u32 %v739, 7
        %v741 = vsub.s32 4, %v740
        %v742 = vrot.slane %v424, %v741
        %v743 = vlaneseq
        %v744 = vshrl.u32 %v743, 7
        %v745 = vsub.s32 0, %v744
        %v746 = vrot.slane %v425, %v745
        %v747 = vlaneseq
        %v748 = vshrl.u32 %v747, 7
        %v749 = vsub.s32 4, %v748
        %v750 = vrot.slane %v425, %v749
        %v751 = vlaneseq
        %v752 = vshrl.u32 %v751, 7
        %v753 = vsub.s32 0, %v752
        %v754 = vrot.slane %v426, %v753
        %v755 = vlaneseq
        %v756 = vshrl.u32 %v755, 7
        %v757 = vsub.s32 4, %v756
        %v758 = vrot.slane %v426, %v757
        %v771 = vlaneseq
        %v772 = vshrl.u32 %v771, 7
        %v773 = vsub.s32 0, %v772
        %v774 = vrot.slane %v447, %v773
        %v775 = vlaneseq
        %v776 = vshrl.u32 %v775, 7
        %v777 = vsub.s32 4, %v776
        %v778 = vrot.slane %v447, %v777
        %v779 = vlaneseq
        %v780 = vshrl.u32 %v779, 7
        %v781 = vsub.s32 0, %v780
        %v782 = vrot.slane %v448, %v781
        %v783 = vlaneseq
        %v784 = vshrl.u32 %v783, 7
        %v785 = vsub.s32 4, %v784
        %v786 = vrot.slane %v448, %v785
        %v787 = vlaneseq
        %v788 = vshrl.u32 %v787, 7
        %v789 = vsub.s32 0, %v788
        %v790 = vrot.slane %v449, %v789
        %v791 = vlaneseq
        %v792 = vshrl.u32 %v791, 7
        %v793 = vsub.s32 4, %v792
        %v794 = vrot.slane %v449, %v793
        %v795 = vlaneseq
        %v796 = vshrl.u32 %v795, 7
        %v797 = vsub.s32 0, %v796
        %v798 = vrot.slane %v450, %v797
        %v799 = vlaneseq
        %v800 = vshrl.u32 %v799, 7
        %v801 = vsub.s32 4, %v800
        %v802 = vrot.slane %v450, %v801
        %v811 = vlaneseq
        %v812 = vshrl.u32 %v811, 7
        %v813 = vsub.s32 1, %v812
        %v814 = vrot.slane %v447, %v813
        %v815 = vlaneseq
        %v816 = vshrl.u32 %v815, 7
        %v817 = vsub.s32 5, %v816
        %v818 = vrot.slane %v447, %v817
        %v819 = vlaneseq
        %v820 = vshrl.u32 %v819, 7
        %v821 = vsub.s32 1, %v820
        %v822 = vrot.slane %v448, %v821
        %v823 = vlaneseq
        %v824 = vshrl.u32 %v823, 7
        %v825 = vsub.s32 5, %v824
        %v826 = vrot.slane %v448, %v825
        %v827 = vlaneseq
        %v828 = vshrl.u32 %v827, 7
        %v829 = vsub.s32 1, %v828
        %v830 = vrot.slane %v449, %v829
        %v831 = vlaneseq
        %v832 = vshrl.u32 %v831, 7
        %v833 = vsub.s32 5, %v832
        %v834 = vrot.slane %v449, %v833
        %v835 = vlaneseq
        %v836 = vshrl.u32 %v835, 7
        %v837 = vsub.s32 1, %v836
        %v838 = vrot.slane %v450, %v837
        %v839 = vlaneseq
        %v840 = vshrl.u32 %v839, 7
        %v841 = vsub.s32 5, %v840
        %v842 = vrot.slane %v450, %v841
        %v855 = vlaneseq
        %v856 = vshrl.u32 %v855, 7
        %v857 = vsub.s32 2, %v856
        %v858 = vrot.slane %v455, %v857
        %v859 = vlaneseq
        %v860 = vshrl.u32 %v859, 7
        %v861 = vsub.s32 6, %v860
        %v862 = vrot.slane %v455, %v861
        %v863 = vlaneseq
        %v864 = vshrl.u32 %v863, 7
        %v865 = vsub.s32 2, %v864
        %v866 = vrot.slane %v456, %v865
        %v867 = vlaneseq
        %v868 = vshrl.u32 %v867, 7
        %v869 = vsub.s32 6, %v868
        %v870 = vrot.slane %v456, %v869
        %v871 = vlaneseq
        %v872 = vshrl.u32 %v871, 7
        %v873 = vsub.s32 2, %v872
        %v874 = vrot.slane %v457, %v873
        %v875 = vlaneseq
        %v876 = vshrl.u32 %v875, 7
        %v877 = vsub.s32 6, %v876
        %v878 = vrot.slane %v457, %v877
        %v879 = vlaneseq
        %v880 = vshrl.u32 %v879, 7
        %v881 = vsub.s32 2, %v880
        %v882 = vrot.slane %v458, %v881
        %v883 = vlaneseq
        %v884 = vshrl.u32 %v883, 7
        %v885 = vsub.s32 6, %v884
        %v886 = vrot.slane %v458, %v885
        %v899 = vlaneseq
        %v900 = vshrl.u32 %v899, 7
        %v901 = vsub.s32 0, %v900
        %v902 = vrot.slane %v471, %v901
        %v903 = vlaneseq
        %v904 = vshrl.u32 %v903, 7
        %v905 = vsub.s32 4, %v904
        %v906 = vrot.slane %v471, %v905
        %v907 = vlaneseq
        %v908 = vshrl.u32 %v907, 7
        %v909 = vsub.s32 0, %v908
        %v910 = vrot.slane %v472, %v909
        %v911 = vlaneseq
        %v912 = vshrl.u32 %v911, 7
        %v913 = vsub.s32 4, %v912
        %v914 = vrot.slane %v472, %v913
        %v915 = vlaneseq
        %v916 = vshrl.u32 %v915, 7
        %v917 = vsub.s32 0, %v916
        %v918 = vrot.slane %v473, %v917
        %v919 = vlaneseq
        %v920 = vshrl.u32 %v919, 7
        %v921 = vsub.s32 4, %v920
        %v922 = vrot.slane %v473, %v921
        %v923 = vlaneseq
        %v924 = vshrl.u32 %v923, 7
        %v925 = vsub.s32 0, %v924
        %v926 = vrot.slane %v474, %v925
        %v927 = vlaneseq
        %v928 = vshrl.u32 %v927, 7
        %v929 = vsub.s32 4, %v928
        %v930 = vrot.slane %v474, %v929
        %v943 = vlaneseq
        %v944 = vshrl.u32 %v943, 7
        %v945 = vsub.s32 0, %v944
        %v946 = vrot.slane %v495, %v945
        %v947 = vlaneseq
        %v948 = vshrl.u32 %v947, 7
        %v949 = vsub.s32 4, %v948
        %v950 = vrot.slane %v495, %v949
        %v951 = vlaneseq
        %v952 = vshrl.u32 %v951, 7
        %v953 = vsub.s32 0, %v952
        %v954 = vrot.slane %v496, %v953
        %v955 = vlaneseq
        %v956 = vshrl.u32 %v955, 7
        %v957 = vsub.s32 4, %v956
        %v958 = vrot.slane %v496, %v957
        %v959 = vlaneseq
        %v960 = vshrl.u32 %v959, 7
        %v961 = vsub.s32 0, %v960
        %v962 = vrot.slane %v497, %v961
        %v963 = vlaneseq
        %v964 = vshrl.u32 %v963, 7
        %v965 = vsub.s32 4, %v964
        %v966 = vrot.slane %v497, %v965
        %v967 = vlaneseq
        %v968 = vshrl.u32 %v967, 7
        %v969 = vsub.s32 0, %v968
        %v970 = vrot.slane %v498, %v969
        %v971 = vlaneseq
        %v972 = vshrl.u32 %v971, 7
        %v973 = vsub.s32 4, %v972
        %v974 = vrot.slane %v498, %v973
        %v987 = vlaneseq
        %v988 = vshrl.u32 %v987, 7
        %v989 = vsub.s32 1, %v988
        %v990 = vrot.slane %v523, %v989
        %v991 = vlaneseq
        %v992 = vshrl.u32 %v991, 7
        %v993 = vsub.s32 5, %v992
        %v994 = vrot.slane %v523, %v993
        %v995 = vlaneseq
        %v996 = vshrl.u32 %v995, 7
        %v997 = vsub.s32 1, %v996
        %v998 = vrot.slane %v524, %v997
        %v999 = vlaneseq
        %v1000 = vshrl.u32 %v999, 7
        %v1001 = vsub.s32 5, %v1000
        %v1002 = vrot.slane %v524, %v1001
        %v1003 = vlaneseq
        %v1004 = vshrl.u32 %v1003, 7
        %v1005 = vsub.s32 1, %v1004
        %v1006 = vrot.slane %v525, %v1005
        %v1007 = vlaneseq
        %v1008 = vshrl.u32 %v1007, 7
        %v1009 = vsub.s32 5, %v1008
        %v1010 = vrot.slane %v525, %v1009
        %v1011 = vlaneseq
        %v1012 = vshrl.u32 %v1011, 7
        %v1013 = vsub.s32 1, %v1012
        %v1014 = vrot.slane %v526, %v1013
        %v1015 = vlaneseq
        %v1016 = vshrl.u32 %v1015, 7
        %v1017 = vsub.s32 5, %v1016
        %v1018 = vrot.slane %v526, %v1017
        %v1031 = vlaneseq
        %v1032 = vshrl.u32 %v1031, 7
        %v1033 = vsub.s32 0, %v1032
        %v1034 = vrot.slane %v535, %v1033
        %v1035 = vlaneseq
        %v1036 = vshrl.u32 %v1035, 7
        %v1037 = vsub.s32 4, %v1036
        %v1038 = vrot.slane %v535, %v1037
        %v1039 = vlaneseq
        %v1040 = vshrl.u32 %v1039, 7
        %v1041 = vsub.s32 0, %v1040
        %v1042 = vrot.slane %v536, %v1041
        %v1043 = vlaneseq
        %v1044 = vshrl.u32 %v1043, 7
        %v1045 = vsub.s32 4, %v1044
        %v1046 = vrot.slane %v536, %v1045
        %v1047 = vlaneseq
        %v1048 = vshrl.u32 %v1047, 7
        %v1049 = vsub.s32 0, %v1048
        %v1050 = vrot.slane %v537, %v1049
        %v1051 = vlaneseq
        %v1052 = vshrl.u32 %v1051, 7
        %v1053 = vsub.s32 4, %v1052
        %v1054 = vrot.slane %v537, %v1053
        %v1055 = vlaneseq
        %v1056 = vshrl.u32 %v1055, 7
        %v1057 = vsub.s32 0, %v1056
        %v1058 = vrot.slane %v538, %v1057
        %v1059 = vlaneseq
        %v1060 = vshrl.u32 %v1059, 7
        %v1061 = vsub.s32 4, %v1060
        %v1062 = vrot.slane %v538, %v1061
        %v1075 = vlaneseq
        %v1076 = vshrl.u32 %v1075, 7
        %v1077 = vsub.s32 1, %v1076
        %v1078 = vrot.slane %v567, %v1077
        %v1079 = vlaneseq
        %v1080 = vshrl.u32 %v1079, 7
        %v1081 = vsub.s32 5, %v1080
        %v1082 = vrot.slane %v567, %v1081
        %v1083 = vlaneseq
        %v1084 = vshrl.u32 %v1083, 7
        %v1085 = vsub.s32 1, %v1084
        %v1086 = vrot.slane %v568, %v1085
        %v1087 = vlaneseq
        %v1088 = vshrl.u32 %v1087, 7
        %v1089 = vsub.s32 5, %v1088
        %v1090 = vrot.slane %v568, %v1089
        %v1091 = vlaneseq
        %v1092 = vshrl.u32 %v1091, 7
        %v1093 = vsub.s32 1, %v1092
        %v1094 = vrot.slane %v569, %v1093
        %v1095 = vlaneseq
        %v1096 = vshrl.u32 %v1095, 7
        %v1097 = vsub.s32 5, %v1096
        %v1098 = vrot.slane %v569, %v1097
        %v1099 = vlaneseq
        %v1100 = vshrl.u32 %v1099, 7
        %v1101 = vsub.s32 1, %v1100
        %v1102 = vrot.slane %v570, %v1101
        %v1103 = vlaneseq
        %v1104 = vshrl.u32 %v1103, 7
        %v1105 = vsub.s32 5, %v1104
        %v1106 = vrot.slane %v570, %v1105
        %v1119 = vlaneseq
        %v1120 = vshrl.u32 %v1119, 7
        %v1121 = vsub.s32 2, %v1120
        %v1122 = vrot.slane %v579, %v1121
        %v1123 = vlaneseq
        %v1124 = vshrl.u32 %v1123, 7
        %v1125 = vsub.s32 6, %v1124
        %v1126 = vrot.slane %v579, %v1125
        %v1127 = vlaneseq
        %v1128 = vshrl.u32 %v1127, 7
        %v1129 = vsub.s32 2, %v1128
        %v1130 = vrot.slane %v580, %v1129
        %v1131 = vlaneseq
        %v1132 = vshrl.u32 %v1131, 7
        %v1133 = vsub.s32 6, %v1132
        %v1134 = vrot.slane %v580, %v1133
        %v1135 = vlaneseq
        %v1136 = vshrl.u32 %v1135, 7
        %v1137 = vsub.s32 2, %v1136
        %v1138 = vrot.slane %v581, %v1137
        %v1139 = vlaneseq
        %v1140 = vshrl.u32 %v1139, 7
        %v1141 = vsub.s32 6, %v1140
        %v1142 = vrot.slane %v581, %v1141
        %v1143 = vlaneseq
        %v1144 = vshrl.u32 %v1143, 7
        %v1145 = vsub.s32 2, %v1144
        %v1146 = vrot.slane %v582, %v1145
        %v1147 = vlaneseq
        %v1148 = vshrl.u32 %v1147, 7
        %v1149 = vsub.s32 6, %v1148
        %v1150 = vrot.slane %v582, %v1149
        %v1163 = vlaneseq
        %v1164 = vshrl.u32 %v1163, 7
        %v1165 = vsub.s32 0, %v1164
        %v1166 = vrot.slane %v595, %v1165
        %v1167 = vlaneseq
        %v1168 = vshrl.u32 %v1167, 7
        %v1169 = vsub.s32 4, %v1168
        %v1170 = vrot.slane %v595, %v1169
        %v1171 = vlaneseq
        %v1172 = vshrl.u32 %v1171, 7
        %v1173 = vsub.s32 0, %v1172
        %v1174 = vrot.slane %v596, %v1173
        %v1175 = vlaneseq
        %v1176 = vshrl.u32 %v1175, 7
        %v1177 = vsub.s32 4, %v1176
        %v1178 = vrot.slane %v596, %v1177
        %v1179 = vlaneseq
        %v1180 = vshrl.u32 %v1179, 7
        %v1181 = vsub.s32 0, %v1180
        %v1182 = vrot.slane %v597, %v1181
        %v1183 = vlaneseq
        %v1184 = vshrl.u32 %v1183, 7
        %v1185 = vsub.s32 4, %v1184
        %v1186 = vrot.slane %v597, %v1185
        %v1187 = vlaneseq
        %v1188 = vshrl.u32 %v1187, 7
        %v1189 = vsub.s32 0, %v1188
        %v1190 = vrot.slane %v598, %v1189
        %v1191 = vlaneseq
        %v1192 = vshrl.u32 %v1191, 7
        %v1193 = vsub.s32 4, %v1192
        %v1194 = vrot.slane %v598, %v1193
        %v1207 = vlaneseq
        %v1208 = vshrl.u32 %v1207, 7
        %v1209 = vsub.s32 2, %v1208
        %v1210 = vrot.slane %v615, %v1209
        %v1211 = vlaneseq
        %v1212 = vshrl.u32 %v1211, 7
        %v1213 = vsub.s32 6, %v1212
        %v1214 = vrot.slane %v615, %v1213
        %v1215 = vlaneseq
        %v1216 = vshrl.u32 %v1215, 7
        %v1217 = vsub.s32 2, %v1216
        %v1218 = vrot.slane %v616, %v1217
        %v1219 = vlaneseq
        %v1220 = vshrl.u32 %v1219, 7
        %v1221 = vsub.s32 6, %v1220
        %v1222 = vrot.slane %v616, %v1221
        %v1223 = vlaneseq
        %v1224 = vshrl.u32 %v1223, 7
        %v1225 = vsub.s32 2, %v1224
        %v1226 = vrot.slane %v617, %v1225
        %v1227 = vlaneseq
        %v1228 = vshrl.u32 %v1227, 7
        %v1229 = vsub.s32 6, %v1228
        %v1230 = vrot.slane %v617, %v1229
        %v1231 = vlaneseq
        %v1232 = vshrl.u32 %v1231, 7
        %v1233 = vsub.s32 2, %v1232
        %v1234 = vrot.slane %v618, %v1233
        %v1235 = vlaneseq
        %v1236 = vshrl.u32 %v1235, 7
        %v1237 = vsub.s32 6, %v1236
        %v1238 = vrot.slane %v618, %v1237
        %v1251 = vlaneseq
        %v1252 = vshrl.u32 %v1251, 7
        %v1253 = vsub.s32 0, %v1252
        %v1254 = vrot.slane %v639, %v1253
        %v1255 = vlaneseq
        %v1256 = vshrl.u32 %v1255, 7
        %v1257 = vsub.s32 4, %v1256
        %v1258 = vrot.slane %v639, %v1257
        %v1259 = vlaneseq
        %v1260 = vshrl.u32 %v1259, 7
        %v1261 = vsub.s32 0, %v1260
        %v1262 = vrot.slane %v640, %v1261
        %v1263 = vlaneseq
        %v1264 = vshrl.u32 %v1263, 7
        %v1265 = vsub.s32 4, %v1264
        %v1266 = vrot.slane %v640, %v1265
        %v1267 = vlaneseq
        %v1268 = vshrl.u32 %v1267, 7
        %v1269 = vsub.s32 0, %v1268
        %v1270 = vrot.slane %v641, %v1269
        %v1271 = vlaneseq
        %v1272 = vshrl.u32 %v1271, 7
        %v1273 = vsub.s32 4, %v1272
        %v1274 = vrot.slane %v641, %v1273
        %v1275 = vlaneseq
        %v1276 = vshrl.u32 %v1275, 7
        %v1277 = vsub.s32 0, %v1276
        %v1278 = vrot.slane %v642, %v1277
        %v1279 = vlaneseq
        %v1280 = vshrl.u32 %v1279, 7
        %v1281 = vsub.s32 4, %v1280
        %v1282 = vrot.slane %v642, %v1281
        %vm1291 = vcmask 1040384
        %v1292 = vsel %vm1291, 0.2820948, %v650
        %v1293 = vsel %vm1291, 0.2820948, %v654
        %v1294 = vsel %vm1291, 0.2820948, %v658
        %v1295 = vsel %vm1291, 0.2820948, %v662
        %v1296 = vsel %vm1291, 0.2820948, %v666
        %v1297 = vsel %vm1291, 0.2820948, %v670
        %v1298 = vsel %vm1291, 0.2820948, %v674
        %v1299 = vsel %vm1291, 0.2820948, %v678
        %vm1300 = vcmask 1041408
        %v1301 = vsel %vm1300, %v1292, %v690
        %v1302 = vsel %vm1300, %v1293, %v694
        %v1303 = vsel %vm1300, %v1294, %v698
        %v1304 = vsel %vm1300, %v1295, %v702
        %v1305 = vsel %vm1300, %v1296, %v706
        %v1306 = vsel %vm1300, %v1297, %v710
        %v1307 = vsel %vm1300, %v1298, %v714
        %v1308 = vsel %vm1300, %v1299, %v718
        %vm1309 = vcmask 1042432
        %v1310 = vsel %vm1309, %v1301, %v730
        %v1311 = vsel %vm1309, %v1302, %v734
        %v1312 = vsel %vm1309, %v1303, %v738
        %v1313 = vsel %vm1309, %v1304, %v742
        %v1314 = vsel %vm1309, %v1305, %v746
        %v1315 = vsel %vm1309, %v1306, %v750
        %v1316 = vsel %vm1309, %v1307, %v754
        %v1317 = vsel %vm1309, %v1308, %v758
        %vm1318 = vcmask 1043456
        %v1319 = vsel %vm1318, %v1310, %v774
        %v1320 = vsel %vm1318, %v1311, %v778
        %v1321 = vsel %vm1318, %v1312, %v782
        %v1322 = vsel %vm1318, %v1313, %v786
        %v1323 = vsel %vm1318, %v1314, %v790
        %v1324 = vsel %vm1318, %v1315, %v794
        %v1325 = vsel %vm1318, %v1316, %v798
        %v1326 = vsel %vm1318, %v1317, %v802
        %vm1327 = vcmask 1044480
        %v1328 = vsel %vm1327, %v1319, %v814
        %v1329 = vsel %vm1327, %v1320, %v818
        %v1330 = vsel %vm1327, %v1321, %v822
        %v1331 = vsel %vm1327, %v1322, %v826
        %v1332 = vsel %vm1327, %v1323, %v830
        %v1333 = vsel %vm1327, %v1324, %v834
        %v1334 = vsel %vm1327, %v1325, %v838
        %v1335 = vsel %vm1327, %v1326, %v842
        %vm1336 = vcmask 1045504
        %v1337 = vsel %vm1336, %v1328, %v858
        %v1338 = vsel %vm1336, %v1329, %v862
        %v1339 = vsel %vm1336, %v1330, %v866
        %v1340 = vsel %vm1336, %v1331, %v870
        %v1341 = vsel %vm1336, %v1332, %v874
        %v1342 = vsel %vm1336, %v1333, %v878
        %v1343 = vsel %vm1336, %v1334, %v882
        %v1344 = vsel %vm1336, %v1335, %v886
        %vm1345 = vcmask 1046528
        %v1346 = vsel %vm1345, %v1337, %v902
        %v1347 = vsel %vm1345, %v1338, %v906
        %v1348 = vsel %vm1345, %v1339, %v910
        %v1349 = vsel %vm1345, %v1340, %v914
        %v1350 = vsel %vm1345, %v1341, %v918
        %v1351 = vsel %vm1345, %v1342, %v922
        %v1352 = vsel %vm1345, %v1343, %v926
        %v1353 = vsel %vm1345, %v1344, %v930
        %v1354 = vsel %vm1291, %v946, %v990
        %v1355 = vsel %vm1291, %v950, %v994
        %v1356 = vsel %vm1291, %v954, %v998
        %v1357 = vsel %vm1291, %v958, %v1002
        %v1358 = vsel %vm1291, %v962, %v1006
        %v1359 = vsel %vm1291, %v966, %v1010
        %v1360 = vsel %vm1291, %v970, %v1014
        %v1361 = vsel %vm1291, %v974, %v1018
        %v1362 = vsel %vm1300, %v1354, %v1034
        %v1363 = vsel %vm1300, %v1355, %v1038
        %v1364 = vsel %vm1300, %v1356, %v1042
        %v1365 = vsel %vm1300, %v1357, %v1046
        %v1366 = vsel %vm1300, %v1358, %v1050
        %v1367 = vsel %vm1300, %v1359, %v1054
        %v1368 = vsel %vm1300, %v1360, %v1058
        %v1369 = vsel %vm1300, %v1361, %v1062
        %v1370 = vsel %vm1309, %v1362, %v1078
        %v1371 = vsel %vm1309, %v1363, %v1082
        %v1372 = vsel %vm1309, %v1364, %v1086
        %v1373 = vsel %vm1309, %v1365, %v1090
        %v1374 = vsel %vm1309, %v1366, %v1094
        %v1375 = vsel %vm1309, %v1367, %v1098
        %v1376 = vsel %vm1309, %v1368, %v1102
        %v1377 = vsel %vm1309, %v1369, %v1106
        %v1378 = vsel %vm1318, %v1370, %v1122
        %v1379 = vsel %vm1318, %v1371, %v1126
        %v1380 = vsel %vm1318, %v1372, %v1130
        %v1381 = vsel %vm1318, %v1373, %v1134
        %v1382 = vsel %vm1318, %v1374, %v1138
        %v1383 = vsel %vm1318, %v1375, %v1142
        %v1384 = vsel %vm1318, %v1376, %v1146
        %v1385 = vsel %vm1318, %v1377, %v1150
        %v1386 = vsel %vm1327, %v1378, %v1166
        %v1387 = vsel %vm1327, %v1379, %v1170
        %v1388 = vsel %vm1327, %v1380, %v1174
        %v1389 = vsel %vm1327, %v1381, %v1178
        %v1390 = vsel %vm1327, %v1382, %v1182
        %v1391 = vsel %vm1327, %v1383, %v1186
        %v1392 = vsel %vm1327, %v1384, %v1190
        %v1393 = vsel %vm1327, %v1385, %v1194
        %v1394 = vsel %vm1336, %v1386, %v1210
        %v1395 = vsel %vm1336, %v1387, %v1214
        %v1396 = vsel %vm1336, %v1388, %v1218
        %v1397 = vsel %vm1336, %v1389, %v1222
        %v1398 = vsel %vm1336, %v1390, %v1226
        %v1399 = vsel %vm1336, %v1391, %v1230
        %v1400 = vsel %vm1336, %v1392, %v1234
        %v1401 = vsel %vm1336, %v1393, %v1238
        %v1402 = vsel %vm1345, %v1394, %v1254
        %v1403 = vsel %vm1345, %v1395, %v1258
        %v1404 = vsel %vm1345, %v1396, %v1262
        %v1405 = vsel %vm1345, %v1397, %v1266
        %v1406 = vsel %vm1345, %v1398, %v1270
        %v1407 = vsel %vm1345, %v1399, %v1274
        %v1408 = vsel %vm1345, %v1400, %v1278
        %v1409 = vsel %vm1345, %v1401, %v1282
        %v1410 = vld [vmem:[%s1] sm:$0xff]
        %v1411 = vld [vmem:[%s1 + $0x8] sm:$0xff]
        %v1412 = vld [vmem:[%s1 + $0x10] sm:$0xff]
        %v1413 = vld [vmem:[%s1 + $0x18] sm:$0xff]
        %v1414 = vld [vmem:[%s2] sm:$0xff]
        %v1415 = vld [vmem:[%s2 + $0x8] sm:$0xff]
        %v1416 = vld [vmem:[%s2 + $0x10] sm:$0xff]
        %v1417 = vld [vmem:[%s2 + $0x18] sm:$0xff]
        %1419 = vset.pattern.permute.xlu0 0
        %1420 = vperm.xlu0 %1419, %v1414
        %v1421 = vpop.permute.xlu0 %1420
        %1424 = vset.pattern.permute.xlu0 0
        %1425 = vperm.xlu0 %1424, %v1415
        %v1426 = vpop.permute.xlu0 %1425
        %1429 = vset.pattern.permute.xlu0 0
        %1430 = vperm.xlu0 %1429, %v1416
        %v1431 = vpop.permute.xlu0 %1430
        %1434 = vset.pattern.permute.xlu0 0
        %1435 = vperm.xlu0 %1434, %v1417
        %v1436 = vpop.permute.xlu0 %1435
        %vm1438 = vcmask 130048
        %v1440 = vsel %vm1438, %v1410, 0
        %v1443 = vsel %vm1438, %v1411, 0
        %v1446 = vsel %vm1438, %v1412, 0
        %v1449 = vsel %vm1438, %v1413, 0
        %1451 = vmatprep.subr.mxu0 %v1347
        %1452 = vmatpush1.msra.mxu0 %v1346
        %1453 = vmatprep.subr.mxu0 %v1403
        %1454 = vmatpush1.msra.mxu0 %v1402
        %1455 = vmatprep.subr.mxu0 0.0
        %1456 = vmatpush1.msra.mxu0 0.0
        %1457 = vmatprep.subr.mxu0 0.0
        %1458 = vmatpush1.msra.mxu0 0.0
        %1459 = vmatprep.subr.mxu0 0.0
        %1460 = vmatpush1.msra.mxu0 0.0
        %1461 = vmatprep.subr.mxu0 0.0
        %1462 = vmatpush1.msra.mxu0 0.0
        %1463 = vmatprep.subr.mxu0 0.0
        %1464 = vmatpush1.msra.mxu0 0.0
        %1465 = vmatprep.subr.mxu0 0.0
        %1466 = vmatpush1.msra.mxu0 0.0
        %1467 = vmatprep.subr.mxu0 0.0
        %1468 = vmatpush1.msra.mxu0 0.0
        %1469 = vmatprep.subr.mxu0 0.0
        %1470 = vmatpush1.msra.mxu0 0.0
        %1471 = vmatprep.subr.mxu0 0.0
        %1472 = vmatpush1.msra.mxu0 0.0
        %1473 = vmatprep.subr.mxu0 0.0
        %1474 = vmatpush1.msra.mxu0 0.0
        %1475 = vmatprep.subr.mxu0 0.0
        %1476 = vmatpush1.msra.mxu0 0.0
        %1477 = vmatprep.subr.mxu0 0.0
        %1478 = vmatpush1.msra.mxu0 0.0
        %1479 = vmatprep.subr.mxu0 0.0
        %1480 = vmatpush1.msra.mxu0 0.0
        %1481 = vmatprep.subr.mxu0 0.0
        %1482 = vmatpush1.msra.mxu0 0.0
        %1483 = vmatprep.subr.mxu0 0.0
        %1484 = vmatpush1.msra.mxu0 0.0
        %1485 = vmatprep.subr.mxu0 0.0
        %1486 = vmatpush1.msra.mxu0 0.0
        %1487 = vmatprep.subr.mxu0 0.0
        %1488 = vmatpush1.msra.mxu0 0.0
        %1489 = vmatprep.subr.mxu0 0.0
        %1490 = vmatpush1.msra.mxu0 0.0
        %1491 = vmatprep.subr.mxu0 0.0
        %1492 = vmatpush1.msra.mxu0 0.0
        %1493 = vmatprep.subr.mxu0 0.0
        %1494 = vmatpush1.msra.mxu0 0.0
        %1495 = vmatprep.subr.mxu0 0.0
        %1496 = vmatpush1.msra.mxu0 0.0
        %1497 = vmatprep.subr.mxu0 0.0
        %1498 = vmatpush1.msra.mxu0 0.0
        %1499 = vmatprep.subr.mxu0 0.0
        %1500 = vmatpush1.msra.mxu0 0.0
        %1501 = vmatprep.subr.mxu0 0.0
        %1502 = vmatpush1.msra.mxu0 0.0
        %1503 = vmatprep.subr.mxu0 0.0
        %1504 = vmatpush1.msra.mxu0 0.0
        %1505 = vmatprep.subr.mxu0 0.0
        %1506 = vmatpush1.msra.mxu0 0.0
        %1507 = vmatprep.subr.mxu0 0.0
        %1508 = vmatpush1.msra.mxu0 0.0
        %1509 = vmatprep.subr.mxu0 0.0
        %1510 = vmatpush1.msra.mxu0 0.0
        %1511 = vmatprep.subr.mxu0 0.0
        %1512 = vmatpush1.msra.mxu0 0.0
        %1513 = vmatprep.subr.mxu0 0.0
        %1514 = vmatpush1.msra.mxu0 0.0
        %1515 = vmatprep.mubr.f32.mxu0 0.0
        %1516 = vmatmul.mubr.f32.gmra.mrb[0].mxu0 %v1440
        %v1517 = vpop.f32.mrb[0].mxu0
        %v1518 = vadd.f32 %v1421, %v1517
        %v1519 = vpop.f32.mrb[0].mxu0
        %v1520 = vadd.f32 %v1421, %v1519
        %1521 = vmatprep.mubr.f32.mxu0 0.0
        %1522 = vmatmul.mubr.f32.gmra.mrb[0].mxu0 %v1443
        %v1523 = vpop.f32.mrb[0].mxu0
        %v1524 = vadd.f32 %v1426, %v1523
        %v1525 = vpop.f32.mrb[0].mxu0
        %v1526 = vadd.f32 %v1426, %v1525
        %1527 = vmatprep.mubr.f32.mxu0 0.0
        %1528 = vmatmul.mubr.f32.gmra.mrb[0].mxu0 %v1446
        %v1529 = vpop.f32.mrb[0].mxu0
        %v1530 = vadd.f32 %v1431, %v1529
        %v1531 = vpop.f32.mrb[0].mxu0
        %v1532 = vadd.f32 %v1431, %v1531
        %1533 = vmatprep.mubr.f32.mxu0 0.0
        %1534 = vmatmul.mubr.f32.gmra.mrb[0].mxu0 %v1449
        %v1535 = vpop.f32.mrb[0].mxu0
        %v1536 = vadd.f32 %v1436, %v1535
        %v1537 = vpop.f32.mrb[0].mxu0
        %v1538 = vadd.f32 %v1436, %v1537
        %1539 = vdwg.mxu0
        %1540 = vmatprep.subr.mxu0 %v1349
        %1541 = vmatpush1.msra.mxu0 %v1348
        %1542 = vmatprep.subr.mxu0 %v1405
        %1543 = vmatpush1.msra.mxu0 %v1404
        %1544 = vmatprep.subr.mxu0 0.0
        %1545 = vmatpush1.msra.mxu0 0.0
        %1546 = vmatprep.subr.mxu0 0.0
        %1547 = vmatpush1.msra.mxu0 0.0
        %1548 = vmatprep.subr.mxu0 0.0
        %1549 = vmatpush1.msra.mxu0 0.0
        %1550 = vmatprep.subr.mxu0 0.0
        %1551 = vmatpush1.msra.mxu0 0.0
        %1552 = vmatprep.subr.mxu0 0.0
        %1553 = vmatpush1.msra.mxu0 0.0
        %1554 = vmatprep.subr.mxu0 0.0
        %1555 = vmatpush1.msra.mxu0 0.0
        %1556 = vmatprep.subr.mxu0 0.0
        %1557 = vmatpush1.msra.mxu0 0.0
        %1558 = vmatprep.subr.mxu0 0.0
        %1559 = vmatpush1.msra.mxu0 0.0
        %1560 = vmatprep.subr.mxu0 0.0
        %1561 = vmatpush1.msra.mxu0 0.0
        %1562 = vmatprep.subr.mxu0 0.0
        %1563 = vmatpush1.msra.mxu0 0.0
        %1564 = vmatprep.subr.mxu0 0.0
        %1565 = vmatpush1.msra.mxu0 0.0
        %1566 = vmatprep.subr.mxu0 0.0
        %1567 = vmatpush1.msra.mxu0 0.0
        %1568 = vmatprep.subr.mxu0 0.0
        %1569 = vmatpush1.msra.mxu0 0.0
        %1570 = vmatprep.subr.mxu0 0.0
        %1571 = vmatpush1.msra.mxu0 0.0
        %1572 = vmatprep.subr.mxu0 0.0
        %1573 = vmatpush1.msra.mxu0 0.0
        %1574 = vmatprep.subr.mxu0 0.0
        %1575 = vmatpush1.msra.mxu0 0.0
        %1576 = vmatprep.subr.mxu0 0.0
        %1577 = vmatpush1.msra.mxu0 0.0
        %1578 = vmatprep.subr.mxu0 0.0
        %1579 = vmatpush1.msra.mxu0 0.0
        %1580 = vmatprep.subr.mxu0 0.0
        %1581 = vmatpush1.msra.mxu0 0.0
        %1582 = vmatprep.subr.mxu0 0.0
        %1583 = vmatpush1.msra.mxu0 0.0
        %1584 = vmatprep.subr.mxu0 0.0
        %1585 = vmatpush1.msra.mxu0 0.0
        %1586 = vmatprep.subr.mxu0 0.0
        %1587 = vmatpush1.msra.mxu0 0.0
        %1588 = vmatprep.subr.mxu0 0.0
        %1589 = vmatpush1.msra.mxu0 0.0
        %1590 = vmatprep.subr.mxu0 0.0
        %1591 = vmatpush1.msra.mxu0 0.0
        %1592 = vmatprep.subr.mxu0 0.0
        %1593 = vmatpush1.msra.mxu0 0.0
        %1594 = vmatprep.subr.mxu0 0.0
        %1595 = vmatpush1.msra.mxu0 0.0
        %1596 = vmatprep.subr.mxu0 0.0
        %1597 = vmatpush1.msra.mxu0 0.0
        %1598 = vmatprep.subr.mxu0 0.0
        %1599 = vmatpush1.msra.mxu0 0.0
        %1600 = vmatprep.subr.mxu0 0.0
        %1601 = vmatpush1.msra.mxu0 0.0
        %1602 = vmatprep.subr.mxu0 0.0
        %1603 = vmatpush1.msra.mxu0 0.0
        %1604 = vmatprep.mubr.f32.mxu0 0.0
        %1605 = vmatmul.mubr.f32.gmra.mrb[0].mxu0 %v1440
        %v1606 = vpop.f32.mrb[0].mxu0
        %v1607 = vadd.f32 %v1421, %v1606
        %v1608 = vpop.f32.mrb[0].mxu0
        %v1609 = vadd.f32 %v1421, %v1608
        %1610 = vmatprep.mubr.f32.mxu0 0.0
        %1611 = vmatmul.mubr.f32.gmra.mrb[0].mxu0 %v1443
        %v1612 = vpop.f32.mrb[0].mxu0
        %v1613 = vadd.f32 %v1426, %v1612
        %v1614 = vpop.f32.mrb[0].mxu0
        %v1615 = vadd.f32 %v1426, %v1614
        %1616 = vmatprep.mubr.f32.mxu0 0.0
        %1617 = vmatmul.mubr.f32.gmra.mrb[0].mxu0 %v1446
        %v1618 = vpop.f32.mrb[0].mxu0
        %v1619 = vadd.f32 %v1431, %v1618
        %v1620 = vpop.f32.mrb[0].mxu0
        %v1621 = vadd.f32 %v1431, %v1620
        %1622 = vmatprep.mubr.f32.mxu0 0.0
        %1623 = vmatmul.mubr.f32.gmra.mrb[0].mxu0 %v1449
        %v1624 = vpop.f32.mrb[0].mxu0
        %v1625 = vadd.f32 %v1436, %v1624
        %v1626 = vpop.f32.mrb[0].mxu0
        %v1627 = vadd.f32 %v1436, %v1626
        %1628 = vdwg.mxu0
        %1629 = vmatprep.subr.mxu0 %v1351
        %1630 = vmatpush1.msra.mxu0 %v1350
        %1631 = vmatprep.subr.mxu0 %v1407
        %1632 = vmatpush1.msra.mxu0 %v1406
        %1633 = vmatprep.subr.mxu0 0.0
        %1634 = vmatpush1.msra.mxu0 0.0
        %1635 = vmatprep.subr.mxu0 0.0
        %1636 = vmatpush1.msra.mxu0 0.0
        %1637 = vmatprep.subr.mxu0 0.0
        %1638 = vmatpush1.msra.mxu0 0.0
        %1639 = vmatprep.subr.mxu0 0.0
        %1640 = vmatpush1.msra.mxu0 0.0
        %1641 = vmatprep.subr.mxu0 0.0
        %1642 = vmatpush1.msra.mxu0 0.0
        %1643 = vmatprep.subr.mxu0 0.0
        %1644 = vmatpush1.msra.mxu0 0.0
        %1645 = vmatprep.subr.mxu0 0.0
        %1646 = vmatpush1.msra.mxu0 0.0
        %1647 = vmatprep.subr.mxu0 0.0
        %1648 = vmatpush1.msra.mxu0 0.0
        %1649 = vmatprep.subr.mxu0 0.0
        %1650 = vmatpush1.msra.mxu0 0.0
        %1651 = vmatprep.subr.mxu0 0.0
        %1652 = vmatpush1.msra.mxu0 0.0
        %1653 = vmatprep.subr.mxu0 0.0
        %1654 = vmatpush1.msra.mxu0 0.0
        %1655 = vmatprep.subr.mxu0 0.0
        %1656 = vmatpush1.msra.mxu0 0.0
        %1657 = vmatprep.subr.mxu0 0.0
        %1658 = vmatpush1.msra.mxu0 0.0
        %1659 = vmatprep.subr.mxu0 0.0
        %1660 = vmatpush1.msra.mxu0 0.0
        %1661 = vmatprep.subr.mxu0 0.0
        %1662 = vmatpush1.msra.mxu0 0.0
        %1663 = vmatprep.subr.mxu0 0.0
        %1664 = vmatpush1.msra.mxu0 0.0
        %1665 = vmatprep.subr.mxu0 0.0
        %1666 = vmatpush1.msra.mxu0 0.0
        %1667 = vmatprep.subr.mxu0 0.0
        %1668 = vmatpush1.msra.mxu0 0.0
        %1669 = vmatprep.subr.mxu0 0.0
        %1670 = vmatpush1.msra.mxu0 0.0
        %1671 = vmatprep.subr.mxu0 0.0
        %1672 = vmatpush1.msra.mxu0 0.0
        %1673 = vmatprep.subr.mxu0 0.0
        %1674 = vmatpush1.msra.mxu0 0.0
        %1675 = vmatprep.subr.mxu0 0.0
        %1676 = vmatpush1.msra.mxu0 0.0
        %1677 = vmatprep.subr.mxu0 0.0
        %1678 = vmatpush1.msra.mxu0 0.0
        %1679 = vmatprep.subr.mxu0 0.0
        %1680 = vmatpush1.msra.mxu0 0.0
        %1681 = vmatprep.subr.mxu0 0.0
        %1682 = vmatpush1.msra.mxu0 0.0
        %1683 = vmatprep.subr.mxu0 0.0
        %1684 = vmatpush1.msra.mxu0 0.0
        %1685 = vmatprep.subr.mxu0 0.0
        %1686 = vmatpush1.msra.mxu0 0.0
        %1687 = vmatprep.subr.mxu0 0.0
        %1688 = vmatpush1.msra.mxu0 0.0
        %1689 = vmatprep.subr.mxu0 0.0
        %1690 = vmatpush1.msra.mxu0 0.0
        %1691 = vmatprep.subr.mxu0 0.0
        %1692 = vmatpush1.msra.mxu0 0.0
        %1693 = vmatprep.mubr.f32.mxu0 0.0
        %1694 = vmatmul.mubr.f32.gmra.mrb[0].mxu0 %v1440
        %v1695 = vpop.f32.mrb[0].mxu0
        %v1696 = vadd.f32 %v1421, %v1695
        %v1697 = vpop.f32.mrb[0].mxu0
        %v1698 = vadd.f32 %v1421, %v1697
        %1699 = vmatprep.mubr.f32.mxu0 0.0
        %1700 = vmatmul.mubr.f32.gmra.mrb[0].mxu0 %v1443
        %v1701 = vpop.f32.mrb[0].mxu0
        %v1702 = vadd.f32 %v1426, %v1701
        %v1703 = vpop.f32.mrb[0].mxu0
        %v1704 = vadd.f32 %v1426, %v1703
        %1705 = vmatprep.mubr.f32.mxu0 0.0
        %1706 = vmatmul.mubr.f32.gmra.mrb[0].mxu0 %v1446
        %v1707 = vpop.f32.mrb[0].mxu0
        %v1708 = vadd.f32 %v1431, %v1707
        %v1709 = vpop.f32.mrb[0].mxu0
        %v1710 = vadd.f32 %v1431, %v1709
        %1711 = vmatprep.mubr.f32.mxu0 0.0
        %1712 = vmatmul.mubr.f32.gmra.mrb[0].mxu0 %v1449
        %v1713 = vpop.f32.mrb[0].mxu0
        %v1714 = vadd.f32 %v1436, %v1713
        %v1715 = vpop.f32.mrb[0].mxu0
        %v1716 = vadd.f32 %v1436, %v1715
        %1717 = vdwg.mxu0
        %1718 = vmatprep.subr.mxu0 %v1353
        %1719 = vmatpush1.msra.mxu0 %v1352
        %1720 = vmatprep.subr.mxu0 %v1409
        %1721 = vmatpush1.msra.mxu0 %v1408
        %1722 = vmatprep.subr.mxu0 0.0
        %1723 = vmatpush1.msra.mxu0 0.0
        %1724 = vmatprep.subr.mxu0 0.0
        %1725 = vmatpush1.msra.mxu0 0.0
        %1726 = vmatprep.subr.mxu0 0.0
        %1727 = vmatpush1.msra.mxu0 0.0
        %1728 = vmatprep.subr.mxu0 0.0
        %1729 = vmatpush1.msra.mxu0 0.0
        %1730 = vmatprep.subr.mxu0 0.0
        %1731 = vmatpush1.msra.mxu0 0.0
        %1732 = vmatprep.subr.mxu0 0.0
        %1733 = vmatpush1.msra.mxu0 0.0
        %1734 = vmatprep.subr.mxu0 0.0
        %1735 = vmatpush1.msra.mxu0 0.0
        %1736 = vmatprep.subr.mxu0 0.0
        %1737 = vmatpush1.msra.mxu0 0.0
        %1738 = vmatprep.subr.mxu0 0.0
        %1739 = vmatpush1.msra.mxu0 0.0
        %1740 = vmatprep.subr.mxu0 0.0
        %1741 = vmatpush1.msra.mxu0 0.0
        %1742 = vmatprep.subr.mxu0 0.0
        %1743 = vmatpush1.msra.mxu0 0.0
        %1744 = vmatprep.subr.mxu0 0.0
        %1745 = vmatpush1.msra.mxu0 0.0
        %1746 = vmatprep.subr.mxu0 0.0
        %1747 = vmatpush1.msra.mxu0 0.0
        %1748 = vmatprep.subr.mxu0 0.0
        %1749 = vmatpush1.msra.mxu0 0.0
        %1750 = vmatprep.subr.mxu0 0.0
        %1751 = vmatpush1.msra.mxu0 0.0
        %1752 = vmatprep.subr.mxu0 0.0
        %1753 = vmatpush1.msra.mxu0 0.0
        %1754 = vmatprep.subr.mxu0 0.0
        %1755 = vmatpush1.msra.mxu0 0.0
        %1756 = vmatprep.subr.mxu0 0.0
        %1757 = vmatpush1.msra.mxu0 0.0
        %1758 = vmatprep.subr.mxu0 0.0
        %1759 = vmatpush1.msra.mxu0 0.0
        %1760 = vmatprep.subr.mxu0 0.0
        %1761 = vmatpush1.msra.mxu0 0.0
        %1762 = vmatprep.subr.mxu0 0.0
        %1763 = vmatpush1.msra.mxu0 0.0
        %1764 = vmatprep.subr.mxu0 0.0
        %1765 = vmatpush1.msra.mxu0 0.0
        %1766 = vmatprep.subr.mxu0 0.0
        %1767 = vmatpush1.msra.mxu0 0.0
        %1768 = vmatprep.subr.mxu0 0.0
        %1769 = vmatpush1.msra.mxu0 0.0
        %1770 = vmatprep.subr.mxu0 0.0
        %1771 = vmatpush1.msra.mxu0 0.0
        %1772 = vmatprep.subr.mxu0 0.0
        %1773 = vmatpush1.msra.mxu0 0.0
        %1774 = vmatprep.subr.mxu0 0.0
        %1775 = vmatpush1.msra.mxu0 0.0
        %1776 = vmatprep.subr.mxu0 0.0
        %1777 = vmatpush1.msra.mxu0 0.0
        %1778 = vmatprep.subr.mxu0 0.0
        %1779 = vmatpush1.msra.mxu0 0.0
        %1780 = vmatprep.subr.mxu0 0.0
        %1781 = vmatpush1.msra.mxu0 0.0
        %1782 = vmatprep.mubr.f32.mxu0 0.0
        %1783 = vmatmul.mubr.f32.gmra.mrb[0].mxu0 %v1440
        %v1784 = vpop.f32.mrb[0].mxu0
        %v1785 = vadd.f32 %v1421, %v1784
        %v1786 = vpop.f32.mrb[0].mxu0
        %v1787 = vadd.f32 %v1421, %v1786
        %1788 = vmatprep.mubr.f32.mxu0 0.0
        %1789 = vmatmul.mubr.f32.gmra.mrb[0].mxu0 %v1443
        %v1790 = vpop.f32.mrb[0].mxu0
        %v1791 = vadd.f32 %v1426, %v1790
        %v1792 = vpop.f32.mrb[0].mxu0
        %v1793 = vadd.f32 %v1426, %v1792
        %1794 = vmatprep.mubr.f32.mxu0 0.0
        %1795 = vmatmul.mubr.f32.gmra.mrb[0].mxu0 %v1446
        %v1796 = vpop.f32.mrb[0].mxu0
        %v1797 = vadd.f32 %v1431, %v1796
        %v1798 = vpop.f32.mrb[0].mxu0
        %v1799 = vadd.f32 %v1431, %v1798
        %1800 = vmatprep.mubr.f32.mxu0 0.0
        %1801 = vmatmul.mubr.f32.gmra.mrb[0].mxu0 %v1449
        %v1802 = vpop.f32.mrb[0].mxu0
        %v1803 = vadd.f32 %v1436, %v1802
        %v1804 = vpop.f32.mrb[0].mxu0
        %v1805 = vadd.f32 %v1436, %v1804
        %1806 = vdwg.mxu0
        %v1807 = vmax.f32 %v1518, 0.0
        %v1808 = vmax.f32 %v1520, 0.0
        %v1809 = vmax.f32 %v1607, 0.0
        %v1810 = vmax.f32 %v1609, 0.0
        %v1811 = vmax.f32 %v1696, 0.0
        %v1812 = vmax.f32 %v1698, 0.0
        %v1813 = vmax.f32 %v1785, 0.0
        %v1814 = vmax.f32 %v1787, 0.0
        %v1815 = vmax.f32 %v1524, 0.0
        %v1816 = vmax.f32 %v1526, 0.0
        %v1817 = vmax.f32 %v1613, 0.0
        %v1818 = vmax.f32 %v1615, 0.0
        %v1819 = vmax.f32 %v1702, 0.0
        %v1820 = vmax.f32 %v1704, 0.0
        %v1821 = vmax.f32 %v1791, 0.0
        %v1822 = vmax.f32 %v1793, 0.0
        %v1823 = vmax.f32 %v1530, 0.0
        %v1824 = vmax.f32 %v1532, 0.0
        %v1825 = vmax.f32 %v1619, 0.0
        %v1826 = vmax.f32 %v1621, 0.0
        %v1827 = vmax.f32 %v1708, 0.0
        %v1828 = vmax.f32 %v1710, 0.0
        %v1829 = vmax.f32 %v1797, 0.0
        %v1830 = vmax.f32 %v1799, 0.0
        %v1831 = vmax.f32 %v1536, 0.0
        %v1832 = vmax.f32 %v1538, 0.0
        %v1833 = vmax.f32 %v1625, 0.0
        %v1834 = vmax.f32 %v1627, 0.0
        %v1835 = vmax.f32 %v1714, 0.0
        %v1836 = vmax.f32 %v1716, 0.0
        %v1837 = vmax.f32 %v1803, 0.0
        %v1838 = vmax.f32 %v1805, 0.0
        %v1839 = vld [vmem:[%s3] sm:$0xff]
        %v1840 = vld [vmem:[%s3 + $0x8] sm:$0xff]
        %v1841 = vld [vmem:[%s3 + $0x10] sm:$0xff]
        %v1842 = vld [vmem:[%s3 + $0x18] sm:$0xff]
        %v1843 = vld [vmem:[%s4] sm:$0xff]
        %v1844 = vld [vmem:[%s4 + $0x8] sm:$0xff]
        %v1845 = vld [vmem:[%s4 + $0x10] sm:$0xff]
        %v1846 = vld [vmem:[%s4 + $0x18] sm:$0xff]
        %1848 = vset.pattern.permute.xlu0 0
        %1849 = vperm.xlu0 %1848, %v1843
        %v1850 = vpop.permute.xlu0 %1849
        %1853 = vset.pattern.permute.xlu0 0
        %1854 = vperm.xlu0 %1853, %v1844
        %v1855 = vpop.permute.xlu0 %1854
        %1858 = vset.pattern.permute.xlu0 0
        %1859 = vperm.xlu0 %1858, %v1845
        %v1860 = vpop.permute.xlu0 %1859
        %1863 = vset.pattern.permute.xlu0 0
        %1864 = vperm.xlu0 %1863, %v1846
        %v1865 = vpop.permute.xlu0 %1864
        %vm1867 = vcmask 261120
        %v1869 = vsel %vm1867, %v1839, 0
        %v1872 = vsel %vm1867, %v1840, 0
        %v1875 = vsel %vm1867, %v1841, 0
        %v1878 = vsel %vm1867, %v1842, 0
        %1880 = vmatprep.subr.mxu0 %v1808
        %1881 = vmatpush1.msra.mxu0 %v1807
        %1882 = vmatprep.subr.mxu0 %v1816
        %1883 = vmatpush1.msra.mxu0 %v1815
        %1884 = vmatprep.subr.mxu0 %v1824
        %1885 = vmatpush1.msra.mxu0 %v1823
        %1886 = vmatprep.subr.mxu0 %v1832
        %1887 = vmatpush1.msra.mxu0 %v1831
        %1888 = vmatprep.subr.mxu0 0.0
        %1889 = vmatpush1.msra.mxu0 0.0
        %1890 = vmatprep.subr.mxu0 0.0
        %1891 = vmatpush1.msra.mxu0 0.0
        %1892 = vmatprep.subr.mxu0 0.0
        %1893 = vmatpush1.msra.mxu0 0.0
        %1894 = vmatprep.subr.mxu0 0.0
        %1895 = vmatpush1.msra.mxu0 0.0
        %1896 = vmatprep.subr.mxu0 0.0
        %1897 = vmatpush1.msra.mxu0 0.0
        %1898 = vmatprep.subr.mxu0 0.0
        %1899 = vmatpush1.msra.mxu0 0.0
        %1900 = vmatprep.subr.mxu0 0.0
        %1901 = vmatpush1.msra.mxu0 0.0
        %1902 = vmatprep.subr.mxu0 0.0
        %1903 = vmatpush1.msra.mxu0 0.0
        %1904 = vmatprep.subr.mxu0 0.0
        %1905 = vmatpush1.msra.mxu0 0.0
        %1906 = vmatprep.subr.mxu0 0.0
        %1907 = vmatpush1.msra.mxu0 0.0
        %1908 = vmatprep.subr.mxu0 0.0
        %1909 = vmatpush1.msra.mxu0 0.0
        %1910 = vmatprep.subr.mxu0 0.0
        %1911 = vmatpush1.msra.mxu0 0.0
        %1912 = vmatprep.subr.mxu0 0.0
        %1913 = vmatpush1.msra.mxu0 0.0
        %1914 = vmatprep.subr.mxu0 0.0
        %1915 = vmatpush1.msra.mxu0 0.0
        %1916 = vmatprep.subr.mxu0 0.0
        %1917 = vmatpush1.msra.mxu0 0.0
        %1918 = vmatprep.subr.mxu0 0.0
        %1919 = vmatpush1.msra.mxu0 0.0
        %1920 = vmatprep.subr.mxu0 0.0
        %1921 = vmatpush1.msra.mxu0 0.0
        %1922 = vmatprep.subr.mxu0 0.0
        %1923 = vmatpush1.msra.mxu0 0.0
        %1924 = vmatprep.subr.mxu0 0.0
        %1925 = vmatpush1.msra.mxu0 0.0
        %1926 = vmatprep.subr.mxu0 0.0
        %1927 = vmatpush1.msra.mxu0 0.0
        %1928 = vmatprep.subr.mxu0 0.0
        %1929 = vmatpush1.msra.mxu0 0.0
        %1930 = vmatprep.subr.mxu0 0.0
        %1931 = vmatpush1.msra.mxu0 0.0
        %1932 = vmatprep.subr.mxu0 0.0
        %1933 = vmatpush1.msra.mxu0 0.0
        %1934 = vmatprep.subr.mxu0 0.0
        %1935 = vmatpush1.msra.mxu0 0.0
        %1936 = vmatprep.subr.mxu0 0.0
        %1937 = vmatpush1.msra.mxu0 0.0
        %1938 = vmatprep.subr.mxu0 0.0
        %1939 = vmatpush1.msra.mxu0 0.0
        %1940 = vmatprep.subr.mxu0 0.0
        %1941 = vmatpush1.msra.mxu0 0.0
        %1942 = vmatprep.subr.mxu0 0.0
        %1943 = vmatpush1.msra.mxu0 0.0
        %1944 = vmatprep.mubr.f32.mxu0 0.0
        %1945 = vmatmul.mubr.f32.gmra.mrb[0].mxu0 %v1869
        %v1946 = vpop.f32.mrb[0].mxu0
        %v1947 = vadd.f32 %v1850, %v1946
        %v1948 = vpop.f32.mrb[0].mxu0
        %v1949 = vadd.f32 %v1850, %v1948
        %1950 = vmatprep.mubr.f32.mxu0 0.0
        %1951 = vmatmul.mubr.f32.gmra.mrb[0].mxu0 %v1872
        %v1952 = vpop.f32.mrb[0].mxu0
        %v1953 = vadd.f32 %v1855, %v1952
        %v1954 = vpop.f32.mrb[0].mxu0
        %v1955 = vadd.f32 %v1855, %v1954
        %1956 = vmatprep.mubr.f32.mxu0 0.0
        %1957 = vmatmul.mubr.f32.gmra.mrb[0].mxu0 %v1875
        %v1958 = vpop.f32.mrb[0].mxu0
        %v1959 = vadd.f32 %v1860, %v1958
        %v1960 = vpop.f32.mrb[0].mxu0
        %v1961 = vadd.f32 %v1860, %v1960
        %1962 = vmatprep.mubr.f32.mxu0 0.0
        %1963 = vmatmul.mubr.f32.gmra.mrb[0].mxu0 %v1878
        %v1964 = vpop.f32.mrb[0].mxu0
        %v1965 = vadd.f32 %v1865, %v1964
        %v1966 = vpop.f32.mrb[0].mxu0
        %v1967 = vadd.f32 %v1865, %v1966
        %1968 = vdwg.mxu0
        %1969 = vmatprep.subr.mxu0 %v1810
        %1970 = vmatpush1.msra.mxu0 %v1809
        %1971 = vmatprep.subr.mxu0 %v1818
        %1972 = vmatpush1.msra.mxu0 %v1817
        %1973 = vmatprep.subr.mxu0 %v1826
        %1974 = vmatpush1.msra.mxu0 %v1825
        %1975 = vmatprep.subr.mxu0 %v1834
        %1976 = vmatpush1.msra.mxu0 %v1833
        %1977 = vmatprep.subr.mxu0 0.0
        %1978 = vmatpush1.msra.mxu0 0.0
        %1979 = vmatprep.subr.mxu0 0.0
        %1980 = vmatpush1.msra.mxu0 0.0
        %1981 = vmatprep.subr.mxu0 0.0
        %1982 = vmatpush1.msra.mxu0 0.0
        %1983 = vmatprep.subr.mxu0 0.0
        %1984 = vmatpush1.msra.mxu0 0.0
        %1985 = vmatprep.subr.mxu0 0.0
        %1986 = vmatpush1.msra.mxu0 0.0
        %1987 = vmatprep.subr.mxu0 0.0
        %1988 = vmatpush1.msra.mxu0 0.0
        %1989 = vmatprep.subr.mxu0 0.0
        %1990 = vmatpush1.msra.mxu0 0.0
        %1991 = vmatprep.subr.mxu0 0.0
        %1992 = vmatpush1.msra.mxu0 0.0
        %1993 = vmatprep.subr.mxu0 0.0
        %1994 = vmatpush1.msra.mxu0 0.0
        %1995 = vmatprep.subr.mxu0 0.0
        %1996 = vmatpush1.msra.mxu0 0.0
        %1997 = vmatprep.subr.mxu0 0.0
        %1998 = vmatpush1.msra.mxu0 0.0
        %1999 = vmatprep.subr.mxu0 0.0
        %2000 = vmatpush1.msra.mxu0 0.0
        %2001 = vmatprep.subr.mxu0 0.0
        %2002 = vmatpush1.msra.mxu0 0.0
        %2003 = vmatprep.subr.mxu0 0.0
        %2004 = vmatpush1.msra.mxu0 0.0
        %2005 = vmatprep.subr.mxu0 0.0
        %2006 = vmatpush1.msra.mxu0 0.0
        %2007 = vmatprep.subr.mxu0 0.0
        %2008 = vmatpush1.msra.mxu0 0.0
        %2009 = vmatprep.subr.mxu0 0.0
        %2010 = vmatpush1.msra.mxu0 0.0
        %2011 = vmatprep.subr.mxu0 0.0
        %2012 = vmatpush1.msra.mxu0 0.0
        %2013 = vmatprep.subr.mxu0 0.0
        %2014 = vmatpush1.msra.mxu0 0.0
        %2015 = vmatprep.subr.mxu0 0.0
        %2016 = vmatpush1.msra.mxu0 0.0
        %2017 = vmatprep.subr.mxu0 0.0
        %2018 = vmatpush1.msra.mxu0 0.0
        %2019 = vmatprep.subr.mxu0 0.0
        %2020 = vmatpush1.msra.mxu0 0.0
        %2021 = vmatprep.subr.mxu0 0.0
        %2022 = vmatpush1.msra.mxu0 0.0
        %2023 = vmatprep.subr.mxu0 0.0
        %2024 = vmatpush1.msra.mxu0 0.0
        %2025 = vmatprep.subr.mxu0 0.0
        %2026 = vmatpush1.msra.mxu0 0.0
        %2027 = vmatprep.subr.mxu0 0.0
        %2028 = vmatpush1.msra.mxu0 0.0
        %2029 = vmatprep.subr.mxu0 0.0
        %2030 = vmatpush1.msra.mxu0 0.0
        %2031 = vmatprep.subr.mxu0 0.0
        %2032 = vmatpush1.msra.mxu0 0.0
        %2033 = vmatprep.mubr.f32.mxu0 0.0
        %2034 = vmatmul.mubr.f32.gmra.mrb[0].mxu0 %v1869
        %v2035 = vpop.f32.mrb[0].mxu0
        %v2036 = vadd.f32 %v1850, %v2035
        %v2037 = vpop.f32.mrb[0].mxu0
        %v2038 = vadd.f32 %v1850, %v2037
        %2039 = vmatprep.mubr.f32.mxu0 0.0
        %2040 = vmatmul.mubr.f32.gmra.mrb[0].mxu0 %v1872
        %v2041 = vpop.f32.mrb[0].mxu0
        %v2042 = vadd.f32 %v1855, %v2041
        %v2043 = vpop.f32.mrb[0].mxu0
        %v2044 = vadd.f32 %v1855, %v2043
        %2045 = vmatprep.mubr.f32.mxu0 0.0
        %2046 = vmatmul.mubr.f32.gmra.mrb[0].mxu0 %v1875
        %v2047 = vpop.f32.mrb[0].mxu0
        %v2048 = vadd.f32 %v1860, %v2047
        %v2049 = vpop.f32.mrb[0].mxu0
        %v2050 = vadd.f32 %v1860, %v2049
        %2051 = vmatprep.mubr.f32.mxu0 0.0
        %2052 = vmatmul.mubr.f32.gmra.mrb[0].mxu0 %v1878
        %v2053 = vpop.f32.mrb[0].mxu0
        %v2054 = vadd.f32 %v1865, %v2053
        %v2055 = vpop.f32.mrb[0].mxu0
        %v2056 = vadd.f32 %v1865, %v2055
        %2057 = vdwg.mxu0
        %2058 = vmatprep.subr.mxu0 %v1812
        %2059 = vmatpush1.msra.mxu0 %v1811
        %2060 = vmatprep.subr.mxu0 %v1820
        %2061 = vmatpush1.msra.mxu0 %v1819
        %2062 = vmatprep.subr.mxu0 %v1828
        %2063 = vmatpush1.msra.mxu0 %v1827
        %2064 = vmatprep.subr.mxu0 %v1836
        %2065 = vmatpush1.msra.mxu0 %v1835
        %2066 = vmatprep.subr.mxu0 0.0
        %2067 = vmatpush1.msra.mxu0 0.0
        %2068 = vmatprep.subr.mxu0 0.0
        %2069 = vmatpush1.msra.mxu0 0.0
        %2070 = vmatprep.subr.mxu0 0.0
        %2071 = vmatpush1.msra.mxu0 0.0
        %2072 = vmatprep.subr.mxu0 0.0
        %2073 = vmatpush1.msra.mxu0 0.0
        %2074 = vmatprep.subr.mxu0 0.0
        %2075 = vmatpush1.msra.mxu0 0.0
        %2076 = vmatprep.subr.mxu0 0.0
        %2077 = vmatpush1.msra.mxu0 0.0
        %2078 = vmatprep.subr.mxu0 0.0
        %2079 = vmatpush1.msra.mxu0 0.0
        %2080 = vmatprep.subr.mxu0 0.0
        %2081 = vmatpush1.msra.mxu0 0.0
        %2082 = vmatprep.subr.mxu0 0.0
        %2083 = vmatpush1.msra.mxu0 0.0
        %2084 = vmatprep.subr.mxu0 0.0
        %2085 = vmatpush1.msra.mxu0 0.0
        %2086 = vmatprep.subr.mxu0 0.0
        %2087 = vmatpush1.msra.mxu0 0.0
        %2088 = vmatprep.subr.mxu0 0.0
        %2089 = vmatpush1.msra.mxu0 0.0
        %2090 = vmatprep.subr.mxu0 0.0
        %2091 = vmatpush1.msra.mxu0 0.0
        %2092 = vmatprep.subr.mxu0 0.0
        %2093 = vmatpush1.msra.mxu0 0.0
        %2094 = vmatprep.subr.mxu0 0.0
        %2095 = vmatpush1.msra.mxu0 0.0
        %2096 = vmatprep.subr.mxu0 0.0
        %2097 = vmatpush1.msra.mxu0 0.0
        %2098 = vmatprep.subr.mxu0 0.0
        %2099 = vmatpush1.msra.mxu0 0.0
        %2100 = vmatprep.subr.mxu0 0.0
        %2101 = vmatpush1.msra.mxu0 0.0
        %2102 = vmatprep.subr.mxu0 0.0
        %2103 = vmatpush1.msra.mxu0 0.0
        %2104 = vmatprep.subr.mxu0 0.0
        %2105 = vmatpush1.msra.mxu0 0.0
        %2106 = vmatprep.subr.mxu0 0.0
        %2107 = vmatpush1.msra.mxu0 0.0
        %2108 = vmatprep.subr.mxu0 0.0
        %2109 = vmatpush1.msra.mxu0 0.0
        %2110 = vmatprep.subr.mxu0 0.0
        %2111 = vmatpush1.msra.mxu0 0.0
        %2112 = vmatprep.subr.mxu0 0.0
        %2113 = vmatpush1.msra.mxu0 0.0
        %2114 = vmatprep.subr.mxu0 0.0
        %2115 = vmatpush1.msra.mxu0 0.0
        %2116 = vmatprep.subr.mxu0 0.0
        %2117 = vmatpush1.msra.mxu0 0.0
        %2118 = vmatprep.subr.mxu0 0.0
        %2119 = vmatpush1.msra.mxu0 0.0
        %2120 = vmatprep.subr.mxu0 0.0
        %2121 = vmatpush1.msra.mxu0 0.0
        %2122 = vmatprep.mubr.f32.mxu0 0.0
        %2123 = vmatmul.mubr.f32.gmra.mrb[0].mxu0 %v1869
        %v2124 = vpop.f32.mrb[0].mxu0
        %v2125 = vadd.f32 %v1850, %v2124
        %v2126 = vpop.f32.mrb[0].mxu0
        %v2127 = vadd.f32 %v1850, %v2126
        %2128 = vmatprep.mubr.f32.mxu0 0.0
        %2129 = vmatmul.mubr.f32.gmra.mrb[0].mxu0 %v1872
        %v2130 = vpop.f32.mrb[0].mxu0
        %v2131 = vadd.f32 %v1855, %v2130
        %v2132 = vpop.f32.mrb[0].mxu0
        %v2133 = vadd.f32 %v1855, %v2132
        %2134 = vmatprep.mubr.f32.mxu0 0.0
        %2135 = vmatmul.mubr.f32.gmra.mrb[0].mxu0 %v1875
        %v2136 = vpop.f32.mrb[0].mxu0
        %v2137 = vadd.f32 %v1860, %v2136
        %v2138 = vpop.f32.mrb[0].mxu0
        %v2139 = vadd.f32 %v1860, %v2138
        %2140 = vmatprep.mubr.f32.mxu0 0.0
        %2141 = vmatmul.mubr.f32.gmra.mrb[0].mxu0 %v1878
        %v2142 = vpop.f32.mrb[0].mxu0
        %v2143 = vadd.f32 %v1865, %v2142
        %v2144 = vpop.f32.mrb[0].mxu0
        %v2145 = vadd.f32 %v1865, %v2144
        %2146 = vdwg.mxu0
        %2147 = vmatprep.subr.mxu0 %v1814
        %2148 = vmatpush1.msra.mxu0 %v1813
        %2149 = vmatprep.subr.mxu0 %v1822
        %2150 = vmatpush1.msra.mxu0 %v1821
        %2151 = vmatprep.subr.mxu0 %v1830
        %2152 = vmatpush1.msra.mxu0 %v1829
        %2153 = vmatprep.subr.mxu0 %v1838
        %2154 = vmatpush1.msra.mxu0 %v1837
        %2155 = vmatprep.subr.mxu0 0.0
        %2156 = vmatpush1.msra.mxu0 0.0
        %2157 = vmatprep.subr.mxu0 0.0
        %2158 = vmatpush1.msra.mxu0 0.0
        %2159 = vmatprep.subr.mxu0 0.0
        %2160 = vmatpush1.msra.mxu0 0.0
        %2161 = vmatprep.subr.mxu0 0.0
        %2162 = vmatpush1.msra.mxu0 0.0
        %2163 = vmatprep.subr.mxu0 0.0
        %2164 = vmatpush1.msra.mxu0 0.0
        %2165 = vmatprep.subr.mxu0 0.0
        %2166 = vmatpush1.msra.mxu0 0.0
        %2167 = vmatprep.subr.mxu0 0.0
        %2168 = vmatpush1.msra.mxu0 0.0
        %2169 = vmatprep.subr.mxu0 0.0
        %2170 = vmatpush1.msra.mxu0 0.0
        %2171 = vmatprep.subr.mxu0 0.0
        %2172 = vmatpush1.msra.mxu0 0.0
        %2173 = vmatprep.subr.mxu0 0.0
        %2174 = vmatpush1.msra.mxu0 0.0
        %2175 = vmatprep.subr.mxu0 0.0
        %2176 = vmatpush1.msra.mxu0 0.0
        %2177 = vmatprep.subr.mxu0 0.0
        %2178 = vmatpush1.msra.mxu0 0.0
        %2179 = vmatprep.subr.mxu0 0.0
        %2180 = vmatpush1.msra.mxu0 0.0
        %2181 = vmatprep.subr.mxu0 0.0
        %2182 = vmatpush1.msra.mxu0 0.0
        %2183 = vmatprep.subr.mxu0 0.0
        %2184 = vmatpush1.msra.mxu0 0.0
        %2185 = vmatprep.subr.mxu0 0.0
        %2186 = vmatpush1.msra.mxu0 0.0
        %2187 = vmatprep.subr.mxu0 0.0
        %2188 = vmatpush1.msra.mxu0 0.0
        %2189 = vmatprep.subr.mxu0 0.0
        %2190 = vmatpush1.msra.mxu0 0.0
        %2191 = vmatprep.subr.mxu0 0.0
        %2192 = vmatpush1.msra.mxu0 0.0
        %2193 = vmatprep.subr.mxu0 0.0
        %2194 = vmatpush1.msra.mxu0 0.0
        %2195 = vmatprep.subr.mxu0 0.0
        %2196 = vmatpush1.msra.mxu0 0.0
        %2197 = vmatprep.subr.mxu0 0.0
        %2198 = vmatpush1.msra.mxu0 0.0
        %2199 = vmatprep.subr.mxu0 0.0
        %2200 = vmatpush1.msra.mxu0 0.0
        %2201 = vmatprep.subr.mxu0 0.0
        %2202 = vmatpush1.msra.mxu0 0.0
        %2203 = vmatprep.subr.mxu0 0.0
        %2204 = vmatpush1.msra.mxu0 0.0
        %2205 = vmatprep.subr.mxu0 0.0
        %2206 = vmatpush1.msra.mxu0 0.0
        %2207 = vmatprep.subr.mxu0 0.0
        %2208 = vmatpush1.msra.mxu0 0.0
        %2209 = vmatprep.subr.mxu0 0.0
        %2210 = vmatpush1.msra.mxu0 0.0
        %2211 = vmatprep.mubr.f32.mxu0 0.0
        %2212 = vmatmul.mubr.f32.gmra.mrb[0].mxu0 %v1869
        %v2213 = vpop.f32.mrb[0].mxu0
        %v2214 = vadd.f32 %v1850, %v2213
        %v2215 = vpop.f32.mrb[0].mxu0
        %v2216 = vadd.f32 %v1850, %v2215
        %2217 = vmatprep.mubr.f32.mxu0 0.0
        %2218 = vmatmul.mubr.f32.gmra.mrb[0].mxu0 %v1872
        %v2219 = vpop.f32.mrb[0].mxu0
        %v2220 = vadd.f32 %v1855, %v2219
        %v2221 = vpop.f32.mrb[0].mxu0
        %v2222 = vadd.f32 %v1855, %v2221
        %2223 = vmatprep.mubr.f32.mxu0 0.0
        %2224 = vmatmul.mubr.f32.gmra.mrb[0].mxu0 %v1875
        %v2225 = vpop.f32.mrb[0].mxu0
        %v2226 = vadd.f32 %v1860, %v2225
        %v2227 = vpop.f32.mrb[0].mxu0
        %v2228 = vadd.f32 %v1860, %v2227
        %2229 = vmatprep.mubr.f32.mxu0 0.0
        %2230 = vmatmul.mubr.f32.gmra.mrb[0].mxu0 %v1878
        %v2231 = vpop.f32.mrb[0].mxu0
        %v2232 = vadd.f32 %v1865, %v2231
        %v2233 = vpop.f32.mrb[0].mxu0
        %v2234 = vadd.f32 %v1865, %v2233
        %2235 = vdwg.mxu0
        %v2236 = vmax.f32 %v1947, 0.0
        %v2237 = vmax.f32 %v1949, 0.0
        %v2238 = vmax.f32 %v2036, 0.0
        %v2239 = vmax.f32 %v2038, 0.0
        %v2240 = vmax.f32 %v2125, 0.0
        %v2241 = vmax.f32 %v2127, 0.0
        %v2242 = vmax.f32 %v2214, 0.0
        %v2243 = vmax.f32 %v2216, 0.0
        %v2244 = vmax.f32 %v1953, 0.0
        %v2245 = vmax.f32 %v1955, 0.0
        %v2246 = vmax.f32 %v2042, 0.0
        %v2247 = vmax.f32 %v2044, 0.0
        %v2248 = vmax.f32 %v2131, 0.0
        %v2249 = vmax.f32 %v2133, 0.0
        %v2250 = vmax.f32 %v2220, 0.0
        %v2251 = vmax.f32 %v2222, 0.0
        %v2252 = vmax.f32 %v1959, 0.0
        %v2253 = vmax.f32 %v1961, 0.0
        %v2254 = vmax.f32 %v2048, 0.0
        %v2255 = vmax.f32 %v2050, 0.0
        %v2256 = vmax.f32 %v2137, 0.0
        %v2257 = vmax.f32 %v2139, 0.0
        %v2258 = vmax.f32 %v2226, 0.0
        %v2259 = vmax.f32 %v2228, 0.0
        %v2260 = vmax.f32 %v1965, 0.0
        %v2261 = vmax.f32 %v1967, 0.0
        %v2262 = vmax.f32 %v2054, 0.0
        %v2263 = vmax.f32 %v2056, 0.0
        %v2264 = vmax.f32 %v2143, 0.0
        %v2265 = vmax.f32 %v2145, 0.0
        %v2266 = vmax.f32 %v2232, 0.0
        %v2267 = vmax.f32 %v2234, 0.0
        %v2268 = vld [vmem:[%s5] sm:$0xff]
        %v2269 = vld [vmem:[%s5 + $0x8] sm:$0xff]
        %v2270 = vld [vmem:[%s5 + $0x10] sm:$0xff]
        %v2271 = vld [vmem:[%s5 + $0x18] sm:$0xff]
        %v2272 = vld [vmem:[%s6] sm:$0xff]
        %v2273 = vld [vmem:[%s6 + $0x8] sm:$0xff]
        %v2274 = vld [vmem:[%s6 + $0x10] sm:$0xff]
        %v2275 = vld [vmem:[%s6 + $0x18] sm:$0xff]
        %v2276 = vld [vmem:[%s7] sm:$0xff]
        %v2277 = vld [vmem:[%s7 + $0x8] sm:$0xff]
        %v2278 = vld [vmem:[%s7 + $0x10] sm:$0xff]
        %v2279 = vld [vmem:[%s7 + $0x18] sm:$0xff]
        %v2280 = vcombine.high %v415, %v415
        %v2281 = vcombine.high %v416, %v416
        %v2282 = vcombine.high %v417, %v417
        %v2283 = vcombine.high %v418, %v418
        %vm2284 = vcmask 23552
        %v2286 = vsel %vm2284, %v2272, 0
        %v2289 = vsel %vm2284, %v2273, 0
        %v2292 = vsel %vm2284, %v2274, 0
        %v2295 = vsel %vm2284, %v2275, 0
        %v2297 = vsel %vm1309, %v415, 0
        %v2299 = vsel %vm1309, %v2280, 0
        %v2301 = vsel %vm1309, %v416, 0
        %v2303 = vsel %vm1309, %v2281, 0
        %v2305 = vsel %vm1309, %v417, 0
        %v2307 = vsel %vm1309, %v2282, 0
        %v2309 = vsel %vm1309, %v418, 0
        %v2311 = vsel %vm1309, %v2283, 0
        %2313 = vmatprep.subr.mxu0 %v2299
        %2314 = vmatpush1.msra.mxu0 %v2297
        %2315 = vmatprep.subr.mxu0 0.0
        %2316 = vmatpush1.msra.mxu0 0.0
        %2317 = vmatprep.subr.mxu0 0.0
        %2318 = vmatpush1.msra.mxu0 0.0
        %2319 = vmatprep.subr.mxu0 0.0
        %2320 = vmatpush1.msra.mxu0 0.0
        %2321 = vmatprep.subr.mxu0 0.0
        %2322 = vmatpush1.msra.mxu0 0.0
        %2323 = vmatprep.subr.mxu0 0.0
        %2324 = vmatpush1.msra.mxu0 0.0
        %2325 = vmatprep.subr.mxu0 0.0
        %2326 = vmatpush1.msra.mxu0 0.0
        %2327 = vmatprep.subr.mxu0 0.0
        %2328 = vmatpush1.msra.mxu0 0.0
        %2329 = vmatprep.subr.mxu0 0.0
        %2330 = vmatpush1.msra.mxu0 0.0
        %2331 = vmatprep.subr.mxu0 0.0
        %2332 = vmatpush1.msra.mxu0 0.0
        %2333 = vmatprep.subr.mxu0 0.0
        %2334 = vmatpush1.msra.mxu0 0.0
        %2335 = vmatprep.subr.mxu0 0.0
        %2336 = vmatpush1.msra.mxu0 0.0
        %2337 = vmatprep.subr.mxu0 0.0
        %2338 = vmatpush1.msra.mxu0 0.0
        %2339 = vmatprep.subr.mxu0 0.0
        %2340 = vmatpush1.msra.mxu0 0.0
        %2341 = vmatprep.subr.mxu0 0.0
        %2342 = vmatpush1.msra.mxu0 0.0
        %2343 = vmatprep.subr.mxu0 0.0
        %2344 = vmatpush1.msra.mxu0 0.0
        %2345 = vmatprep.subr.mxu0 0.0
        %2346 = vmatpush1.msra.mxu0 0.0
        %2347 = vmatprep.subr.mxu0 0.0
        %2348 = vmatpush1.msra.mxu0 0.0
        %2349 = vmatprep.subr.mxu0 0.0
        %2350 = vmatpush1.msra.mxu0 0.0
        %2351 = vmatprep.subr.mxu0 0.0
        %2352 = vmatpush1.msra.mxu0 0.0
        %2353 = vmatprep.subr.mxu0 0.0
        %2354 = vmatpush1.msra.mxu0 0.0
        %2355 = vmatprep.subr.mxu0 0.0
        %2356 = vmatpush1.msra.mxu0 0.0
        %2357 = vmatprep.subr.mxu0 0.0
        %2358 = vmatpush1.msra.mxu0 0.0
        %2359 = vmatprep.subr.mxu0 0.0
        %2360 = vmatpush1.msra.mxu0 0.0
        %2361 = vmatprep.subr.mxu0 0.0
        %2362 = vmatpush1.msra.mxu0 0.0
        %2363 = vmatprep.subr.mxu0 0.0
        %2364 = vmatpush1.msra.mxu0 0.0
        %2365 = vmatprep.subr.mxu0 0.0
        %2366 = vmatpush1.msra.mxu0 0.0
        %2367 = vmatprep.subr.mxu0 0.0
        %2368 = vmatpush1.msra.mxu0 0.0
        %2369 = vmatprep.subr.mxu0 0.0
        %2370 = vmatpush1.msra.mxu0 0.0
        %2371 = vmatprep.subr.mxu0 0.0
        %2372 = vmatpush1.msra.mxu0 0.0
        %2373 = vmatprep.subr.mxu0 0.0
        %2374 = vmatpush1.msra.mxu0 0.0
        %2375 = vmatprep.subr.mxu0 0.0
        %2376 = vmatpush1.msra.mxu0 0.0
        %2377 = vmatprep.mubr.f32.mxu0 0.0
        %2378 = vmatmul.mubr.f32.gmra.mrb[0].mxu0 %v2286
        %v2379 = vpop.f32.mrb[0].mxu0
        %v2380 = vadd.f32 0.0, %v2379
        %v2381 = vpop.f32.mrb[0].mxu0
        %v2382 = vadd.f32 0.0, %v2381
        %2383 = vmatprep.mubr.f32.mxu0 0.0
        %2384 = vmatmul.mubr.f32.gmra.mrb[0].mxu0 %v2289
        %v2385 = vpop.f32.mrb[0].mxu0
        %v2386 = vadd.f32 0.0, %v2385
        %v2387 = vpop.f32.mrb[0].mxu0
        %v2388 = vadd.f32 0.0, %v2387
        %2389 = vmatprep.mubr.f32.mxu0 0.0
        %2390 = vmatmul.mubr.f32.gmra.mrb[0].mxu0 %v2292
        %v2391 = vpop.f32.mrb[0].mxu0
        %v2392 = vadd.f32 0.0, %v2391
        %v2393 = vpop.f32.mrb[0].mxu0
        %v2394 = vadd.f32 0.0, %v2393
        %2395 = vmatprep.mubr.f32.mxu0 0.0
        %2396 = vmatmul.mubr.f32.gmra.mrb[0].mxu0 %v2295
        %v2397 = vpop.f32.mrb[0].mxu0
        %v2398 = vadd.f32 0.0, %v2397
        %v2399 = vpop.f32.mrb[0].mxu0
        %v2400 = vadd.f32 0.0, %v2399
        %2401 = vdwg.mxu0
        %2402 = vmatprep.subr.mxu0 %v2303
        %2403 = vmatpush1.msra.mxu0 %v2301
        %2404 = vmatprep.subr.mxu0 0.0
        %2405 = vmatpush1.msra.mxu0 0.0
        %2406 = vmatprep.subr.mxu0 0.0
        %2407 = vmatpush1.msra.mxu0 0.0
        %2408 = vmatprep.subr.mxu0 0.0
        %2409 = vmatpush1.msra.mxu0 0.0
        %2410 = vmatprep.subr.mxu0 0.0
        %2411 = vmatpush1.msra.mxu0 0.0
        %2412 = vmatprep.subr.mxu0 0.0
        %2413 = vmatpush1.msra.mxu0 0.0
        %2414 = vmatprep.subr.mxu0 0.0
        %2415 = vmatpush1.msra.mxu0 0.0
        %2416 = vmatprep.subr.mxu0 0.0
        %2417 = vmatpush1.msra.mxu0 0.0
        %2418 = vmatprep.subr.mxu0 0.0
        %2419 = vmatpush1.msra.mxu0 0.0
        %2420 = vmatprep.subr.mxu0 0.0
        %2421 = vmatpush1.msra.mxu0 0.0
        %2422 = vmatprep.subr.mxu0 0.0
        %2423 = vmatpush1.msra.mxu0 0.0
        %2424 = vmatprep.subr.mxu0 0.0
        %2425 = vmatpush1.msra.mxu0 0.0
        %2426 = vmatprep.subr.mxu0 0.0
        %2427 = vmatpush1.msra.mxu0 0.0
        %2428 = vmatprep.subr.mxu0 0.0
        %2429 = vmatpush1.msra.mxu0 0.0
        %2430 = vmatprep.subr.mxu0 0.0
        %2431 = vmatpush1.msra.mxu0 0.0
        %2432 = vmatprep.subr.mxu0 0.0
        %2433 = vmatpush1.msra.mxu0 0.0
        %2434 = vmatprep.subr.mxu0 0.0
        %2435 = vmatpush1.msra.mxu0 0.0
        %2436 = vmatprep.subr.mxu0 0.0
        %2437 = vmatpush1.msra.mxu0 0.0
        %2438 = vmatprep.subr.mxu0 0.0
        %2439 = vmatpush1.msra.mxu0 0.0
        %2440 = vmatprep.subr.mxu0 0.0
        %2441 = vmatpush1.msra.mxu0 0.0
        %2442 = vmatprep.subr.mxu0 0.0
        %2443 = vmatpush1.msra.mxu0 0.0
        %2444 = vmatprep.subr.mxu0 0.0
        %2445 = vmatpush1.msra.mxu0 0.0
        %2446 = vmatprep.subr.mxu0 0.0
        %2447 = vmatpush1.msra.mxu0 0.0
        %2448 = vmatprep.subr.mxu0 0.0
        %2449 = vmatpush1.msra.mxu0 0.0
        %2450 = vmatprep.subr.mxu0 0.0
        %2451 = vmatpush1.msra.mxu0 0.0
        %2452 = vmatprep.subr.mxu0 0.0
        %2453 = vmatpush1.msra.mxu0 0.0
        %2454 = vmatprep.subr.mxu0 0.0
        %2455 = vmatpush1.msra.mxu0 0.0
        %2456 = vmatprep.subr.mxu0 0.0
        %2457 = vmatpush1.msra.mxu0 0.0
        %2458 = vmatprep.subr.mxu0 0.0
        %2459 = vmatpush1.msra.mxu0 0.0
        %2460 = vmatprep.subr.mxu0 0.0
        %2461 = vmatpush1.msra.mxu0 0.0
        %2462 = vmatprep.subr.mxu0 0.0
        %2463 = vmatpush1.msra.mxu0 0.0
        %2464 = vmatprep.subr.mxu0 0.0
        %2465 = vmatpush1.msra.mxu0 0.0
        %2466 = vmatprep.mubr.f32.mxu0 0.0
        %2467 = vmatmul.mubr.f32.gmra.mrb[0].mxu0 %v2286
        %v2468 = vpop.f32.mrb[0].mxu0
        %v2469 = vadd.f32 0.0, %v2468
        %v2470 = vpop.f32.mrb[0].mxu0
        %v2471 = vadd.f32 0.0, %v2470
        %2472 = vmatprep.mubr.f32.mxu0 0.0
        %2473 = vmatmul.mubr.f32.gmra.mrb[0].mxu0 %v2289
        %v2474 = vpop.f32.mrb[0].mxu0
        %v2475 = vadd.f32 0.0, %v2474
        %v2476 = vpop.f32.mrb[0].mxu0
        %v2477 = vadd.f32 0.0, %v2476
        %2478 = vmatprep.mubr.f32.mxu0 0.0
        %2479 = vmatmul.mubr.f32.gmra.mrb[0].mxu0 %v2292
        %v2480 = vpop.f32.mrb[0].mxu0
        %v2481 = vadd.f32 0.0, %v2480
        %v2482 = vpop.f32.mrb[0].mxu0
        %v2483 = vadd.f32 0.0, %v2482
        %2484 = vmatprep.mubr.f32.mxu0 0.0
        %2485 = vmatmul.mubr.f32.gmra.mrb[0].mxu0 %v2295
        %v2486 = vpop.f32.mrb[0].mxu0
        %v2487 = vadd.f32 0.0, %v2486
        %v2488 = vpop.f32.mrb[0].mxu0
        %v2489 = vadd.f32 0.0, %v2488
        %2490 = vdwg.mxu0
        %2491 = vmatprep.subr.mxu0 %v2307
        %2492 = vmatpush1.msra.mxu0 %v2305
        %2493 = vmatprep.subr.mxu0 0.0
        %2494 = vmatpush1.msra.mxu0 0.0
        %2495 = vmatprep.subr.mxu0 0.0
        %2496 = vmatpush1.msra.mxu0 0.0
        %2497 = vmatprep.subr.mxu0 0.0
        %2498 = vmatpush1.msra.mxu0 0.0
        %2499 = vmatprep.subr.mxu0 0.0
        %2500 = vmatpush1.msra.mxu0 0.0
        %2501 = vmatprep.subr.mxu0 0.0
        %2502 = vmatpush1.msra.mxu0 0.0
        %2503 = vmatprep.subr.mxu0 0.0
        %2504 = vmatpush1.msra.mxu0 0.0
        %2505 = vmatprep.subr.mxu0 0.0
        %2506 = vmatpush1.msra.mxu0 0.0
        %2507 = vmatprep.subr.mxu0 0.0
        %2508 = vmatpush1.msra.mxu0 0.0
        %2509 = vmatprep.subr.mxu0 0.0
        %2510 = vmatpush1.msra.mxu0 0.0
        %2511 = vmatprep.subr.mxu0 0.0
        %2512 = vmatpush1.msra.mxu0 0.0
        %2513 = vmatprep.subr.mxu0 0.0
        %2514 = vmatpush1.msra.mxu0 0.0
        %2515 = vmatprep.subr.mxu0 0.0
        %2516 = vmatpush1.msra.mxu0 0.0
        %2517 = vmatprep.subr.mxu0 0.0
        %2518 = vmatpush1.msra.mxu0 0.0
        %2519 = vmatprep.subr.mxu0 0.0
        %2520 = vmatpush1.msra.mxu0 0.0
        %2521 = vmatprep.subr.mxu0 0.0
        %2522 = vmatpush1.msra.mxu0 0.0
        %2523 = vmatprep.subr.mxu0 0.0
        %2524 = vmatpush1.msra.mxu0 0.0
        %2525 = vmatprep.subr.mxu0 0.0
        %2526 = vmatpush1.msra.mxu0 0.0
        %2527 = vmatprep.subr.mxu0 0.0
        %2528 = vmatpush1.msra.mxu0 0.0
        %2529 = vmatprep.subr.mxu0 0.0
        %2530 = vmatpush1.msra.mxu0 0.0
        %2531 = vmatprep.subr.mxu0 0.0
        %2532 = vmatpush1.msra.mxu0 0.0
        %2533 = vmatprep.subr.mxu0 0.0
        %2534 = vmatpush1.msra.mxu0 0.0
        %2535 = vmatprep.subr.mxu0 0.0
        %2536 = vmatpush1.msra.mxu0 0.0
        %2537 = vmatprep.subr.mxu0 0.0
        %2538 = vmatpush1.msra.mxu0 0.0
        %2539 = vmatprep.subr.mxu0 0.0
        %2540 = vmatpush1.msra.mxu0 0.0
        %2541 = vmatprep.subr.mxu0 0.0
        %2542 = vmatpush1.msra.mxu0 0.0
        %2543 = vmatprep.subr.mxu0 0.0
        %2544 = vmatpush1.msra.mxu0 0.0
        %2545 = vmatprep.subr.mxu0 0.0
        %2546 = vmatpush1.msra.mxu0 0.0
        %2547 = vmatprep.subr.mxu0 0.0
        %2548 = vmatpush1.msra.mxu0 0.0
        %2549 = vmatprep.subr.mxu0 0.0
        %2550 = vmatpush1.msra.mxu0 0.0
        %2551 = vmatprep.subr.mxu0 0.0
        %2552 = vmatpush1.msra.mxu0 0.0
        %2553 = vmatprep.subr.mxu0 0.0
        %2554 = vmatpush1.msra.mxu0 0.0
        %2555 = vmatprep.mubr.f32.mxu0 0.0
        %2556 = vmatmul.mubr.f32.gmra.mrb[0].mxu0 %v2286
        %v2557 = vpop.f32.mrb[0].mxu0
        %v2558 = vadd.f32 0.0, %v2557
        %v2559 = vpop.f32.mrb[0].mxu0
        %v2560 = vadd.f32 0.0, %v2559
        %2561 = vmatprep.mubr.f32.mxu0 0.0
        %2562 = vmatmul.mubr.f32.gmra.mrb[0].mxu0 %v2289
        %v2563 = vpop.f32.mrb[0].mxu0
        %v2564 = vadd.f32 0.0, %v2563
        %v2565 = vpop.f32.mrb[0].mxu0
        %v2566 = vadd.f32 0.0, %v2565
        %2567 = vmatprep.mubr.f32.mxu0 0.0
        %2568 = vmatmul.mubr.f32.gmra.mrb[0].mxu0 %v2292
        %v2569 = vpop.f32.mrb[0].mxu0
        %v2570 = vadd.f32 0.0, %v2569
        %v2571 = vpop.f32.mrb[0].mxu0
        %v2572 = vadd.f32 0.0, %v2571
        %2573 = vmatprep.mubr.f32.mxu0 0.0
        %2574 = vmatmul.mubr.f32.gmra.mrb[0].mxu0 %v2295
        %v2575 = vpop.f32.mrb[0].mxu0
        %v2576 = vadd.f32 0.0, %v2575
        %v2577 = vpop.f32.mrb[0].mxu0
        %v2578 = vadd.f32 0.0, %v2577
        %2579 = vdwg.mxu0
        %2580 = vmatprep.subr.mxu0 %v2311
        %2581 = vmatpush1.msra.mxu0 %v2309
        %2582 = vmatprep.subr.mxu0 0.0
        %2583 = vmatpush1.msra.mxu0 0.0
        %2584 = vmatprep.subr.mxu0 0.0
        %2585 = vmatpush1.msra.mxu0 0.0
        %2586 = vmatprep.subr.mxu0 0.0
        %2587 = vmatpush1.msra.mxu0 0.0
        %2588 = vmatprep.subr.mxu0 0.0
        %2589 = vmatpush1.msra.mxu0 0.0
        %2590 = vmatprep.subr.mxu0 0.0
        %2591 = vmatpush1.msra.mxu0 0.0
        %2592 = vmatprep.subr.mxu0 0.0
        %2593 = vmatpush1.msra.mxu0 0.0
        %2594 = vmatprep.subr.mxu0 0.0
        %2595 = vmatpush1.msra.mxu0 0.0
        %2596 = vmatprep.subr.mxu0 0.0
        %2597 = vmatpush1.msra.mxu0 0.0
        %2598 = vmatprep.subr.mxu0 0.0
        %2599 = vmatpush1.msra.mxu0 0.0
        %2600 = vmatprep.subr.mxu0 0.0
        %2601 = vmatpush1.msra.mxu0 0.0
        %2602 = vmatprep.subr.mxu0 0.0
        %2603 = vmatpush1.msra.mxu0 0.0
        %2604 = vmatprep.subr.mxu0 0.0
        %2605 = vmatpush1.msra.mxu0 0.0
        %2606 = vmatprep.subr.mxu0 0.0
        %2607 = vmatpush1.msra.mxu0 0.0
        %2608 = vmatprep.subr.mxu0 0.0
        %2609 = vmatpush1.msra.mxu0 0.0
        %2610 = vmatprep.subr.mxu0 0.0
        %2611 = vmatpush1.msra.mxu0 0.0
        %2612 = vmatprep.subr.mxu0 0.0
        %2613 = vmatpush1.msra.mxu0 0.0
        %2614 = vmatprep.subr.mxu0 0.0
        %2615 = vmatpush1.msra.mxu0 0.0
        %2616 = vmatprep.subr.mxu0 0.0
        %2617 = vmatpush1.msra.mxu0 0.0
        %2618 = vmatprep.subr.mxu0 0.0
        %2619 = vmatpush1.msra.mxu0 0.0
        %2620 = vmatprep.subr.mxu0 0.0
        %2621 = vmatpush1.msra.mxu0 0.0
        %2622 = vmatprep.subr.mxu0 0.0
        %2623 = vmatpush1.msra.mxu0 0.0
        %2624 = vmatprep.subr.mxu0 0.0
        %2625 = vmatpush1.msra.mxu0 0.0
        %2626 = vmatprep.subr.mxu0 0.0
        %2627 = vmatpush1.msra.mxu0 0.0
        %2628 = vmatprep.subr.mxu0 0.0
        %2629 = vmatpush1.msra.mxu0 0.0
        %2630 = vmatprep.subr.mxu0 0.0
        %2631 = vmatpush1.msra.mxu0 0.0
        %2632 = vmatprep.subr.mxu0 0.0
        %2633 = vmatpush1.msra.mxu0 0.0
        %2634 = vmatprep.subr.mxu0 0.0
        %2635 = vmatpush1.msra.mxu0 0.0
        %2636 = vmatprep.subr.mxu0 0.0
        %2637 = vmatpush1.msra.mxu0 0.0
        %2638 = vmatprep.subr.mxu0 0.0
        %2639 = vmatpush1.msra.mxu0 0.0
        %2640 = vmatprep.subr.mxu0 0.0
        %2641 = vmatpush1.msra.mxu0 0.0
        %2642 = vmatprep.subr.mxu0 0.0
        %2643 = vmatpush1.msra.mxu0 0.0
        %2644 = vmatprep.mubr.f32.mxu0 0.0
        %2645 = vmatmul.mubr.f32.gmra.mrb[0].mxu0 %v2286
        %v2646 = vpop.f32.mrb[0].mxu0
        %v2647 = vadd.f32 0.0, %v2646
        %v2648 = vpop.f32.mrb[0].mxu0
        %v2649 = vadd.f32 0.0, %v2648
        %2650 = vmatprep.mubr.f32.mxu0 0.0
        %2651 = vmatmul.mubr.f32.gmra.mrb[0].mxu0 %v2289
        %v2652 = vpop.f32.mrb[0].mxu0
        %v2653 = vadd.f32 0.0, %v2652
        %v2654 = vpop.f32.mrb[0].mxu0
        %v2655 = vadd.f32 0.0, %v2654
        %2656 = vmatprep.mubr.f32.mxu0 0.0
        %2657 = vmatmul.mubr.f32.gmra.mrb[0].mxu0 %v2292
        %v2658 = vpop.f32.mrb[0].mxu0
        %v2659 = vadd.f32 0.0, %v2658
        %v2660 = vpop.f32.mrb[0].mxu0
        %v2661 = vadd.f32 0.0, %v2660
        %2662 = vmatprep.mubr.f32.mxu0 0.0
        %2663 = vmatmul.mubr.f32.gmra.mrb[0].mxu0 %v2295
        %v2664 = vpop.f32.mrb[0].mxu0
        %v2665 = vadd.f32 0.0, %v2664
        %v2666 = vpop.f32.mrb[0].mxu0
        %v2667 = vadd.f32 0.0, %v2666
        %2668 = vdwg.mxu0
        %v2670 = vsel %vm1867, %v2268, 0
        %v2673 = vsel %vm1867, %v2269, 0
        %v2676 = vsel %vm1867, %v2270, 0
        %v2679 = vsel %vm1867, %v2271, 0
        %2681 = vmatprep.subr.mxu0 %v2237
        %2682 = vmatpush1.msra.mxu0 %v2236
        %2683 = vmatprep.subr.mxu0 %v2245
        %2684 = vmatpush1.msra.mxu0 %v2244
        %2685 = vmatprep.subr.mxu0 %v2253
        %2686 = vmatpush1.msra.mxu0 %v2252
        %2687 = vmatprep.subr.mxu0 %v2261
        %2688 = vmatpush1.msra.mxu0 %v2260
        %2689 = vmatprep.subr.mxu0 0.0
        %2690 = vmatpush1.msra.mxu0 0.0
        %2691 = vmatprep.subr.mxu0 0.0
        %2692 = vmatpush1.msra.mxu0 0.0
        %2693 = vmatprep.subr.mxu0 0.0
        %2694 = vmatpush1.msra.mxu0 0.0
        %2695 = vmatprep.subr.mxu0 0.0
        %2696 = vmatpush1.msra.mxu0 0.0
        %2697 = vmatprep.subr.mxu0 0.0
        %2698 = vmatpush1.msra.mxu0 0.0
        %2699 = vmatprep.subr.mxu0 0.0
        %2700 = vmatpush1.msra.mxu0 0.0
        %2701 = vmatprep.subr.mxu0 0.0
        %2702 = vmatpush1.msra.mxu0 0.0
        %2703 = vmatprep.subr.mxu0 0.0
        %2704 = vmatpush1.msra.mxu0 0.0
        %2705 = vmatprep.subr.mxu0 0.0
        %2706 = vmatpush1.msra.mxu0 0.0
        %2707 = vmatprep.subr.mxu0 0.0
        %2708 = vmatpush1.msra.mxu0 0.0
        %2709 = vmatprep.subr.mxu0 0.0
        %2710 = vmatpush1.msra.mxu0 0.0
        %2711 = vmatprep.subr.mxu0 0.0
        %2712 = vmatpush1.msra.mxu0 0.0
        %2713 = vmatprep.subr.mxu0 0.0
        %2714 = vmatpush1.msra.mxu0 0.0
        %2715 = vmatprep.subr.mxu0 0.0
        %2716 = vmatpush1.msra.mxu0 0.0
        %2717 = vmatprep.subr.mxu0 0.0
        %2718 = vmatpush1.msra.mxu0 0.0
        %2719 = vmatprep.subr.mxu0 0.0
        %2720 = vmatpush1.msra.mxu0 0.0
        %2721 = vmatprep.subr.mxu0 0.0
        %2722 = vmatpush1.msra.mxu0 0.0
        %2723 = vmatprep.subr.mxu0 0.0
        %2724 = vmatpush1.msra.mxu0 0.0
        %2725 = vmatprep.subr.mxu0 0.0
        %2726 = vmatpush1.msra.mxu0 0.0
        %2727 = vmatprep.subr.mxu0 0.0
        %2728 = vmatpush1.msra.mxu0 0.0
        %2729 = vmatprep.subr.mxu0 0.0
        %2730 = vmatpush1.msra.mxu0 0.0
        %2731 = vmatprep.subr.mxu0 0.0
        %2732 = vmatpush1.msra.mxu0 0.0
        %2733 = vmatprep.subr.mxu0 0.0
        %2734 = vmatpush1.msra.mxu0 0.0
        %2735 = vmatprep.subr.mxu0 0.0
        %2736 = vmatpush1.msra.mxu0 0.0
        %2737 = vmatprep.subr.mxu0 0.0
        %2738 = vmatpush1.msra.mxu0 0.0
        %2739 = vmatprep.subr.mxu0 0.0
        %2740 = vmatpush1.msra.mxu0 0.0
        %2741 = vmatprep.subr.mxu0 0.0
        %2742 = vmatpush1.msra.mxu0 0.0
        %2743 = vmatprep.subr.mxu0 0.0
        %2744 = vmatpush1.msra.mxu0 0.0
        %2745 = vmatprep.mubr.f32.mxu0 0.0
        %2746 = vmatmul.mubr.f32.gmra.mrb[0].mxu0 %v2670
        %v2747 = vpop.f32.mrb[0].mxu0
        %v2748 = vadd.f32 %v2380, %v2747
        %v2749 = vpop.f32.mrb[0].mxu0
        %v2750 = vadd.f32 %v2382, %v2749
        %2751 = vmatprep.mubr.f32.mxu0 0.0
        %2752 = vmatmul.mubr.f32.gmra.mrb[0].mxu0 %v2673
        %v2753 = vpop.f32.mrb[0].mxu0
        %v2754 = vadd.f32 %v2386, %v2753
        %v2755 = vpop.f32.mrb[0].mxu0
        %v2756 = vadd.f32 %v2388, %v2755
        %2757 = vmatprep.mubr.f32.mxu0 0.0
        %2758 = vmatmul.mubr.f32.gmra.mrb[0].mxu0 %v2676
        %v2759 = vpop.f32.mrb[0].mxu0
        %v2760 = vadd.f32 %v2392, %v2759
        %v2761 = vpop.f32.mrb[0].mxu0
        %v2762 = vadd.f32 %v2394, %v2761
        %2763 = vmatprep.mubr.f32.mxu0 0.0
        %2764 = vmatmul.mubr.f32.gmra.mrb[0].mxu0 %v2679
        %v2765 = vpop.f32.mrb[0].mxu0
        %v2766 = vadd.f32 %v2398, %v2765
        %v2767 = vpop.f32.mrb[0].mxu0
        %v2768 = vadd.f32 %v2400, %v2767
        %2769 = vdwg.mxu0
        %2770 = vmatprep.subr.mxu0 %v2239
        %2771 = vmatpush1.msra.mxu0 %v2238
        %2772 = vmatprep.subr.mxu0 %v2247
        %2773 = vmatpush1.msra.mxu0 %v2246
        %2774 = vmatprep.subr.mxu0 %v2255
        %2775 = vmatpush1.msra.mxu0 %v2254
        %2776 = vmatprep.subr.mxu0 %v2263
        %2777 = vmatpush1.msra.mxu0 %v2262
        %2778 = vmatprep.subr.mxu0 0.0
        %2779 = vmatpush1.msra.mxu0 0.0
        %2780 = vmatprep.subr.mxu0 0.0
        %2781 = vmatpush1.msra.mxu0 0.0
        %2782 = vmatprep.subr.mxu0 0.0
        %2783 = vmatpush1.msra.mxu0 0.0
        %2784 = vmatprep.subr.mxu0 0.0
        %2785 = vmatpush1.msra.mxu0 0.0
        %2786 = vmatprep.subr.mxu0 0.0
        %2787 = vmatpush1.msra.mxu0 0.0
        %2788 = vmatprep.subr.mxu0 0.0
        %2789 = vmatpush1.msra.mxu0 0.0
        %2790 = vmatprep.subr.mxu0 0.0
        %2791 = vmatpush1.msra.mxu0 0.0
        %2792 = vmatprep.subr.mxu0 0.0
        %2793 = vmatpush1.msra.mxu0 0.0
        %2794 = vmatprep.subr.mxu0 0.0
        %2795 = vmatpush1.msra.mxu0 0.0
        %2796 = vmatprep.subr.mxu0 0.0
        %2797 = vmatpush1.msra.mxu0 0.0
        %2798 = vmatprep.subr.mxu0 0.0
        %2799 = vmatpush1.msra.mxu0 0.0
        %2800 = vmatprep.subr.mxu0 0.0
        %2801 = vmatpush1.msra.mxu0 0.0
        %2802 = vmatprep.subr.mxu0 0.0
        %2803 = vmatpush1.msra.mxu0 0.0
        %2804 = vmatprep.subr.mxu0 0.0
        %2805 = vmatpush1.msra.mxu0 0.0
        %2806 = vmatprep.subr.mxu0 0.0
        %2807 = vmatpush1.msra.mxu0 0.0
        %2808 = vmatprep.subr.mxu0 0.0
        %2809 = vmatpush1.msra.mxu0 0.0
        %2810 = vmatprep.subr.mxu0 0.0
        %2811 = vmatpush1.msra.mxu0 0.0
        %2812 = vmatprep.subr.mxu0 0.0
        %2813 = vmatpush1.msra.mxu0 0.0
        %2814 = vmatprep.subr.mxu0 0.0
        %2815 = vmatpush1.msra.mxu0 0.0
        %2816 = vmatprep.subr.mxu0 0.0
        %2817 = vmatpush1.msra.mxu0 0.0
        %2818 = vmatprep.subr.mxu0 0.0
        %2819 = vmatpush1.msra.mxu0 0.0
        %2820 = vmatprep.subr.mxu0 0.0
        %2821 = vmatpush1.msra.mxu0 0.0
        %2822 = vmatprep.subr.mxu0 0.0
        %2823 = vmatpush1.msra.mxu0 0.0
        %2824 = vmatprep.subr.mxu0 0.0
        %2825 = vmatpush1.msra.mxu0 0.0
        %2826 = vmatprep.subr.mxu0 0.0
        %2827 = vmatpush1.msra.mxu0 0.0
        %2828 = vmatprep.subr.mxu0 0.0
        %2829 = vmatpush1.msra.mxu0 0.0
        %2830 = vmatprep.subr.mxu0 0.0
        %2831 = vmatpush1.msra.mxu0 0.0
        %2832 = vmatprep.subr.mxu0 0.0
        %2833 = vmatpush1.msra.mxu0 0.0
        %2834 = vmatprep.mubr.f32.mxu0 0.0
        %2835 = vmatmul.mubr.f32.gmra.mrb[0].mxu0 %v2670
        %v2836 = vpop.f32.mrb[0].mxu0
        %v2837 = vadd.f32 %v2469, %v2836
        %v2838 = vpop.f32.mrb[0].mxu0
        %v2839 = vadd.f32 %v2471, %v2838
        %2840 = vmatprep.mubr.f32.mxu0 0.0
        %2841 = vmatmul.mubr.f32.gmra.mrb[0].mxu0 %v2673
        %v2842 = vpop.f32.mrb[0].mxu0
        %v2843 = vadd.f32 %v2475, %v2842
        %v2844 = vpop.f32.mrb[0].mxu0
        %v2845 = vadd.f32 %v2477, %v2844
        %2846 = vmatprep.mubr.f32.mxu0 0.0
        %2847 = vmatmul.mubr.f32.gmra.mrb[0].mxu0 %v2676
        %v2848 = vpop.f32.mrb[0].mxu0
        %v2849 = vadd.f32 %v2481, %v2848
        %v2850 = vpop.f32.mrb[0].mxu0
        %v2851 = vadd.f32 %v2483, %v2850
        %2852 = vmatprep.mubr.f32.mxu0 0.0
        %2853 = vmatmul.mubr.f32.gmra.mrb[0].mxu0 %v2679
        %v2854 = vpop.f32.mrb[0].mxu0
        %v2855 = vadd.f32 %v2487, %v2854
        %v2856 = vpop.f32.mrb[0].mxu0
        %v2857 = vadd.f32 %v2489, %v2856
        %2858 = vdwg.mxu0
        %2859 = vmatprep.subr.mxu0 %v2241
        %2860 = vmatpush1.msra.mxu0 %v2240
        %2861 = vmatprep.subr.mxu0 %v2249
        %2862 = vmatpush1.msra.mxu0 %v2248
        %2863 = vmatprep.subr.mxu0 %v2257
        %2864 = vmatpush1.msra.mxu0 %v2256
        %2865 = vmatprep.subr.mxu0 %v2265
        %2866 = vmatpush1.msra.mxu0 %v2264
        %2867 = vmatprep.subr.mxu0 0.0
        %2868 = vmatpush1.msra.mxu0 0.0
        %2869 = vmatprep.subr.mxu0 0.0
        %2870 = vmatpush1.msra.mxu0 0.0
        %2871 = vmatprep.subr.mxu0 0.0
        %2872 = vmatpush1.msra.mxu0 0.0
        %2873 = vmatprep.subr.mxu0 0.0
        %2874 = vmatpush1.msra.mxu0 0.0
        %2875 = vmatprep.subr.mxu0 0.0
        %2876 = vmatpush1.msra.mxu0 0.0
        %2877 = vmatprep.subr.mxu0 0.0
        %2878 = vmatpush1.msra.mxu0 0.0
        %2879 = vmatprep.subr.mxu0 0.0
        %2880 = vmatpush1.msra.mxu0 0.0
        %2881 = vmatprep.subr.mxu0 0.0
        %2882 = vmatpush1.msra.mxu0 0.0
        %2883 = vmatprep.subr.mxu0 0.0
        %2884 = vmatpush1.msra.mxu0 0.0
        %2885 = vmatprep.subr.mxu0 0.0
        %2886 = vmatpush1.msra.mxu0 0.0
        %2887 = vmatprep.subr.mxu0 0.0
        %2888 = vmatpush1.msra.mxu0 0.0
        %2889 = vmatprep.subr.mxu0 0.0
        %2890 = vmatpush1.msra.mxu0 0.0
        %2891 = vmatprep.subr.mxu0 0.0
        %2892 = vmatpush1.msra.mxu0 0.0
        %2893 = vmatprep.subr.mxu0 0.0
        %2894 = vmatpush1.msra.mxu0 0.0
        %2895 = vmatprep.subr.mxu0 0.0
        %2896 = vmatpush1.msra.mxu0 0.0
        %2897 = vmatprep.subr.mxu0 0.0
        %2898 = vmatpush1.msra.mxu0 0.0
        %2899 = vmatprep.subr.mxu0 0.0
        %2900 = vmatpush1.msra.mxu0 0.0
        %2901 = vmatprep.subr.mxu0 0.0
        %2902 = vmatpush1.msra.mxu0 0.0
        %2903 = vmatprep.subr.mxu0 0.0
        %2904 = vmatpush1.msra.mxu0 0.0
        %2905 = vmatprep.subr.mxu0 0.0
        %2906 = vmatpush1.msra.mxu0 0.0
        %2907 = vmatprep.subr.mxu0 0.0
        %2908 = vmatpush1.msra.mxu0 0.0
        %2909 = vmatprep.subr.mxu0 0.0
        %2910 = vmatpush1.msra.mxu0 0.0
        %2911 = vmatprep.subr.mxu0 0.0
        %2912 = vmatpush1.msra.mxu0 0.0
        %2913 = vmatprep.subr.mxu0 0.0
        %2914 = vmatpush1.msra.mxu0 0.0
        %2915 = vmatprep.subr.mxu0 0.0
        %2916 = vmatpush1.msra.mxu0 0.0
        %2917 = vmatprep.subr.mxu0 0.0
        %2918 = vmatpush1.msra.mxu0 0.0
        %2919 = vmatprep.subr.mxu0 0.0
        %2920 = vmatpush1.msra.mxu0 0.0
        %2921 = vmatprep.subr.mxu0 0.0
        %2922 = vmatpush1.msra.mxu0 0.0
        %2923 = vmatprep.mubr.f32.mxu0 0.0
        %2924 = vmatmul.mubr.f32.gmra.mrb[0].mxu0 %v2670
        %v2925 = vpop.f32.mrb[0].mxu0
        %v2926 = vadd.f32 %v2558, %v2925
        %v2927 = vpop.f32.mrb[0].mxu0
        %v2928 = vadd.f32 %v2560, %v2927
        %2929 = vmatprep.mubr.f32.mxu0 0.0
        %2930 = vmatmul.mubr.f32.gmra.mrb[0].mxu0 %v2673
        %v2931 = vpop.f32.mrb[0].mxu0
        %v2932 = vadd.f32 %v2564, %v2931
        %v2933 = vpop.f32.mrb[0].mxu0
        %v2934 = vadd.f32 %v2566, %v2933
        %2935 = vmatprep.mubr.f32.mxu0 0.0
        %2936 = vmatmul.mubr.f32.gmra.mrb[0].mxu0 %v2676
        %v2937 = vpop.f32.mrb[0].mxu0
        %v2938 = vadd.f32 %v2570, %v2937
        %v2939 = vpop.f32.mrb[0].mxu0
        %v2940 = vadd.f32 %v2572, %v2939
        %2941 = vmatprep.mubr.f32.mxu0 0.0
        %2942 = vmatmul.mubr.f32.gmra.mrb[0].mxu0 %v2679
        %v2943 = vpop.f32.mrb[0].mxu0
        %v2944 = vadd.f32 %v2576, %v2943
        %v2945 = vpop.f32.mrb[0].mxu0
        %v2946 = vadd.f32 %v2578, %v2945
        %2947 = vdwg.mxu0
        %2948 = vmatprep.subr.mxu0 %v2243
        %2949 = vmatpush1.msra.mxu0 %v2242
        %2950 = vmatprep.subr.mxu0 %v2251
        %2951 = vmatpush1.msra.mxu0 %v2250
        %2952 = vmatprep.subr.mxu0 %v2259
        %2953 = vmatpush1.msra.mxu0 %v2258
        %2954 = vmatprep.subr.mxu0 %v2267
        %2955 = vmatpush1.msra.mxu0 %v2266
        %2956 = vmatprep.subr.mxu0 0.0
        %2957 = vmatpush1.msra.mxu0 0.0
        %2958 = vmatprep.subr.mxu0 0.0
        %2959 = vmatpush1.msra.mxu0 0.0
        %2960 = vmatprep.subr.mxu0 0.0
        %2961 = vmatpush1.msra.mxu0 0.0
        %2962 = vmatprep.subr.mxu0 0.0
        %2963 = vmatpush1.msra.mxu0 0.0
        %2964 = vmatprep.subr.mxu0 0.0
        %2965 = vmatpush1.msra.mxu0 0.0
        %2966 = vmatprep.subr.mxu0 0.0
        %2967 = vmatpush1.msra.mxu0 0.0
        %2968 = vmatprep.subr.mxu0 0.0
        %2969 = vmatpush1.msra.mxu0 0.0
        %2970 = vmatprep.subr.mxu0 0.0
        %2971 = vmatpush1.msra.mxu0 0.0
        %2972 = vmatprep.subr.mxu0 0.0
        %2973 = vmatpush1.msra.mxu0 0.0
        %2974 = vmatprep.subr.mxu0 0.0
        %2975 = vmatpush1.msra.mxu0 0.0
        %2976 = vmatprep.subr.mxu0 0.0
        %2977 = vmatpush1.msra.mxu0 0.0
        %2978 = vmatprep.subr.mxu0 0.0
        %2979 = vmatpush1.msra.mxu0 0.0
        %2980 = vmatprep.subr.mxu0 0.0
        %2981 = vmatpush1.msra.mxu0 0.0
        %2982 = vmatprep.subr.mxu0 0.0
        %2983 = vmatpush1.msra.mxu0 0.0
        %2984 = vmatprep.subr.mxu0 0.0
        %2985 = vmatpush1.msra.mxu0 0.0
        %2986 = vmatprep.subr.mxu0 0.0
        %2987 = vmatpush1.msra.mxu0 0.0
        %2988 = vmatprep.subr.mxu0 0.0
        %2989 = vmatpush1.msra.mxu0 0.0
        %2990 = vmatprep.subr.mxu0 0.0
        %2991 = vmatpush1.msra.mxu0 0.0
        %2992 = vmatprep.subr.mxu0 0.0
        %2993 = vmatpush1.msra.mxu0 0.0
        %2994 = vmatprep.subr.mxu0 0.0
        %2995 = vmatpush1.msra.mxu0 0.0
        %2996 = vmatprep.subr.mxu0 0.0
        %2997 = vmatpush1.msra.mxu0 0.0
        %2998 = vmatprep.subr.mxu0 0.0
        %2999 = vmatpush1.msra.mxu0 0.0
        %3000 = vmatprep.subr.mxu0 0.0
        %3001 = vmatpush1.msra.mxu0 0.0
        %3002 = vmatprep.subr.mxu0 0.0
        %3003 = vmatpush1.msra.mxu0 0.0
        %3004 = vmatprep.subr.mxu0 0.0
        %3005 = vmatpush1.msra.mxu0 0.0
        %3006 = vmatprep.subr.mxu0 0.0
        %3007 = vmatpush1.msra.mxu0 0.0
        %3008 = vmatprep.subr.mxu0 0.0
        %3009 = vmatpush1.msra.mxu0 0.0
        %3010 = vmatprep.subr.mxu0 0.0
        %3011 = vmatpush1.msra.mxu0 0.0
        %3012 = vmatprep.mubr.f32.mxu0 0.0
        %3013 = vmatmul.mubr.f32.gmra.mrb[0].mxu0 %v2670
        %v3014 = vpop.f32.mrb[0].mxu0
        %v3015 = vadd.f32 %v2647, %v3014
        %v3016 = vpop.f32.mrb[0].mxu0
        %v3017 = vadd.f32 %v2649, %v3016
        %3018 = vmatprep.mubr.f32.mxu0 0.0
        %3019 = vmatmul.mubr.f32.gmra.mrb[0].mxu0 %v2673
        %v3020 = vpop.f32.mrb[0].mxu0
        %v3021 = vadd.f32 %v2653, %v3020
        %v3022 = vpop.f32.mrb[0].mxu0
        %v3023 = vadd.f32 %v2655, %v3022
        %3024 = vmatprep.mubr.f32.mxu0 0.0
        %3025 = vmatmul.mubr.f32.gmra.mrb[0].mxu0 %v2676
        %v3026 = vpop.f32.mrb[0].mxu0
        %v3027 = vadd.f32 %v2659, %v3026
        %v3028 = vpop.f32.mrb[0].mxu0
        %v3029 = vadd.f32 %v2661, %v3028
        %3030 = vmatprep.mubr.f32.mxu0 0.0
        %3031 = vmatmul.mubr.f32.gmra.mrb[0].mxu0 %v2679
        %v3032 = vpop.f32.mrb[0].mxu0
        %v3033 = vadd.f32 %v2665, %v3032
        %v3034 = vpop.f32.mrb[0].mxu0
        %v3035 = vadd.f32 %v2667, %v3034
        %3036 = vdwg.mxu0
        %3038 = vset.pattern.permute.xlu0 0
        %3039 = vperm.xlu0 %3038, %v2276
        %v3040 = vpop.permute.xlu0 %3039
        %3043 = vset.pattern.permute.xlu0 0
        %3044 = vperm.xlu0 %3043, %v2277
        %v3045 = vpop.permute.xlu0 %3044
        %3048 = vset.pattern.permute.xlu0 0
        %3049 = vperm.xlu0 %3048, %v2278
        %v3050 = vpop.permute.xlu0 %3049
        %3053 = vset.pattern.permute.xlu0 0
        %3054 = vperm.xlu0 %3053, %v2279
        %v3055 = vpop.permute.xlu0 %3054
        %v3057 = vadd.f32 %v2748, %v3040
        %v3058 = vadd.f32 %v2750, %v3040
        %v3059 = vadd.f32 %v2837, %v3040
        %v3060 = vadd.f32 %v2839, %v3040
        %v3061 = vadd.f32 %v2926, %v3040
        %v3062 = vadd.f32 %v2928, %v3040
        %v3063 = vadd.f32 %v3015, %v3040
        %v3064 = vadd.f32 %v3017, %v3040
        %v3065 = vadd.f32 %v2754, %v3045
        %v3066 = vadd.f32 %v2756, %v3045
        %v3067 = vadd.f32 %v2843, %v3045
        %v3068 = vadd.f32 %v2845, %v3045
        %v3069 = vadd.f32 %v2932, %v3045
        %v3070 = vadd.f32 %v2934, %v3045
        %v3071 = vadd.f32 %v3021, %v3045
        %v3072 = vadd.f32 %v3023, %v3045
        %v3073 = vadd.f32 %v2760, %v3050
        %v3074 = vadd.f32 %v2762, %v3050
        %v3075 = vadd.f32 %v2849, %v3050
        %v3076 = vadd.f32 %v2851, %v3050
        %v3077 = vadd.f32 %v2938, %v3050
        %v3078 = vadd.f32 %v2940, %v3050
        %v3079 = vadd.f32 %v3027, %v3050
        %v3080 = vadd.f32 %v3029, %v3050
        %v3081 = vadd.f32 %v2766, %v3055
        %v3082 = vadd.f32 %v2768, %v3055
        %v3083 = vadd.f32 %v2855, %v3055
        %v3084 = vadd.f32 %v2857, %v3055
        %v3085 = vadd.f32 %v2944, %v3055
        %v3086 = vadd.f32 %v2946, %v3055
        %v3087 = vadd.f32 %v3033, %v3055
        %v3088 = vadd.f32 %v3035, %v3055
        %v3089 = vmax.f32 %v3057, 0.0
        %v3090 = vmax.f32 %v3058, 0.0
        %v3091 = vmax.f32 %v3059, 0.0
        %v3092 = vmax.f32 %v3060, 0.0
        %v3093 = vmax.f32 %v3061, 0.0
        %v3094 = vmax.f32 %v3062, 0.0
        %v3095 = vmax.f32 %v3063, 0.0
        %v3096 = vmax.f32 %v3064, 0.0
        %v3097 = vmax.f32 %v3065, 0.0
        %v3098 = vmax.f32 %v3066, 0.0
        %v3099 = vmax.f32 %v3067, 0.0
        %v3100 = vmax.f32 %v3068, 0.0
        %v3101 = vmax.f32 %v3069, 0.0
        %v3102 = vmax.f32 %v3070, 0.0
        %v3103 = vmax.f32 %v3071, 0.0
        %v3104 = vmax.f32 %v3072, 0.0
        %v3105 = vmax.f32 %v3073, 0.0
        %v3106 = vmax.f32 %v3074, 0.0
        %v3107 = vmax.f32 %v3075, 0.0
        %v3108 = vmax.f32 %v3076, 0.0
        %v3109 = vmax.f32 %v3077, 0.0
        %v3110 = vmax.f32 %v3078, 0.0
        %v3111 = vmax.f32 %v3079, 0.0
        %v3112 = vmax.f32 %v3080, 0.0
        %v3113 = vmax.f32 %v3081, 0.0
        %v3114 = vmax.f32 %v3082, 0.0
        %v3115 = vmax.f32 %v3083, 0.0
        %v3116 = vmax.f32 %v3084, 0.0
        %v3117 = vmax.f32 %v3085, 0.0
        %v3118 = vmax.f32 %v3086, 0.0
        %v3119 = vmax.f32 %v3087, 0.0
        %v3120 = vmax.f32 %v3088, 0.0
        %v3121 = vld [vmem:[%s8] sm:$0xff]
        %v3122 = vld [vmem:[%s8 + $0x8] sm:$0xff]
        %v3123 = vld [vmem:[%s8 + $0x10] sm:$0xff]
        %v3124 = vld [vmem:[%s8 + $0x18] sm:$0xff]
        %v3125 = vld [vmem:[%s9] sm:$0xff]
        %v3126 = vld [vmem:[%s9 + $0x8] sm:$0xff]
        %v3127 = vld [vmem:[%s9 + $0x10] sm:$0xff]
        %v3128 = vld [vmem:[%s9 + $0x18] sm:$0xff]
        %3130 = vset.pattern.permute.xlu0 0
        %3131 = vperm.xlu0 %3130, %v3125
        %v3132 = vpop.permute.xlu0 %3131
        %3135 = vset.pattern.permute.xlu0 0
        %3136 = vperm.xlu0 %3135, %v3126
        %v3137 = vpop.permute.xlu0 %3136
        %3140 = vset.pattern.permute.xlu0 0
        %3141 = vperm.xlu0 %3140, %v3127
        %v3142 = vpop.permute.xlu0 %3141
        %3145 = vset.pattern.permute.xlu0 0
        %3146 = vperm.xlu0 %3145, %v3128
        %v3147 = vpop.permute.xlu0 %3146
        %v3150 = vsel %vm1867, %v3121, 0
        %v3153 = vsel %vm1867, %v3122, 0
        %v3156 = vsel %vm1867, %v3123, 0
        %v3159 = vsel %vm1867, %v3124, 0
        %3161 = vmatprep.subr.mxu0 %v3090
        %3162 = vmatpush1.msra.mxu0 %v3089
        %3163 = vmatprep.subr.mxu0 %v3098
        %3164 = vmatpush1.msra.mxu0 %v3097
        %3165 = vmatprep.subr.mxu0 %v3106
        %3166 = vmatpush1.msra.mxu0 %v3105
        %3167 = vmatprep.subr.mxu0 %v3114
        %3168 = vmatpush1.msra.mxu0 %v3113
        %3169 = vmatprep.subr.mxu0 0.0
        %3170 = vmatpush1.msra.mxu0 0.0
        %3171 = vmatprep.subr.mxu0 0.0
        %3172 = vmatpush1.msra.mxu0 0.0
        %3173 = vmatprep.subr.mxu0 0.0
        %3174 = vmatpush1.msra.mxu0 0.0
        %3175 = vmatprep.subr.mxu0 0.0
        %3176 = vmatpush1.msra.mxu0 0.0
        %3177 = vmatprep.subr.mxu0 0.0
        %3178 = vmatpush1.msra.mxu0 0.0
        %3179 = vmatprep.subr.mxu0 0.0
        %3180 = vmatpush1.msra.mxu0 0.0
        %3181 = vmatprep.subr.mxu0 0.0
        %3182 = vmatpush1.msra.mxu0 0.0
        %3183 = vmatprep.subr.mxu0 0.0
        %3184 = vmatpush1.msra.mxu0 0.0
        %3185 = vmatprep.subr.mxu0 0.0
        %3186 = vmatpush1.msra.mxu0 0.0
        %3187 = vmatprep.subr.mxu0 0.0
        %3188 = vmatpush1.msra.mxu0 0.0
        %3189 = vmatprep.subr.mxu0 0.0
        %3190 = vmatpush1.msra.mxu0 0.0
        %3191 = vmatprep.subr.mxu0 0.0
        %3192 = vmatpush1.msra.mxu0 0.0
        %3193 = vmatprep.subr.mxu0 0.0
        %3194 = vmatpush1.msra.mxu0 0.0
        %3195 = vmatprep.subr.mxu0 0.0
        %3196 = vmatpush1.msra.mxu0 0.0
        %3197 = vmatprep.subr.mxu0 0.0
        %3198 = vmatpush1.msra.mxu0 0.0
        %3199 = vmatprep.subr.mxu0 0.0
        %3200 = vmatpush1.msra.mxu0 0.0
        %3201 = vmatprep.subr.mxu0 0.0
        %3202 = vmatpush1.msra.mxu0 0.0
        %3203 = vmatprep.subr.mxu0 0.0
        %3204 = vmatpush1.msra.mxu0 0.0
        %3205 = vmatprep.subr.mxu0 0.0
        %3206 = vmatpush1.msra.mxu0 0.0
        %3207 = vmatprep.subr.mxu0 0.0
        %3208 = vmatpush1.msra.mxu0 0.0
        %3209 = vmatprep.subr.mxu0 0.0
        %3210 = vmatpush1.msra.mxu0 0.0
        %3211 = vmatprep.subr.mxu0 0.0
        %3212 = vmatpush1.msra.mxu0 0.0
        %3213 = vmatprep.subr.mxu0 0.0
        %3214 = vmatpush1.msra.mxu0 0.0
        %3215 = vmatprep.subr.mxu0 0.0
        %3216 = vmatpush1.msra.mxu0 0.0
        %3217 = vmatprep.subr.mxu0 0.0
        %3218 = vmatpush1.msra.mxu0 0.0
        %3219 = vmatprep.subr.mxu0 0.0
        %3220 = vmatpush1.msra.mxu0 0.0
        %3221 = vmatprep.subr.mxu0 0.0
        %3222 = vmatpush1.msra.mxu0 0.0
        %3223 = vmatprep.subr.mxu0 0.0
        %3224 = vmatpush1.msra.mxu0 0.0
        %3225 = vmatprep.mubr.f32.mxu0 0.0
        %3226 = vmatmul.mubr.f32.gmra.mrb[0].mxu0 %v3150
        %v3227 = vpop.f32.mrb[0].mxu0
        %v3228 = vadd.f32 %v3132, %v3227
        %v3229 = vpop.f32.mrb[0].mxu0
        %v3230 = vadd.f32 %v3132, %v3229
        %3231 = vmatprep.mubr.f32.mxu0 0.0
        %3232 = vmatmul.mubr.f32.gmra.mrb[0].mxu0 %v3153
        %v3233 = vpop.f32.mrb[0].mxu0
        %v3234 = vadd.f32 %v3137, %v3233
        %v3235 = vpop.f32.mrb[0].mxu0
        %v3236 = vadd.f32 %v3137, %v3235
        %3237 = vmatprep.mubr.f32.mxu0 0.0
        %3238 = vmatmul.mubr.f32.gmra.mrb[0].mxu0 %v3156
        %v3239 = vpop.f32.mrb[0].mxu0
        %v3240 = vadd.f32 %v3142, %v3239
        %v3241 = vpop.f32.mrb[0].mxu0
        %v3242 = vadd.f32 %v3142, %v3241
        %3243 = vmatprep.mubr.f32.mxu0 0.0
        %3244 = vmatmul.mubr.f32.gmra.mrb[0].mxu0 %v3159
        %v3245 = vpop.f32.mrb[0].mxu0
        %v3246 = vadd.f32 %v3147, %v3245
        %v3247 = vpop.f32.mrb[0].mxu0
        %v3248 = vadd.f32 %v3147, %v3247
        %3249 = vdwg.mxu0
        %3250 = vmatprep.subr.mxu0 %v3092
        %3251 = vmatpush1.msra.mxu0 %v3091
        %3252 = vmatprep.subr.mxu0 %v3100
        %3253 = vmatpush1.msra.mxu0 %v3099
        %3254 = vmatprep.subr.mxu0 %v3108
        %3255 = vmatpush1.msra.mxu0 %v3107
        %3256 = vmatprep.subr.mxu0 %v3116
        %3257 = vmatpush1.msra.mxu0 %v3115
        %3258 = vmatprep.subr.mxu0 0.0
        %3259 = vmatpush1.msra.mxu0 0.0
        %3260 = vmatprep.subr.mxu0 0.0
        %3261 = vmatpush1.msra.mxu0 0.0
        %3262 = vmatprep.subr.mxu0 0.0
        %3263 = vmatpush1.msra.mxu0 0.0
        %3264 = vmatprep.subr.mxu0 0.0
        %3265 = vmatpush1.msra.mxu0 0.0
        %3266 = vmatprep.subr.mxu0 0.0
        %3267 = vmatpush1.msra.mxu0 0.0
        %3268 = vmatprep.subr.mxu0 0.0
        %3269 = vmatpush1.msra.mxu0 0.0
        %3270 = vmatprep.subr.mxu0 0.0
        %3271 = vmatpush1.msra.mxu0 0.0
        %3272 = vmatprep.subr.mxu0 0.0
        %3273 = vmatpush1.msra.mxu0 0.0
        %3274 = vmatprep.subr.mxu0 0.0
        %3275 = vmatpush1.msra.mxu0 0.0
        %3276 = vmatprep.subr.mxu0 0.0
        %3277 = vmatpush1.msra.mxu0 0.0
        %3278 = vmatprep.subr.mxu0 0.0
        %3279 = vmatpush1.msra.mxu0 0.0
        %3280 = vmatprep.subr.mxu0 0.0
        %3281 = vmatpush1.msra.mxu0 0.0
        %3282 = vmatprep.subr.mxu0 0.0
        %3283 = vmatpush1.msra.mxu0 0.0
        %3284 = vmatprep.subr.mxu0 0.0
        %3285 = vmatpush1.msra.mxu0 0.0
        %3286 = vmatprep.subr.mxu0 0.0
        %3287 = vmatpush1.msra.mxu0 0.0
        %3288 = vmatprep.subr.mxu0 0.0
        %3289 = vmatpush1.msra.mxu0 0.0
        %3290 = vmatprep.subr.mxu0 0.0
        %3291 = vmatpush1.msra.mxu0 0.0
        %3292 = vmatprep.subr.mxu0 0.0
        %3293 = vmatpush1.msra.mxu0 0.0
        %3294 = vmatprep.subr.mxu0 0.0
        %3295 = vmatpush1.msra.mxu0 0.0
        %3296 = vmatprep.subr.mxu0 0.0
        %3297 = vmatpush1.msra.mxu0 0.0
        %3298 = vmatprep.subr.mxu0 0.0
        %3299 = vmatpush1.msra.mxu0 0.0
        %3300 = vmatprep.subr.mxu0 0.0
        %3301 = vmatpush1.msra.mxu0 0.0
        %3302 = vmatprep.subr.mxu0 0.0
        %3303 = vmatpush1.msra.mxu0 0.0
        %3304 = vmatprep.subr.mxu0 0.0
        %3305 = vmatpush1.msra.mxu0 0.0
        %3306 = vmatprep.subr.mxu0 0.0
        %3307 = vmatpush1.msra.mxu0 0.0
        %3308 = vmatprep.subr.mxu0 0.0
        %3309 = vmatpush1.msra.mxu0 0.0
        %3310 = vmatprep.subr.mxu0 0.0
        %3311 = vmatpush1.msra.mxu0 0.0
        %3312 = vmatprep.subr.mxu0 0.0
        %3313 = vmatpush1.msra.mxu0 0.0
        %3314 = vmatprep.mubr.f32.mxu0 0.0
        %3315 = vmatmul.mubr.f32.gmra.mrb[0].mxu0 %v3150
        %v3316 = vpop.f32.mrb[0].mxu0
        %v3317 = vadd.f32 %v3132, %v3316
        %v3318 = vpop.f32.mrb[0].mxu0
        %v3319 = vadd.f32 %v3132, %v3318
        %3320 = vmatprep.mubr.f32.mxu0 0.0
        %3321 = vmatmul.mubr.f32.gmra.mrb[0].mxu0 %v3153
        %v3322 = vpop.f32.mrb[0].mxu0
        %v3323 = vadd.f32 %v3137, %v3322
        %v3324 = vpop.f32.mrb[0].mxu0
        %v3325 = vadd.f32 %v3137, %v3324
        %3326 = vmatprep.mubr.f32.mxu0 0.0
        %3327 = vmatmul.mubr.f32.gmra.mrb[0].mxu0 %v3156
        %v3328 = vpop.f32.mrb[0].mxu0
        %v3329 = vadd.f32 %v3142, %v3328
        %v3330 = vpop.f32.mrb[0].mxu0
        %v3331 = vadd.f32 %v3142, %v3330
        %3332 = vmatprep.mubr.f32.mxu0 0.0
        %3333 = vmatmul.mubr.f32.gmra.mrb[0].mxu0 %v3159
        %v3334 = vpop.f32.mrb[0].mxu0
        %v3335 = vadd.f32 %v3147, %v3334
        %v3336 = vpop.f32.mrb[0].mxu0
        %v3337 = vadd.f32 %v3147, %v3336
        %3338 = vdwg.mxu0
        %3339 = vmatprep.subr.mxu0 %v3094
        %3340 = vmatpush1.msra.mxu0 %v3093
        %3341 = vmatprep.subr.mxu0 %v3102
        %3342 = vmatpush1.msra.mxu0 %v3101
        %3343 = vmatprep.subr.mxu0 %v3110
        %3344 = vmatpush1.msra.mxu0 %v3109
        %3345 = vmatprep.subr.mxu0 %v3118
        %3346 = vmatpush1.msra.mxu0 %v3117
        %3347 = vmatprep.subr.mxu0 0.0
        %3348 = vmatpush1.msra.mxu0 0.0
        %3349 = vmatprep.subr.mxu0 0.0
        %3350 = vmatpush1.msra.mxu0 0.0
        %3351 = vmatprep.subr.mxu0 0.0
        %3352 = vmatpush1.msra.mxu0 0.0
        %3353 = vmatprep.subr.mxu0 0.0
        %3354 = vmatpush1.msra.mxu0 0.0
        %3355 = vmatprep.subr.mxu0 0.0
        %3356 = vmatpush1.msra.mxu0 0.0
        %3357 = vmatprep.subr.mxu0 0.0
        %3358 = vmatpush1.msra.mxu0 0.0
        %3359 = vmatprep.subr.mxu0 0.0
        %3360 = vmatpush1.msra.mxu0 0.0
        %3361 = vmatprep.subr.mxu0 0.0
        %3362 = vmatpush1.msra.mxu0 0.0
        %3363 = vmatprep.subr.mxu0 0.0
        %3364 = vmatpush1.msra.mxu0 0.0
        %3365 = vmatprep.subr.mxu0 0.0
        %3366 = vmatpush1.msra.mxu0 0.0
        %3367 = vmatprep.subr.mxu0 0.0
        %3368 = vmatpush1.msra.mxu0 0.0
        %3369 = vmatprep.subr.mxu0 0.0
        %3370 = vmatpush1.msra.mxu0 0.0
        %3371 = vmatprep.subr.mxu0 0.0
        %3372 = vmatpush1.msra.mxu0 0.0
        %3373 = vmatprep.subr.mxu0 0.0
        %3374 = vmatpush1.msra.mxu0 0.0
        %3375 = vmatprep.subr.mxu0 0.0
        %3376 = vmatpush1.msra.mxu0 0.0
        %3377 = vmatprep.subr.mxu0 0.0
        %3378 = vmatpush1.msra.mxu0 0.0
        %3379 = vmatprep.subr.mxu0 0.0
        %3380 = vmatpush1.msra.mxu0 0.0
        %3381 = vmatprep.subr.mxu0 0.0
        %3382 = vmatpush1.msra.mxu0 0.0
        %3383 = vmatprep.subr.mxu0 0.0
        %3384 = vmatpush1.msra.mxu0 0.0
        %3385 = vmatprep.subr.mxu0 0.0
        %3386 = vmatpush1.msra.mxu0 0.0
        %3387 = vmatprep.subr.mxu0 0.0
        %3388 = vmatpush1.msra.mxu0 0.0
        %3389 = vmatprep.subr.mxu0 0.0
        %3390 = vmatpush1.msra.mxu0 0.0
        %3391 = vmatprep.subr.mxu0 0.0
        %3392 = vmatpush1.msra.mxu0 0.0
        %3393 = vmatprep.subr.mxu0 0.0
        %3394 = vmatpush1.msra.mxu0 0.0
        %3395 = vmatprep.subr.mxu0 0.0
        %3396 = vmatpush1.msra.mxu0 0.0
        %3397 = vmatprep.subr.mxu0 0.0
        %3398 = vmatpush1.msra.mxu0 0.0
        %3399 = vmatprep.subr.mxu0 0.0
        %3400 = vmatpush1.msra.mxu0 0.0
        %3401 = vmatprep.subr.mxu0 0.0
        %3402 = vmatpush1.msra.mxu0 0.0
        %3403 = vmatprep.mubr.f32.mxu0 0.0
        %3404 = vmatmul.mubr.f32.gmra.mrb[0].mxu0 %v3150
        %v3405 = vpop.f32.mrb[0].mxu0
        %v3406 = vadd.f32 %v3132, %v3405
        %v3407 = vpop.f32.mrb[0].mxu0
        %v3408 = vadd.f32 %v3132, %v3407
        %3409 = vmatprep.mubr.f32.mxu0 0.0
        %3410 = vmatmul.mubr.f32.gmra.mrb[0].mxu0 %v3153
        %v3411 = vpop.f32.mrb[0].mxu0
        %v3412 = vadd.f32 %v3137, %v3411
        %v3413 = vpop.f32.mrb[0].mxu0
        %v3414 = vadd.f32 %v3137, %v3413
        %3415 = vmatprep.mubr.f32.mxu0 0.0
        %3416 = vmatmul.mubr.f32.gmra.mrb[0].mxu0 %v3156
        %v3417 = vpop.f32.mrb[0].mxu0
        %v3418 = vadd.f32 %v3142, %v3417
        %v3419 = vpop.f32.mrb[0].mxu0
        %v3420 = vadd.f32 %v3142, %v3419
        %3421 = vmatprep.mubr.f32.mxu0 0.0
        %3422 = vmatmul.mubr.f32.gmra.mrb[0].mxu0 %v3159
        %v3423 = vpop.f32.mrb[0].mxu0
        %v3424 = vadd.f32 %v3147, %v3423
        %v3425 = vpop.f32.mrb[0].mxu0
        %v3426 = vadd.f32 %v3147, %v3425
        %3427 = vdwg.mxu0
        %3428 = vmatprep.subr.mxu0 %v3096
        %3429 = vmatpush1.msra.mxu0 %v3095
        %3430 = vmatprep.subr.mxu0 %v3104
        %3431 = vmatpush1.msra.mxu0 %v3103
        %3432 = vmatprep.subr.mxu0 %v3112
        %3433 = vmatpush1.msra.mxu0 %v3111
        %3434 = vmatprep.subr.mxu0 %v3120
        %3435 = vmatpush1.msra.mxu0 %v3119
        %3436 = vmatprep.subr.mxu0 0.0
        %3437 = vmatpush1.msra.mxu0 0.0
        %3438 = vmatprep.subr.mxu0 0.0
        %3439 = vmatpush1.msra.mxu0 0.0
        %3440 = vmatprep.subr.mxu0 0.0
        %3441 = vmatpush1.msra.mxu0 0.0
        %3442 = vmatprep.subr.mxu0 0.0
        %3443 = vmatpush1.msra.mxu0 0.0
        %3444 = vmatprep.subr.mxu0 0.0
        %3445 = vmatpush1.msra.mxu0 0.0
        %3446 = vmatprep.subr.mxu0 0.0
        %3447 = vmatpush1.msra.mxu0 0.0
        %3448 = vmatprep.subr.mxu0 0.0
        %3449 = vmatpush1.msra.mxu0 0.0
        %3450 = vmatprep.subr.mxu0 0.0
        %3451 = vmatpush1.msra.mxu0 0.0
        %3452 = vmatprep.subr.mxu0 0.0
        %3453 = vmatpush1.msra.mxu0 0.0
        %3454 = vmatprep.subr.mxu0 0.0
        %3455 = vmatpush1.msra.mxu0 0.0
        %3456 = vmatprep.subr.mxu0 0.0
        %3457 = vmatpush1.msra.mxu0 0.0
        %3458 = vmatprep.subr.mxu0 0.0
        %3459 = vmatpush1.msra.mxu0 0.0
        %3460 = vmatprep.subr.mxu0 0.0
        %3461 = vmatpush1.msra.mxu0 0.0
        %3462 = vmatprep.subr.mxu0 0.0
        %3463 = vmatpush1.msra.mxu0 0.0
        %3464 = vmatprep.subr.mxu0 0.0
        %3465 = vmatpush1.msra.mxu0 0.0
        %3466 = vmatprep.subr.mxu0 0.0
        %3467 = vmatpush1.msra.mxu0 0.0
        %3468 = vmatprep.subr.mxu0 0.0
        %3469 = vmatpush1.msra.mxu0 0.0
        %3470 = vmatprep.subr.mxu0 0.0
        %3471 = vmatpush1.msra.mxu0 0.0
        %3472 = vmatprep.subr.mxu0 0.0
        %3473 = vmatpush1.msra.mxu0 0.0
        %3474 = vmatprep.subr.mxu0 0.0
        %3475 = vmatpush1.msra.mxu0 0.0
        %3476 = vmatprep.subr.mxu0 0.0
        %3477 = vmatpush1.msra.mxu0 0.0
        %3478 = vmatprep.subr.mxu0 0.0
        %3479 = vmatpush1.msra.mxu0 0.0
        %3480 = vmatprep.subr.mxu0 0.0
        %3481 = vmatpush1.msra.mxu0 0.0
        %3482 = vmatprep.subr.mxu0 0.0
        %3483 = vmatpush1.msra.mxu0 0.0
        %3484 = vmatprep.subr.mxu0 0.0
        %3485 = vmatpush1.msra.mxu0 0.0
        %3486 = vmatprep.subr.mxu0 0.0
        %3487 = vmatpush1.msra.mxu0 0.0
        %3488 = vmatprep.subr.mxu0 0.0
        %3489 = vmatpush1.msra.mxu0 0.0
        %3490 = vmatprep.subr.mxu0 0.0
        %3491 = vmatpush1.msra.mxu0 0.0
        %3492 = vmatprep.mubr.f32.mxu0 0.0
        %3493 = vmatmul.mubr.f32.gmra.mrb[0].mxu0 %v3150
        %v3494 = vpop.f32.mrb[0].mxu0
        %v3495 = vadd.f32 %v3132, %v3494
        %v3496 = vpop.f32.mrb[0].mxu0
        %v3497 = vadd.f32 %v3132, %v3496
        %3498 = vmatprep.mubr.f32.mxu0 0.0
        %3499 = vmatmul.mubr.f32.gmra.mrb[0].mxu0 %v3153
        %v3500 = vpop.f32.mrb[0].mxu0
        %v3501 = vadd.f32 %v3137, %v3500
        %v3502 = vpop.f32.mrb[0].mxu0
        %v3503 = vadd.f32 %v3137, %v3502
        %3504 = vmatprep.mubr.f32.mxu0 0.0
        %3505 = vmatmul.mubr.f32.gmra.mrb[0].mxu0 %v3156
        %v3506 = vpop.f32.mrb[0].mxu0
        %v3507 = vadd.f32 %v3142, %v3506
        %v3508 = vpop.f32.mrb[0].mxu0
        %v3509 = vadd.f32 %v3142, %v3508
        %3510 = vmatprep.mubr.f32.mxu0 0.0
        %3511 = vmatmul.mubr.f32.gmra.mrb[0].mxu0 %v3159
        %v3512 = vpop.f32.mrb[0].mxu0
        %v3513 = vadd.f32 %v3147, %v3512
        %v3514 = vpop.f32.mrb[0].mxu0
        %v3515 = vadd.f32 %v3147, %v3514
        %3516 = vdwg.mxu0
        %v3517 = vmax.f32 %v3228, 0.0
        %v3518 = vmax.f32 %v3230, 0.0
        %v3519 = vmax.f32 %v3317, 0.0
        %v3520 = vmax.f32 %v3319, 0.0
        %v3521 = vmax.f32 %v3406, 0.0
        %v3522 = vmax.f32 %v3408, 0.0
        %v3523 = vmax.f32 %v3495, 0.0
        %v3524 = vmax.f32 %v3497, 0.0
        %v3525 = vmax.f32 %v3234, 0.0
        %v3526 = vmax.f32 %v3236, 0.0
        %v3527 = vmax.f32 %v3323, 0.0
        %v3528 = vmax.f32 %v3325, 0.0
        %v3529 = vmax.f32 %v3412, 0.0
        %v3530 = vmax.f32 %v3414, 0.0
        %v3531 = vmax.f32 %v3501, 0.0
        %v3532 = vmax.f32 %v3503, 0.0
        %v3533 = vmax.f32 %v3240, 0.0
        %v3534 = vmax.f32 %v3242, 0.0
        %v3535 = vmax.f32 %v3329, 0.0
        %v3536 = vmax.f32 %v3331, 0.0
        %v3537 = vmax.f32 %v3418, 0.0
        %v3538 = vmax.f32 %v3420, 0.0
        %v3539 = vmax.f32 %v3507, 0.0
        %v3540 = vmax.f32 %v3509, 0.0
        %v3541 = vmax.f32 %v3246, 0.0
        %v3542 = vmax.f32 %v3248, 0.0
        %v3543 = vmax.f32 %v3335, 0.0
        %v3544 = vmax.f32 %v3337, 0.0
        %v3545 = vmax.f32 %v3424, 0.0
        %v3546 = vmax.f32 %v3426, 0.0
        %v3547 = vmax.f32 %v3513, 0.0
        %v3548 = vmax.f32 %v3515, 0.0
        %v3549 = vld [vmem:[%s10] sm:$0x7]
        %v3550 = vld [vmem:[%s11] sm:$0x7]
        %3552 = vset.pattern.permute.xlu0 0
        %3553 = vperm.xlu0 %3552, %v3550
        %v3554 = vpop.permute.xlu0 %3553
        %v3557 = vsel %vm1867, %v3549, 0
        %3559 = vmatprep.subr.mxu0 %v3518
        %3560 = vmatpush1.msra.mxu0 %v3517
        %3561 = vmatprep.subr.mxu0 %v3526
        %3562 = vmatpush1.msra.mxu0 %v3525
        %3563 = vmatprep.subr.mxu0 %v3534
        %3564 = vmatpush1.msra.mxu0 %v3533
        %3565 = vmatprep.subr.mxu0 %v3542
        %3566 = vmatpush1.msra.mxu0 %v3541
        %3567 = vmatprep.subr.mxu0 0.0
        %3568 = vmatpush1.msra.mxu0 0.0
        %3569 = vmatprep.subr.mxu0 0.0
        %3570 = vmatpush1.msra.mxu0 0.0
        %3571 = vmatprep.subr.mxu0 0.0
        %3572 = vmatpush1.msra.mxu0 0.0
        %3573 = vmatprep.subr.mxu0 0.0
        %3574 = vmatpush1.msra.mxu0 0.0
        %3575 = vmatprep.subr.mxu0 0.0
        %3576 = vmatpush1.msra.mxu0 0.0
        %3577 = vmatprep.subr.mxu0 0.0
        %3578 = vmatpush1.msra.mxu0 0.0
        %3579 = vmatprep.subr.mxu0 0.0
        %3580 = vmatpush1.msra.mxu0 0.0
        %3581 = vmatprep.subr.mxu0 0.0
        %3582 = vmatpush1.msra.mxu0 0.0
        %3583 = vmatprep.subr.mxu0 0.0
        %3584 = vmatpush1.msra.mxu0 0.0
        %3585 = vmatprep.subr.mxu0 0.0
        %3586 = vmatpush1.msra.mxu0 0.0
        %3587 = vmatprep.subr.mxu0 0.0
        %3588 = vmatpush1.msra.mxu0 0.0
        %3589 = vmatprep.subr.mxu0 0.0
        %3590 = vmatpush1.msra.mxu0 0.0
        %3591 = vmatprep.subr.mxu0 0.0
        %3592 = vmatpush1.msra.mxu0 0.0
        %3593 = vmatprep.subr.mxu0 0.0
        %3594 = vmatpush1.msra.mxu0 0.0
        %3595 = vmatprep.subr.mxu0 0.0
        %3596 = vmatpush1.msra.mxu0 0.0
        %3597 = vmatprep.subr.mxu0 0.0
        %3598 = vmatpush1.msra.mxu0 0.0
        %3599 = vmatprep.subr.mxu0 0.0
        %3600 = vmatpush1.msra.mxu0 0.0
        %3601 = vmatprep.subr.mxu0 0.0
        %3602 = vmatpush1.msra.mxu0 0.0
        %3603 = vmatprep.subr.mxu0 0.0
        %3604 = vmatpush1.msra.mxu0 0.0
        %3605 = vmatprep.subr.mxu0 0.0
        %3606 = vmatpush1.msra.mxu0 0.0
        %3607 = vmatprep.subr.mxu0 0.0
        %3608 = vmatpush1.msra.mxu0 0.0
        %3609 = vmatprep.subr.mxu0 0.0
        %3610 = vmatpush1.msra.mxu0 0.0
        %3611 = vmatprep.subr.mxu0 0.0
        %3612 = vmatpush1.msra.mxu0 0.0
        %3613 = vmatprep.subr.mxu0 0.0
        %3614 = vmatpush1.msra.mxu0 0.0
        %3615 = vmatprep.subr.mxu0 0.0
        %3616 = vmatpush1.msra.mxu0 0.0
        %3617 = vmatprep.subr.mxu0 0.0
        %3618 = vmatpush1.msra.mxu0 0.0
        %3619 = vmatprep.subr.mxu0 0.0
        %3620 = vmatpush1.msra.mxu0 0.0
        %3621 = vmatprep.subr.mxu0 0.0
        %3622 = vmatpush1.msra.mxu0 0.0
        %3623 = vmatprep.mubr.f32.mxu0 0.0
        %3624 = vmatmul.mubr.f32.gmra.mrb[0].mxu0 %v3557
        %v3625 = vpop.f32.mrb[0].mxu0
        %v3626 = vadd.f32 %v3554, %v3625
        %v3627 = vpop.f32.mrb[0].mxu0
        %v3628 = vadd.f32 %v3554, %v3627
        %3629 = vdwg.mxu0
        %3630 = vmatprep.subr.mxu0 %v3520
        %3631 = vmatpush1.msra.mxu0 %v3519
        %3632 = vmatprep.subr.mxu0 %v3528
        %3633 = vmatpush1.msra.mxu0 %v3527
        %3634 = vmatprep.subr.mxu0 %v3536
        %3635 = vmatpush1.msra.mxu0 %v3535
        %3636 = vmatprep.subr.mxu0 %v3544
        %3637 = vmatpush1.msra.mxu0 %v3543
        %3638 = vmatprep.subr.mxu0 0.0
        %3639 = vmatpush1.msra.mxu0 0.0
        %3640 = vmatprep.subr.mxu0 0.0
        %3641 = vmatpush1.msra.mxu0 0.0
        %3642 = vmatprep.subr.mxu0 0.0
        %3643 = vmatpush1.msra.mxu0 0.0
        %3644 = vmatprep.subr.mxu0 0.0
        %3645 = vmatpush1.msra.mxu0 0.0
        %3646 = vmatprep.subr.mxu0 0.0
        %3647 = vmatpush1.msra.mxu0 0.0
        %3648 = vmatprep.subr.mxu0 0.0
        %3649 = vmatpush1.msra.mxu0 0.0
        %3650 = vmatprep.subr.mxu0 0.0
        %3651 = vmatpush1.msra.mxu0 0.0
        %3652 = vmatprep.subr.mxu0 0.0
        %3653 = vmatpush1.msra.mxu0 0.0
        %3654 = vmatprep.subr.mxu0 0.0
        %3655 = vmatpush1.msra.mxu0 0.0
        %3656 = vmatprep.subr.mxu0 0.0
        %3657 = vmatpush1.msra.mxu0 0.0
        %3658 = vmatprep.subr.mxu0 0.0
        %3659 = vmatpush1.msra.mxu0 0.0
        %3660 = vmatprep.subr.mxu0 0.0
        %3661 = vmatpush1.msra.mxu0 0.0
        %3662 = vmatprep.subr.mxu0 0.0
        %3663 = vmatpush1.msra.mxu0 0.0
        %3664 = vmatprep.subr.mxu0 0.0
        %3665 = vmatpush1.msra.mxu0 0.0
        %3666 = vmatprep.subr.mxu0 0.0
        %3667 = vmatpush1.msra.mxu0 0.0
        %3668 = vmatprep.subr.mxu0 0.0
        %3669 = vmatpush1.msra.mxu0 0.0
        %3670 = vmatprep.subr.mxu0 0.0
        %3671 = vmatpush1.msra.mxu0 0.0
        %3672 = vmatprep.subr.mxu0 0.0
        %3673 = vmatpush1.msra.mxu0 0.0
        %3674 = vmatprep.subr.mxu0 0.0
        %3675 = vmatpush1.msra.mxu0 0.0
        %3676 = vmatprep.subr.mxu0 0.0
        %3677 = vmatpush1.msra.mxu0 0.0
        %3678 = vmatprep.subr.mxu0 0.0
        %3679 = vmatpush1.msra.mxu0 0.0
        %3680 = vmatprep.subr.mxu0 0.0
        %3681 = vmatpush1.msra.mxu0 0.0
        %3682 = vmatprep.subr.mxu0 0.0
        %3683 = vmatpush1.msra.mxu0 0.0
        %3684 = vmatprep.subr.mxu0 0.0
        %3685 = vmatpush1.msra.mxu0 0.0
        %3686 = vmatprep.subr.mxu0 0.0
        %3687 = vmatpush1.msra.mxu0 0.0
        %3688 = vmatprep.subr.mxu0 0.0
        %3689 = vmatpush1.msra.mxu0 0.0
        %3690 = vmatprep.subr.mxu0 0.0
        %3691 = vmatpush1.msra.mxu0 0.0
        %3692 = vmatprep.subr.mxu0 0.0
        %3693 = vmatpush1.msra.mxu0 0.0
        %3694 = vmatprep.mubr.f32.mxu0 0.0
        %3695 = vmatmul.mubr.f32.gmra.mrb[0].mxu0 %v3557
        %v3696 = vpop.f32.mrb[0].mxu0
        %v3697 = vadd.f32 %v3554, %v3696
        %v3698 = vpop.f32.mrb[0].mxu0
        %v3699 = vadd.f32 %v3554, %v3698
        %3700 = vdwg.mxu0
        %3701 = vmatprep.subr.mxu0 %v3522
        %3702 = vmatpush1.msra.mxu0 %v3521
        %3703 = vmatprep.subr.mxu0 %v3530
        %3704 = vmatpush1.msra.mxu0 %v3529
        %3705 = vmatprep.subr.mxu0 %v3538
        %3706 = vmatpush1.msra.mxu0 %v3537
        %3707 = vmatprep.subr.mxu0 %v3546
        %3708 = vmatpush1.msra.mxu0 %v3545
        %3709 = vmatprep.subr.mxu0 0.0
        %3710 = vmatpush1.msra.mxu0 0.0
        %3711 = vmatprep.subr.mxu0 0.0
        %3712 = vmatpush1.msra.mxu0 0.0
        %3713 = vmatprep.subr.mxu0 0.0
        %3714 = vmatpush1.msra.mxu0 0.0
        %3715 = vmatprep.subr.mxu0 0.0
        %3716 = vmatpush1.msra.mxu0 0.0
        %3717 = vmatprep.subr.mxu0 0.0
        %3718 = vmatpush1.msra.mxu0 0.0
        %3719 = vmatprep.subr.mxu0 0.0
        %3720 = vmatpush1.msra.mxu0 0.0
        %3721 = vmatprep.subr.mxu0 0.0
        %3722 = vmatpush1.msra.mxu0 0.0
        %3723 = vmatprep.subr.mxu0 0.0
        %3724 = vmatpush1.msra.mxu0 0.0
        %3725 = vmatprep.subr.mxu0 0.0
        %3726 = vmatpush1.msra.mxu0 0.0
        %3727 = vmatprep.subr.mxu0 0.0
        %3728 = vmatpush1.msra.mxu0 0.0
        %3729 = vmatprep.subr.mxu0 0.0
        %3730 = vmatpush1.msra.mxu0 0.0
        %3731 = vmatprep.subr.mxu0 0.0
        %3732 = vmatpush1.msra.mxu0 0.0
        %3733 = vmatprep.subr.mxu0 0.0
        %3734 = vmatpush1.msra.mxu0 0.0
        %3735 = vmatprep.subr.mxu0 0.0
        %3736 = vmatpush1.msra.mxu0 0.0
        %3737 = vmatprep.subr.mxu0 0.0
        %3738 = vmatpush1.msra.mxu0 0.0
        %3739 = vmatprep.subr.mxu0 0.0
        %3740 = vmatpush1.msra.mxu0 0.0
        %3741 = vmatprep.subr.mxu0 0.0
        %3742 = vmatpush1.msra.mxu0 0.0
        %3743 = vmatprep.subr.mxu0 0.0
        %3744 = vmatpush1.msra.mxu0 0.0
        %3745 = vmatprep.subr.mxu0 0.0
        %3746 = vmatpush1.msra.mxu0 0.0
        %3747 = vmatprep.subr.mxu0 0.0
        %3748 = vmatpush1.msra.mxu0 0.0
        %3749 = vmatprep.subr.mxu0 0.0
        %3750 = vmatpush1.msra.mxu0 0.0
        %3751 = vmatprep.subr.mxu0 0.0
        %3752 = vmatpush1.msra.mxu0 0.0
        %3753 = vmatprep.subr.mxu0 0.0
        %3754 = vmatpush1.msra.mxu0 0.0
        %3755 = vmatprep.subr.mxu0 0.0
        %3756 = vmatpush1.msra.mxu0 0.0
        %3757 = vmatprep.subr.mxu0 0.0
        %3758 = vmatpush1.msra.mxu0 0.0
        %3759 = vmatprep.subr.mxu0 0.0
        %3760 = vmatpush1.msra.mxu0 0.0
        %3761 = vmatprep.subr.mxu0 0.0
        %3762 = vmatpush1.msra.mxu0 0.0
        %3763 = vmatprep.subr.mxu0 0.0
        %3764 = vmatpush1.msra.mxu0 0.0
        %3765 = vmatprep.mubr.f32.mxu0 0.0
        %3766 = vmatmul.mubr.f32.gmra.mrb[0].mxu0 %v3557
        %v3767 = vpop.f32.mrb[0].mxu0
        %v3768 = vadd.f32 %v3554, %v3767
        %v3769 = vpop.f32.mrb[0].mxu0
        %v3770 = vadd.f32 %v3554, %v3769
        %3771 = vdwg.mxu0
        %3772 = vmatprep.subr.mxu0 %v3524
        %3773 = vmatpush1.msra.mxu0 %v3523
        %3774 = vmatprep.subr.mxu0 %v3532
        %3775 = vmatpush1.msra.mxu0 %v3531
        %3776 = vmatprep.subr.mxu0 %v3540
        %3777 = vmatpush1.msra.mxu0 %v3539
        %3778 = vmatprep.subr.mxu0 %v3548
        %3779 = vmatpush1.msra.mxu0 %v3547
        %3780 = vmatprep.subr.mxu0 0.0
        %3781 = vmatpush1.msra.mxu0 0.0
        %3782 = vmatprep.subr.mxu0 0.0
        %3783 = vmatpush1.msra.mxu0 0.0
        %3784 = vmatprep.subr.mxu0 0.0
        %3785 = vmatpush1.msra.mxu0 0.0
        %3786 = vmatprep.subr.mxu0 0.0
        %3787 = vmatpush1.msra.mxu0 0.0
        %3788 = vmatprep.subr.mxu0 0.0
        %3789 = vmatpush1.msra.mxu0 0.0
        %3790 = vmatprep.subr.mxu0 0.0
        %3791 = vmatpush1.msra.mxu0 0.0
        %3792 = vmatprep.subr.mxu0 0.0
        %3793 = vmatpush1.msra.mxu0 0.0
        %3794 = vmatprep.subr.mxu0 0.0
        %3795 = vmatpush1.msra.mxu0 0.0
        %3796 = vmatprep.subr.mxu0 0.0
        %3797 = vmatpush1.msra.mxu0 0.0
        %3798 = vmatprep.subr.mxu0 0.0
        %3799 = vmatpush1.msra.mxu0 0.0
        %3800 = vmatprep.subr.mxu0 0.0
        %3801 = vmatpush1.msra.mxu0 0.0
        %3802 = vmatprep.subr.mxu0 0.0
        %3803 = vmatpush1.msra.mxu0 0.0
        %3804 = vmatprep.subr.mxu0 0.0
        %3805 = vmatpush1.msra.mxu0 0.0
        %3806 = vmatprep.subr.mxu0 0.0
        %3807 = vmatpush1.msra.mxu0 0.0
        %3808 = vmatprep.subr.mxu0 0.0
        %3809 = vmatpush1.msra.mxu0 0.0
        %3810 = vmatprep.subr.mxu0 0.0
        %3811 = vmatpush1.msra.mxu0 0.0
        %3812 = vmatprep.subr.mxu0 0.0
        %3813 = vmatpush1.msra.mxu0 0.0
        %3814 = vmatprep.subr.mxu0 0.0
        %3815 = vmatpush1.msra.mxu0 0.0
        %3816 = vmatprep.subr.mxu0 0.0
        %3817 = vmatpush1.msra.mxu0 0.0
        %3818 = vmatprep.subr.mxu0 0.0
        %3819 = vmatpush1.msra.mxu0 0.0
        %3820 = vmatprep.subr.mxu0 0.0
        %3821 = vmatpush1.msra.mxu0 0.0
        %3822 = vmatprep.subr.mxu0 0.0
        %3823 = vmatpush1.msra.mxu0 0.0
        %3824 = vmatprep.subr.mxu0 0.0
        %3825 = vmatpush1.msra.mxu0 0.0
        %3826 = vmatprep.subr.mxu0 0.0
        %3827 = vmatpush1.msra.mxu0 0.0
        %3828 = vmatprep.subr.mxu0 0.0
        %3829 = vmatpush1.msra.mxu0 0.0
        %3830 = vmatprep.subr.mxu0 0.0
        %3831 = vmatpush1.msra.mxu0 0.0
        %3832 = vmatprep.subr.mxu0 0.0
        %3833 = vmatpush1.msra.mxu0 0.0
        %3834 = vmatprep.subr.mxu0 0.0
        %3835 = vmatpush1.msra.mxu0 0.0
        %3836 = vmatprep.mubr.f32.mxu0 0.0
        %3837 = vmatmul.mubr.f32.gmra.mrb[0].mxu0 %v3557
        %v3838 = vpop.f32.mrb[0].mxu0
        %v3839 = vadd.f32 %v3554, %v3838
        %v3840 = vpop.f32.mrb[0].mxu0
        %v3841 = vadd.f32 %v3554, %v3840
        %3842 = vdwg.mxu0
        %v3851 = vcombine.low %v3626, %v3628
        %v3852 = vcombine.low %v3697, %v3699
        %v3853 = vcombine.low %v3768, %v3770
        %v3854 = vcombine.low %v3839, %v3841
        %3859 = vst [vmem:[%s407] sm:$0x77] %v3851
        %3860 = vst [vmem:[%s407 + $0x8] sm:$0x77] %v3852
        %3861 = vst [vmem:[%s407 + $0x10] sm:$0x77] %v3853
        %3862 = vst [vmem:[%s407 + $0x18] sm:$0x77] %v3854
        %s3863 = sand.u32 %s291, 1
        %s3864 = scalar_lea.sflag [#allocation3], %s3863
        %s3865 = sand.u32 %s291, 1
        %s3866 = smul.addr %s3865, 32
        %s3867 = scalar_lea.vmem [#allocation2], %s3866
        // Predicated region
        $region69: #{tpu_custom_call.1} parent=67 // pred_check
          %p3868 = pneg %p301
        $region70: #{tpu_custom_call.1} parent=67 // pred_check_branch
          %3870 = sbr.rel (%p3868) target = $region72
        $region71: #{tpu_custom_call.1} parent=67 // pred_region
          %s3871 = smul.u32 8, %s26
          %s3873 = ssub.s32 512, 512
          %3874 = vsyncadd %s3864, %s3873
          %s3875 = smul.addr %s3871, 64
          %s3876 = scalar_lea.hbm %s12, %s3875
          %s3878 = sshll.u32 %s3867, 4
          %s3879 = int_to_ptr.vmem [resolvable:$true] %s3878
          %3881 = dma.vmem_to_hbm [thread:$0]  %s3879, 512, %s3876, %s3864
        $region72: #{tpu_custom_call.1} parent=67 // pred_fallthru
          _
      $region68: #{tpu_custom_call.1} parent=5 // pred_fallthru
        _
      %p3882 = scmp.le.s32.totalorder 2, %s21
      // Predicated region
      $region73: #{tpu_custom_call.1} parent=5 // pred_check
        %p3883 = pneg %p3882
      $region74: #{tpu_custom_call.1} parent=5 // pred_check_branch
        %3885 = sbr.rel (%p3883) target = $region76
      $region75: #{tpu_custom_call.1} parent=5 // pred_region
        %s3886 = ssub.s32 %s21, 2
        // Predicated region
        $region77: #{tpu_custom_call.1} parent=75 // pred_check
          %p3887 = pneg %p307
        $region78: #{tpu_custom_call.1} parent=75 // pred_check_branch
          %3889 = sbr.rel (%p3887) target = $region80
        $region79: #{tpu_custom_call.1} parent=75 // pred_region
          %s3890 = sand.u32 %s292, 1
          %s3891 = scalar_lea.sflag [#allocation3], %s3890
          %s3892 = sand.u32 %s292, 1
          %s3893 = smul.addr %s3892, 32
          %s3894 = scalar_lea.vmem [#allocation2], %s3893
          %3895 = dma.done %s3891, 512
        $region80: #{tpu_custom_call.1} parent=75 // pred_fallthru
          _
      $region76: #{tpu_custom_call.1} parent=5 // pred_fallthru
        _
    $region6: #{tpu_custom_call.1} parent=1 // loop_footer
      %s25 = sadd.s32 1, %s21
    $region7: #{tpu_custom_call.1} parent=1 // loop_footer_branch
      %20 = sbr.rel target = $region3
    $region8: #{tpu_custom_call.1} parent=1 // loop_exit
      _
    %3896 = vsyncpa [#allocation3], 1
    %s3897 = scalar_lea.sflag [#allocation3], 1
    %3898 = vsyncpa %s3897, 1

</llo_original>
